<compile_context>
chip_gen: v6e
topology: v6e:2x2x1
jax: 0.10.0
libtpu: 0.0.40
codegen_flags: <defaults>
</compile_context>

<pallas_src>
import functools

import jax
import jax.numpy as jnp
from jax import lax
from jax.experimental import pallas as pl
from jax.experimental.pallas import tpu as pltpu


def _basic_block_kernel(x_ref, w1_ref, s1_ref, b1_ref, w2_ref, s2_ref, b2_ref,
                        o_ref, ypad_ref, *, H, W):
    """One batch image per grid step.

    x_ref   : (1, Ppad, Cin) bf16  zero-padded image, spatially flattened,
              rows = (H+3)*(W+2)
    w*_ref  : (3, 3*Cin, Cout) bf16  conv weights, [kh, kw*Cin + ci, co]
    s*_ref  : (1, Cout) f32  folded BN scale
    b*_ref  : (1, Cout) f32  folded BN bias
    o_ref   : (1, H*(W+2), Cout)  conv-slab output (wrap cols dropped in wrapper)
    ypad_ref: (Ppad, Cout) bf16 VMEM scratch, re-padded intermediate activation
    """
    Wp = W + 2
    HWp = H * Wp
    Ppad = ypad_ref.shape[0]
    cp = o_ref.shape[-1]

    # ---------------- conv1 (3x3, pad 1, stride 1): 3 bf16 MXU matmuls ----------
    acc = jnp.zeros((HWp, cp), jnp.float32)
    for kh in range(3):
        base = kh * Wp
        patch = jnp.concatenate(
            [x_ref[0, pl.ds(base + kw, HWp), :] for kw in range(3)], axis=-1)
        acc += jnp.dot(patch, w1_ref[kh], preferred_element_type=jnp.float32)

    # bn1 (folded) + relu, with the wrap-column mask folded into the same select.
    col = lax.broadcasted_iota(jnp.int32, (HWp, 1), 0) % Wp
    keep = col < W
    y = jnp.where(keep, jnp.maximum(acc * s1_ref[...] + b1_ref[...], 0.0), 0.0)

    # Re-pad the intermediate: only zero the halo rows (top Wp+1, bottom 2*Wp-1);
    # the interior is fully overwritten and wrap columns are already zero.
    top = Wp + 1
    bot = Ppad - (top + HWp)
    ypad_ref[pl.ds(0, top), :] = jnp.zeros((top, cp), ypad_ref.dtype)
    ypad_ref[pl.ds(top + HWp, bot), :] = jnp.zeros((bot, cp), ypad_ref.dtype)
    ypad_ref[pl.ds(top, HWp), :] = y.astype(ypad_ref.dtype)

    # ---------------- conv2 (3x3, pad 1, stride 1): 3 bf16 MXU matmuls ----------
    acc2 = jnp.zeros((HWp, cp), jnp.float32)
    for kh in range(3):
        base = kh * Wp
        patch = jnp.concatenate(
            [ypad_ref[pl.ds(base + kw, HWp), :] for kw in range(3)], axis=-1)
        acc2 += jnp.dot(patch, w2_ref[kh], preferred_element_type=jnp.float32)

    out = acc2 * s2_ref[...] + b2_ref[...]

    # identity residual + final relu
    residual = x_ref[0, pl.ds(Wp + 1, HWp), :].astype(jnp.float32)
    o_ref[...] = jnp.maximum(out + residual, 0.0)[None, :, :].astype(o_ref.dtype)


def basic_block_forward(x_nchw, w1, bn1, w2, bn2, eps=1e-5):
    """BasicBlock forward (stride=1, downsample=None), inference-mode BN.

    x_nchw: (N, C, H, W)   w1, w2: (C, C, 3, 3)   bn* = (gamma, beta, mean, var)
    Returns (N, C, H, W) in x_nchw.dtype.
    """
    n, cin, h, w = x_nchw.shape
    cp = w1.shape[0]
    assert cin == cp, "identity residual requires inplanes == planes"
    wp = w + 2
    p_pad = (h + 3) * wp          # one extra zero row so shifted slabs never run OOB
    hwp = h * wp

    # NHWC (channels on lanes), zero-pad spatial (+1 extra bottom row), flatten,
    # and cast to bf16 so the kernel's MXU operands are bf16.
    x_nhwc = jnp.transpose(x_nchw, (0, 2, 3, 1))
    x_pad = jnp.pad(x_nhwc, ((0, 0), (1, 2), (1, 1), (0, 0)))
    x_flat = x_pad.reshape(n, p_pad, cin).astype(jnp.bfloat16)

    def fold_bn(gamma, beta, mean, var):
        s = gamma / jnp.sqrt(var + eps)
        b = beta - mean * s
        return (s.reshape(1, cp).astype(jnp.float32),
                b.reshape(1, cp).astype(jnp.float32))

    s1, b1 = fold_bn(*bn1)
    s2, b2 = fold_bn(*bn2)

    # (Cout, Cin, 3, 3) -> (kh, kw*Cin + ci, co), bf16 for the MXU.
    def reorder_w(wt):
        co, ci = wt.shape[0], wt.shape[1]
        return jnp.transpose(wt, (2, 3, 1, 0)).reshape(3, 3 * ci, co).astype(jnp.bfloat16)

    w1k = reorder_w(w1)
    w2k = reorder_w(w2)

    # Explicit VMEM budget (double-buffered x/out blocks, weights, bf16 scratch,
    # a few live f32 slab temporaries), with headroom, capped for v7x.
    itemsize_out = jnp.dtype(x_nchw.dtype).itemsize
    est = (2 * p_pad * cin * 2            # x block x2 (bf16)
           + 2 * hwp * cp * itemsize_out  # out block x2
           + (3 * 3 * cin * cp + 3 * 3 * cp * cp) * 2   # weights (bf16)
           + 4 * cp * 4                   # folded BN scale/bias
           + p_pad * cp * 2               # ypad scratch (bf16)
           + 8 * hwp * cp * 4)            # live f32 slab temporaries (rough)
    vmem_limit = int(min(64 << 20, max(32 << 20, 2 * est)))

    kernel = functools.partial(_basic_block_kernel, H=h, W=w)
    out_flat = pl.pallas_call(
        kernel,
        out_shape=jax.ShapeDtypeStruct((n, hwp, cp), x_nchw.dtype),
        grid_spec=pltpu.PrefetchScalarGridSpec(
            num_scalar_prefetch=0,
            grid=(n,),
            in_specs=[
                pl.BlockSpec((1, p_pad, cin), lambda i: (i, 0, 0)),   # x (padded, flat)
                pl.BlockSpec((3, 3 * cin, cp), lambda i: (0, 0, 0)),  # w1
                pl.BlockSpec((1, cp), lambda i: (0, 0)),              # bn1 scale
                pl.BlockSpec((1, cp), lambda i: (0, 0)),              # bn1 bias
                pl.BlockSpec((3, 3 * cp, cp), lambda i: (0, 0, 0)),   # w2
                pl.BlockSpec((1, cp), lambda i: (0, 0)),              # bn2 scale
                pl.BlockSpec((1, cp), lambda i: (0, 0)),              # bn2 bias
            ],
            out_specs=pl.BlockSpec((1, hwp, cp), lambda i: (i, 0, 0)),
            scratch_shapes=[pltpu.VMEM((p_pad, cp), jnp.bfloat16)],
        ),
        compiler_params=pltpu.CompilerParams(
            dimension_semantics=("parallel",),
            vmem_limit_bytes=vmem_limit),
    )(x_flat, w1k, s1, b1, w2k, s2, b2)

    # (N, H*(W+2), C) -> (N, H, W+2, C) -> drop wrap columns -> NCHW
    out = out_flat.reshape(n, h, wp, cp)[:, :, :w, :]
    return jnp.transpose(out, (0, 3, 1, 2))


def _ref_basic_block(x, w1, g1, b1, m1, v1, w2, g2, b2, m2, v2, eps=1e-5):
    """Pure-JAX f32 reference (inference-mode BN), NCHW."""
    def conv(z, wt):
        return lax.conv_general_dilated(
            z, wt, window_strides=(1, 1), padding=((1, 1), (1, 1)),
            dimension_numbers=("NCHW", "OIHW", "NCHW"))

    def bn(z, g, b, m, v):
        s = g / jnp.sqrt(v + eps)
        return z * s[None, :, None, None] + (b - m * s)[None, :, None, None]

    out = jax.nn.relu(bn(conv(x, w1), g1, b1, m1, v1))
    out = bn(conv(out, w2), g2, b2, m2, v2)
    return jax.nn.relu(out + x)


if __name__ == "__main__":
    key = jax.random.PRNGKey(0)
    n, c, h, w = 2, 4, 16, 16
    ks = jax.random.split(key, 11)

    x = jax.random.normal(ks[0], (n, c, h, w), dtype=jnp.float32)
    w1 = jax.random.normal(ks[1], (c, c, 3, 3), dtype=jnp.float32) * 0.1
    w2 = jax.random.normal(ks[2], (c, c, 3, 3), dtype=jnp.float32) * 0.1
    g1 = jax.random.uniform(ks[3], (c,), minval=0.5, maxval=1.5)
    b1 = jax.random.normal(ks[4], (c,)) * 0.1
    m1 = jax.random.normal(ks[5], (c,)) * 0.1
    v1 = jax.random.uniform(ks[6], (c,), minval=0.5, maxval=1.5)
    g2 = jax.random.uniform(ks[7], (c,), minval=0.5, maxval=1.5)
    b2 = jax.random.normal(ks[8], (c,)) * 0.1
    m2 = jax.random.normal(ks[9], (c,)) * 0.1
    v2 = jax.random.uniform(ks[10], (c,), minval=0.5, maxval=1.5)

    y = basic_block_forward(x, w1, (g1, b1, m1, v1), w2, (g2, b2, m2, v2))
    jax.block_until_ready(y)

    y_ref = _ref_basic_block(x, w1, g1, b1, m1, v1, w2, g2, b2, m2, v2)
    assert y.shape == (n, c, h, w), y.shape
    max_err = float(jnp.max(jnp.abs(y - y_ref)))
    # bf16 MXU operands (per perf review) vs. f32 reference.
    assert jnp.allclose(y, y_ref, atol=3e-2, rtol=3e-2), max_err

    print("KERNEL_OK")
</pallas_src>

<mosaic_0001>
module attributes {stable_mosaic.version = 11 : i64} {
  func.func @_basic_block_kernel(%arg0: i32, %arg1: memref<1x342x4xbf16, #tpu.memory_space<vmem>>, %arg2: memref<3x12x4xbf16, #tpu.memory_space<vmem>>, %arg3: memref<1x4xf32, #tpu.memory_space<vmem>>, %arg4: memref<1x4xf32, #tpu.memory_space<vmem>>, %arg5: memref<3x12x4xbf16, #tpu.memory_space<vmem>>, %arg6: memref<1x4xf32, #tpu.memory_space<vmem>>, %arg7: memref<1x4xf32, #tpu.memory_space<vmem>>, %arg8: memref<1x288x4xf32, #tpu.memory_space<vmem>>, %arg9: memref<342x4xbf16, #tpu.memory_space<vmem>>) attributes {dimension_semantics = [#tpu.dimension_semantics<parallel>], iteration_bounds = array<i64: 2>, scalar_prefetch = 0 : i64, scratch_operands = 1 : i64, tpu.core_type = #tpu.core_type<tc>, window_params = [{transform_indices = @transform_0, window_bounds = array<i64: 1, 342, 4>}, {pipeline_mode = #tpu.pipeline_mode<synchronous>, transform_indices = @transform_1, window_bounds = array<i64: 3, 12, 4>}, {pipeline_mode = #tpu.pipeline_mode<synchronous>, transform_indices = @transform_2, window_bounds = array<i64: 1, 4>}, {pipeline_mode = #tpu.pipeline_mode<synchronous>, transform_indices = @transform_3, window_bounds = array<i64: 1, 4>}, {pipeline_mode = #tpu.pipeline_mode<synchronous>, transform_indices = @transform_4, window_bounds = array<i64: 3, 12, 4>}, {pipeline_mode = #tpu.pipeline_mode<synchronous>, transform_indices = @transform_5, window_bounds = array<i64: 1, 4>}, {pipeline_mode = #tpu.pipeline_mode<synchronous>, transform_indices = @transform_6, window_bounds = array<i64: 1, 4>}, {transform_indices = @transform_7, window_bounds = array<i64: 1, 288, 4>}]} {
    %cst = arith.constant 0.000000e+00 : f32
    %0 = vector.broadcast %cst : f32 to vector<288x4xf32>
    %c0 = arith.constant 0 : index
    %c0_0 = arith.constant 0 : index
    %c0_1 = arith.constant 0 : index
    %1 = vector.load %arg1[%c0, %c0_0, %c0_1] : memref<1x342x4xbf16, #tpu.memory_space<vmem>>, vector<1x288x4xbf16>
    %2 = vector.shape_cast %1 : vector<1x288x4xbf16> to vector<288x4xbf16>
    %c0_2 = arith.constant 0 : index
    %c1 = arith.constant 1 : index
    %c0_3 = arith.constant 0 : index
    %3 = vector.load %arg1[%c0_2, %c1, %c0_3] : memref<1x342x4xbf16, #tpu.memory_space<vmem>>, vector<1x288x4xbf16>
    %4 = vector.shape_cast %3 : vector<1x288x4xbf16> to vector<288x4xbf16>
    %c0_4 = arith.constant 0 : index
    %c2 = arith.constant 2 : index
    %c0_5 = arith.constant 0 : index
    %5 = vector.load %arg1[%c0_4, %c2, %c0_5] : memref<1x342x4xbf16, #tpu.memory_space<vmem>>, vector<1x288x4xbf16>
    %6 = vector.shape_cast %5 : vector<1x288x4xbf16> to vector<288x4xbf16>
    %7 = tpu.concatenate %2, %4, %6 in 1 : vector<288x4xbf16>, vector<288x4xbf16>, vector<288x4xbf16> -> vector<288x12xbf16>
    %c0_6 = arith.constant 0 : index
    %c0_7 = arith.constant 0 : index
    %c0_8 = arith.constant 0 : index
    %8 = vector.load %arg2[%c0_6, %c0_7, %c0_8] : memref<3x12x4xbf16, #tpu.memory_space<vmem>>, vector<1x12x4xbf16>
    %9 = vector.shape_cast %8 : vector<1x12x4xbf16> to vector<12x4xbf16>
    %cst_9 = arith.constant dense<0.000000e+00> : vector<288x4xf32>
    %10 = tpu.matmul %7, %9, %cst_9 {dimension_numbers = #tpu.dot_dimension_numbers<[1], [0], [0], [1], [0, 0, 1, 1], [], []>} : vector<288x12xbf16>, vector<12x4xbf16>, vector<288x4xf32> -> vector<288x4xf32>
    %11 = arith.addf %0, %10 : vector<288x4xf32>
    %c0_10 = arith.constant 0 : index
    %c18 = arith.constant 18 : index
    %c0_11 = arith.constant 0 : index
    %12 = vector.load %arg1[%c0_10, %c18, %c0_11] : memref<1x342x4xbf16, #tpu.memory_space<vmem>>, vector<1x288x4xbf16>
    %13 = vector.shape_cast %12 : vector<1x288x4xbf16> to vector<288x4xbf16>
    %c0_12 = arith.constant 0 : index
    %c19 = arith.constant 19 : index
    %c0_13 = arith.constant 0 : index
    %14 = vector.load %arg1[%c0_12, %c19, %c0_13] : memref<1x342x4xbf16, #tpu.memory_space<vmem>>, vector<1x288x4xbf16>
    %15 = vector.shape_cast %14 : vector<1x288x4xbf16> to vector<288x4xbf16>
    %c0_14 = arith.constant 0 : index
    %c20 = arith.constant 20 : index
    %c0_15 = arith.constant 0 : index
    %16 = vector.load %arg1[%c0_14, %c20, %c0_15] : memref<1x342x4xbf16, #tpu.memory_space<vmem>>, vector<1x288x4xbf16>
    %17 = vector.shape_cast %16 : vector<1x288x4xbf16> to vector<288x4xbf16>
    %18 = tpu.concatenate %13, %15, %17 in 1 : vector<288x4xbf16>, vector<288x4xbf16>, vector<288x4xbf16> -> vector<288x12xbf16>
    %c1_16 = arith.constant 1 : index
    %c0_17 = arith.constant 0 : index
    %c0_18 = arith.constant 0 : index
    %19 = vector.load %arg2[%c1_16, %c0_17, %c0_18] : memref<3x12x4xbf16, #tpu.memory_space<vmem>>, vector<1x12x4xbf16>
    %20 = vector.shape_cast %19 : vector<1x12x4xbf16> to vector<12x4xbf16>
    %cst_19 = arith.constant dense<0.000000e+00> : vector<288x4xf32>
    %21 = tpu.matmul %18, %20, %cst_19 {dimension_numbers = #tpu.dot_dimension_numbers<[1], [0], [0], [1], [0, 0, 1, 1], [], []>} : vector<288x12xbf16>, vector<12x4xbf16>, vector<288x4xf32> -> vector<288x4xf32>
    %22 = arith.addf %11, %21 : vector<288x4xf32>
    %c0_20 = arith.constant 0 : index
    %c36 = arith.constant 36 : index
    %c0_21 = arith.constant 0 : index
    %23 = vector.load %arg1[%c0_20, %c36, %c0_21] : memref<1x342x4xbf16, #tpu.memory_space<vmem>>, vector<1x288x4xbf16>
    %24 = vector.shape_cast %23 : vector<1x288x4xbf16> to vector<288x4xbf16>
    %c0_22 = arith.constant 0 : index
    %c37 = arith.constant 37 : index
    %c0_23 = arith.constant 0 : index
    %25 = vector.load %arg1[%c0_22, %c37, %c0_23] : memref<1x342x4xbf16, #tpu.memory_space<vmem>>, vector<1x288x4xbf16>
    %26 = vector.shape_cast %25 : vector<1x288x4xbf16> to vector<288x4xbf16>
    %c0_24 = arith.constant 0 : index
    %c38 = arith.constant 38 : index
    %c0_25 = arith.constant 0 : index
    %27 = vector.load %arg1[%c0_24, %c38, %c0_25] : memref<1x342x4xbf16, #tpu.memory_space<vmem>>, vector<1x288x4xbf16>
    %28 = vector.shape_cast %27 : vector<1x288x4xbf16> to vector<288x4xbf16>
    %29 = tpu.concatenate %24, %26, %28 in 1 : vector<288x4xbf16>, vector<288x4xbf16>, vector<288x4xbf16> -> vector<288x12xbf16>
    %c2_26 = arith.constant 2 : index
    %c0_27 = arith.constant 0 : index
    %c0_28 = arith.constant 0 : index
    %30 = vector.load %arg2[%c2_26, %c0_27, %c0_28] : memref<3x12x4xbf16, #tpu.memory_space<vmem>>, vector<1x12x4xbf16>
    %31 = vector.shape_cast %30 : vector<1x12x4xbf16> to vector<12x4xbf16>
    %cst_29 = arith.constant dense<0.000000e+00> : vector<288x4xf32>
    %32 = tpu.matmul %29, %31, %cst_29 {dimension_numbers = #tpu.dot_dimension_numbers<[1], [0], [0], [1], [0, 0, 1, 1], [], []>} : vector<288x12xbf16>, vector<12x4xbf16>, vector<288x4xf32> -> vector<288x4xf32>
    %33 = arith.addf %22, %32 : vector<288x4xf32>
    %34 = tpu.iota {dimensions = array<i32: 0>} : vector<288x1xi32>
    %c18_i32 = arith.constant 18 : i32
    %c0_i32 = arith.constant 0 : i32
    %35 = arith.cmpi eq, %c18_i32, %c0_i32 : i32
    %c1_i32 = arith.constant 1 : i32
    %36 = arith.select %35, %c1_i32, %c18_i32 : i32
    %37 = vector.broadcast %36 : i32 to vector<288x1xi32>
    %38 = arith.remsi %34, %37 : vector<288x1xi32>
    %c0_i32_30 = arith.constant 0 : i32
    %39 = vector.broadcast %c0_i32_30 : i32 to vector<288x1xi32>
    %40 = arith.cmpi ne, %38, %39 : vector<288x1xi32>
    %c0_i32_31 = arith.constant 0 : i32
    %41 = vector.broadcast %c0_i32_31 : i32 to vector<288x1xi32>
    %42 = arith.cmpi slt, %38, %41 : vector<288x1xi32>
    %c0_i32_32 = arith.constant 0 : i32
    %43 = arith.cmpi slt, %36, %c0_i32_32 : i32
    %44 = vector.broadcast %43 : i1 to vector<288x1xi1>
    %45 = vector.broadcast %44 : vector<288x1xi1> to vector<288x1xi1>
    %46 = arith.xori %42, %45 : vector<288x1xi1>
    %47 = arith.andi %46, %40 : vector<288x1xi1>
    %48 = vector.broadcast %36 : i32 to vector<288x1xi32>
    %49 = arith.addi %38, %48 : vector<288x1xi32>
    %50 = arith.select %47, %49, %38 : vector<288x1xi1>, vector<288x1xi32>
    %c16_i32 = arith.constant 16 : i32
    %51 = vector.broadcast %c16_i32 : i32 to vector<288x1xi32>
    %52 = arith.cmpi slt, %50, %51 : vector<288x1xi32>
    %c0_33 = arith.constant 0 : index
    %c0_34 = arith.constant 0 : index
    %53 = vector.load %arg3[%c0_33, %c0_34] : memref<1x4xf32, #tpu.memory_space<vmem>>, vector<1x4xf32>
    %54 = vector.broadcast %53 : vector<1x4xf32> to vector<288x4xf32>
    %55 = arith.mulf %33, %54 : vector<288x4xf32>
    %c0_35 = arith.constant 0 : index
    %c0_36 = arith.constant 0 : index
    %56 = vector.load %arg4[%c0_35, %c0_36] : memref<1x4xf32, #tpu.memory_space<vmem>>, vector<1x4xf32>
    %57 = vector.broadcast %56 : vector<1x4xf32> to vector<288x4xf32>
    %58 = arith.addf %55, %57 : vector<288x4xf32>
    %cst_37 = arith.constant 0.000000e+00 : f32
    %59 = vector.broadcast %cst_37 : f32 to vector<288x4xf32>
    %60 = arith.maximumf %58, %59 : vector<288x4xf32>
    %cst_38 = arith.constant 0.000000e+00 : f32
    %61 = vector.shape_cast %52 : vector<288x1xi1> to vector<288x1xi1>
    %62 = vector.broadcast %61 : vector<288x1xi1> to vector<288x4xi1>
    %63 = vector.broadcast %cst_38 : f32 to vector<288x4xf32>
    %64 = arith.select %62, %60, %63 : vector<288x4xi1>, vector<288x4xf32>
    %cst_39 = arith.constant 0.000000e+00 : bf16
    %65 = vector.broadcast %cst_39 : bf16 to vector<19x4xbf16>
    %c0_40 = arith.constant 0 : index
    %c0_41 = arith.constant 0 : index
    %66 = vector.load %arg9[%c0_40, %c0_41] : memref<342x4xbf16, #tpu.memory_space<vmem>>, vector<19x4xbf16>
    tpu.vector_store %arg9[%c0_40, %c0_41], %65 {strides = array<i32>} : memref<342x4xbf16, #tpu.memory_space<vmem>>, vector<19x4xbf16>,
    %cst_42 = arith.constant 0.000000e+00 : bf16
    %67 = vector.broadcast %cst_42 : bf16 to vector<35x4xbf16>
    %c307 = arith.constant 307 : index
    %c0_43 = arith.constant 0 : index
    %68 = vector.load %arg9[%c307, %c0_43] : memref<342x4xbf16, #tpu.memory_space<vmem>>, vector<35x4xbf16>
    tpu.vector_store %arg9[%c307, %c0_43], %67 {strides = array<i32>} : memref<342x4xbf16, #tpu.memory_space<vmem>>, vector<35x4xbf16>,
    %69 = arith.truncf %64 : vector<288x4xf32> to vector<288x4xbf16>
    %c19_44 = arith.constant 19 : index
    %c0_45 = arith.constant 0 : index
    %70 = vector.load %arg9[%c19_44, %c0_45] : memref<342x4xbf16, #tpu.memory_space<vmem>>, vector<288x4xbf16>
    tpu.vector_store %arg9[%c19_44, %c0_45], %69 {strides = array<i32>} : memref<342x4xbf16, #tpu.memory_space<vmem>>, vector<288x4xbf16>,
    %cst_46 = arith.constant 0.000000e+00 : f32
    %71 = vector.broadcast %cst_46 : f32 to vector<288x4xf32>
    %c0_47 = arith.constant 0 : index
    %c0_48 = arith.constant 0 : index
    %72 = vector.load %arg9[%c0_47, %c0_48] : memref<342x4xbf16, #tpu.memory_space<vmem>>, vector<288x4xbf16>
    %c1_49 = arith.constant 1 : index
    %c0_50 = arith.constant 0 : index
    %73 = vector.load %arg9[%c1_49, %c0_50] : memref<342x4xbf16, #tpu.memory_space<vmem>>, vector<288x4xbf16>
    %c2_51 = arith.constant 2 : index
    %c0_52 = arith.constant 0 : index
    %74 = vector.load %arg9[%c2_51, %c0_52] : memref<342x4xbf16, #tpu.memory_space<vmem>>, vector<288x4xbf16>
    %75 = tpu.concatenate %72, %73, %74 in 1 : vector<288x4xbf16>, vector<288x4xbf16>, vector<288x4xbf16> -> vector<288x12xbf16>
    %c0_53 = arith.constant 0 : index
    %c0_54 = arith.constant 0 : index
    %c0_55 = arith.constant 0 : index
    %76 = vector.load %arg5[%c0_53, %c0_54, %c0_55] : memref<3x12x4xbf16, #tpu.memory_space<vmem>>, vector<1x12x4xbf16>
    %77 = vector.shape_cast %76 : vector<1x12x4xbf16> to vector<12x4xbf16>
    %cst_56 = arith.constant dense<0.000000e+00> : vector<288x4xf32>
    %78 = tpu.matmul %75, %77, %cst_56 {dimension_numbers = #tpu.dot_dimension_numbers<[1], [0], [0], [1], [0, 0, 1, 1], [], []>} : vector<288x12xbf16>, vector<12x4xbf16>, vector<288x4xf32> -> vector<288x4xf32>
    %79 = arith.addf %71, %78 : vector<288x4xf32>
    %c18_57 = arith.constant 18 : index
    %c0_58 = arith.constant 0 : index
    %80 = vector.load %arg9[%c18_57, %c0_58] : memref<342x4xbf16, #tpu.memory_space<vmem>>, vector<288x4xbf16>
    %c19_59 = arith.constant 19 : index
    %c0_60 = arith.constant 0 : index
    %81 = vector.load %arg9[%c19_59, %c0_60] : memref<342x4xbf16, #tpu.memory_space<vmem>>, vector<288x4xbf16>
    %c20_61 = arith.constant 20 : index
    %c0_62 = arith.constant 0 : index
    %82 = vector.load %arg9[%c20_61, %c0_62] : memref<342x4xbf16, #tpu.memory_space<vmem>>, vector<288x4xbf16>
    %83 = tpu.concatenate %80, %81, %82 in 1 : vector<288x4xbf16>, vector<288x4xbf16>, vector<288x4xbf16> -> vector<288x12xbf16>
    %c1_63 = arith.constant 1 : index
    %c0_64 = arith.constant 0 : index
    %c0_65 = arith.constant 0 : index
    %84 = vector.load %arg5[%c1_63, %c0_64, %c0_65] : memref<3x12x4xbf16, #tpu.memory_space<vmem>>, vector<1x12x4xbf16>
    %85 = vector.shape_cast %84 : vector<1x12x4xbf16> to vector<12x4xbf16>
    %cst_66 = arith.constant dense<0.000000e+00> : vector<288x4xf32>
    %86 = tpu.matmul %83, %85, %cst_66 {dimension_numbers = #tpu.dot_dimension_numbers<[1], [0], [0], [1], [0, 0, 1, 1], [], []>} : vector<288x12xbf16>, vector<12x4xbf16>, vector<288x4xf32> -> vector<288x4xf32>
    %87 = arith.addf %79, %86 : vector<288x4xf32>
    %c36_67 = arith.constant 36 : index
    %c0_68 = arith.constant 0 : index
    %88 = vector.load %arg9[%c36_67, %c0_68] : memref<342x4xbf16, #tpu.memory_space<vmem>>, vector<288x4xbf16>
    %c37_69 = arith.constant 37 : index
    %c0_70 = arith.constant 0 : index
    %89 = vector.load %arg9[%c37_69, %c0_70] : memref<342x4xbf16, #tpu.memory_space<vmem>>, vector<288x4xbf16>
    %c38_71 = arith.constant 38 : index
    %c0_72 = arith.constant 0 : index
    %90 = vector.load %arg9[%c38_71, %c0_72] : memref<342x4xbf16, #tpu.memory_space<vmem>>, vector<288x4xbf16>
    %91 = tpu.concatenate %88, %89, %90 in 1 : vector<288x4xbf16>, vector<288x4xbf16>, vector<288x4xbf16> -> vector<288x12xbf16>
    %c2_73 = arith.constant 2 : index
    %c0_74 = arith.constant 0 : index
    %c0_75 = arith.constant 0 : index
    %92 = vector.load %arg5[%c2_73, %c0_74, %c0_75] : memref<3x12x4xbf16, #tpu.memory_space<vmem>>, vector<1x12x4xbf16>
    %93 = vector.shape_cast %92 : vector<1x12x4xbf16> to vector<12x4xbf16>
    %cst_76 = arith.constant dense<0.000000e+00> : vector<288x4xf32>
    %94 = tpu.matmul %91, %93, %cst_76 {dimension_numbers = #tpu.dot_dimension_numbers<[1], [0], [0], [1], [0, 0, 1, 1], [], []>} : vector<288x12xbf16>, vector<12x4xbf16>, vector<288x4xf32> -> vector<288x4xf32>
    %95 = arith.addf %87, %94 : vector<288x4xf32>
    %c0_77 = arith.constant 0 : index
    %c0_78 = arith.constant 0 : index
    %96 = vector.load %arg6[%c0_77, %c0_78] : memref<1x4xf32, #tpu.memory_space<vmem>>, vector<1x4xf32>
    %97 = vector.broadcast %96 : vector<1x4xf32> to vector<288x4xf32>
    %98 = arith.mulf %95, %97 : vector<288x4xf32>
    %c0_79 = arith.constant 0 : index
    %c0_80 = arith.constant 0 : index
    %99 = vector.load %arg7[%c0_79, %c0_80] : memref<1x4xf32, #tpu.memory_space<vmem>>, vector<1x4xf32>
    %100 = vector.broadcast %99 : vector<1x4xf32> to vector<288x4xf32>
    %101 = arith.addf %98, %100 : vector<288x4xf32>
    %c0_81 = arith.constant 0 : index
    %c19_82 = arith.constant 19 : index
    %c0_83 = arith.constant 0 : index
    %102 = vector.load %arg1[%c0_81, %c19_82, %c0_83] : memref<1x342x4xbf16, #tpu.memory_space<vmem>>, vector<1x288x4xbf16>
    %103 = vector.shape_cast %102 : vector<1x288x4xbf16> to vector<288x4xbf16>
    %104 = arith.extf %103 : vector<288x4xbf16> to vector<288x4xf32>
    %105 = arith.addf %101, %104 : vector<288x4xf32>
    %cst_84 = arith.constant 0.000000e+00 : f32
    %106 = vector.broadcast %cst_84 : f32 to vector<288x4xf32>
    %107 = arith.maximumf %105, %106 : vector<288x4xf32>
    %108 = vector.shape_cast %107 : vector<288x4xf32> to vector<1x288x4xf32>
    %c0_85 = arith.constant 0 : index
    %c0_86 = arith.constant 0 : index
    %c0_87 = arith.constant 0 : index
    %109 = vector.load %arg8[%c0_85, %c0_86, %c0_87] : memref<1x288x4xf32, #tpu.memory_space<vmem>>, vector<1x288x4xf32>
    tpu.vector_store %arg8[%c0_85, %c0_86, %c0_87], %108 {strides = array<i32>} : memref<1x288x4xf32, #tpu.memory_space<vmem>>, vector<1x288x4xf32>,
    return
  }
  func.func @transform_0(%arg0: i32) -> (i32, i32, i32) {
    %c0_i32 = arith.constant 0 : i32
    %c0_i32_0 = arith.constant 0 : i32
    %c0_i32_1 = arith.constant 0 : i32
    return %arg0, %c0_i32, %c0_i32_0 : i32, i32, i32
  }
  func.func @transform_1(%arg0: i32) -> (i32, i32, i32) {
    %c0_i32 = arith.constant 0 : i32
    %c0_i32_0 = arith.constant 0 : i32
    %c0_i32_1 = arith.constant 0 : i32
    %c0_i32_2 = arith.constant 0 : i32
    return %c0_i32, %c0_i32_0, %c0_i32_1 : i32, i32, i32
  }
  func.func @transform_2(%arg0: i32) -> (i32, i32) {
    %c0_i32 = arith.constant 0 : i32
    %c0_i32_0 = arith.constant 0 : i32
    %c0_i32_1 = arith.constant 0 : i32
    return %c0_i32, %c0_i32_0 : i32, i32
  }
  func.func @transform_3(%arg0: i32) -> (i32, i32) {
    %c0_i32 = arith.constant 0 : i32
    %c0_i32_0 = arith.constant 0 : i32
    %c0_i32_1 = arith.constant 0 : i32
    return %c0_i32, %c0_i32_0 : i32, i32
  }
  func.func @transform_4(%arg0: i32) -> (i32, i32, i32) {
    %c0_i32 = arith.constant 0 : i32
    %c0_i32_0 = arith.constant 0 : i32
    %c0_i32_1 = arith.constant 0 : i32
    %c0_i32_2 = arith.constant 0 : i32
    return %c0_i32, %c0_i32_0, %c0_i32_1 : i32, i32, i32
  }
  func.func @transform_5(%arg0: i32) -> (i32, i32) {
    %c0_i32 = arith.constant 0 : i32
    %c0_i32_0 = arith.constant 0 : i32
    %c0_i32_1 = arith.constant 0 : i32
    return %c0_i32, %c0_i32_0 : i32, i32
  }
  func.func @transform_6(%arg0: i32) -> (i32, i32) {
    %c0_i32 = arith.constant 0 : i32
    %c0_i32_0 = arith.constant 0 : i32
    %c0_i32_1 = arith.constant 0 : i32
    return %c0_i32, %c0_i32_0 : i32, i32
  }
  func.func @transform_7(%arg0: i32) -> (i32, i32, i32) {
    %c0_i32 = arith.constant 0 : i32
    %c0_i32_0 = arith.constant 0 : i32
    %c0_i32_1 = arith.constant 0 : i32
    return %arg0, %c0_i32, %c0_i32_0 : i32, i32, i32
  }
}

</mosaic_0001>

<llo_original>
// kernel: tpu_custom_call.1
$region0: #{tpu_custom_call.1}
  #allocation0 [shape = 'u32[]', space=smem, size = 0x4, offset = 0x4, fixed_abs, tag = 'smem constant byte address 0x4 - core index']
  #allocation1 [shape = 'u32[144,128]{1,0:T(1,128)}', space=vmem, size = 0x12000, scoped, tag = 'internal scratch']
  #allocation2 [shape = 'bf16[342,4]{1,0:T(8,128)(2,1)}', space=vmem, size = 0x15800, scoped, tag = 'scratch operand']
  %s0 = inlined_call_operand.vmem [shape: bf16[2,342,4], index: 0, kind: input, shape index: {}]
  %s1 = inlined_call_operand.vmem [shape: bf16[3,12,4], index: 1, kind: input, shape index: {}]
  %s2 = inlined_call_operand.vmem [shape: f32[1,4], index: 2, kind: input, shape index: {}]
  %s3 = inlined_call_operand.vmem [shape: f32[1,4], index: 3, kind: input, shape index: {}]
  %s4 = inlined_call_operand.vmem [shape: bf16[3,12,4], index: 4, kind: input, shape index: {}]
  %s5 = inlined_call_operand.vmem [shape: f32[1,4], index: 5, kind: input, shape index: {}]
  %s6 = inlined_call_operand.vmem [shape: f32[1,4], index: 6, kind: input, shape index: {}]
  %s7 = inlined_call_operand.vmem [shape: f32[2,288,4], index: 7, kind: output, shape index: {}]
  %s8 = sld [smem:[#allocation0]]
  $region61: #{tpu_custom_call.1} parent=0
    _
  %s10 = ssub.s32 1, %s8
  %s11 = scalar_select 0, %s10, %s8
  loop: start=0, step=1, limit=4
  $region2: #{tpu_custom_call.1} parent=0 // loop_pre_header
    _
  $region3: #{tpu_custom_call.1} parent=0 // loop_header
    %s13 = sphi 0, %s17
    %p14 = scmp.ge.s32.totalorder %s13, 4
    %s23 = sphi 0, %s25
    %s26 = sphi 0, %s23
    %s27 = sphi 0, %s26
    %s43 = sphi 0, %s27
    %s47 = sphi 0, %s47
    %s49 = sphi 0, %s47
    %s50 = sphi 0, %s49
    %s64 = sphi 0, %s50
    %s68 = sphi 0, %s68
    %s70 = sphi 0, %s68
    %s71 = sphi 0, %s70
    %s85 = sphi 0, %s71
    %s89 = sphi 0, %s89
    %s91 = sphi 0, %s89
    %s92 = sphi 0, %s91
    %s106 = sphi 0, %s92
    %s110 = sphi 0, %s110
    %s112 = sphi 0, %s110
    %s113 = sphi 0, %s112
    %s127 = sphi 0, %s113
    %s131 = sphi 0, %s131
    %s133 = sphi 0, %s131
    %s134 = sphi 0, %s133
    %s148 = sphi 0, %s134
    %s152 = sphi 0, %s152
    %s154 = sphi 0, %s152
    %s155 = sphi 0, %s154
    %s169 = sphi 0, %s155
    %s175 = sphi 0, %s177
    %s178 = sphi 0, %s175
    %s179 = sphi 0, %s178
    %s195 = sphi 0, %s179
  $region4: #{tpu_custom_call.1} parent=0 // loop_header_branch
    %16 = sbr.rel (%p14) target = $region8
  $region5: #{tpu_custom_call.1} parent=0 // loop_body
    %s18 = ssub.s32 %s13, 1
    %s19 = ssub.s32 %s13, 2
    %s20 = sadd.s32 %s13, 1
    %s21 = ssub.s32 %s13, %s20
    %p22 = scmp.eq.s32.totalorder %s21, 0
    %s24 = sadd.s32 %s23, 1
    %s25 = scalar_select %p22, %s23, %s24
    %p28 = pneg %p22
    %p29 = scmp.eq.s32.totalorder %s13, 1
    %p30 = por %p28, %p29
    %p31 = scmp.ne.s32.totalorder %s23, %s26
    %p32 = scmp.eq.s32.totalorder %s13, 0
    %p33 = por %p31, %p32
    %p34 = scmp.ne.s32.totalorder %s23, %s26
    %p35 = scmp.eq.s32.totalorder %s18, 1
    %p36 = por %p34, %p35
    %p37 = scmp.ne.s32.totalorder %s26, %s27
    %p38 = scmp.eq.s32.totalorder %s18, 0
    %p39 = por %p37, %p38
    %p40 = scmp.ne.s32.totalorder %s26, %s27
    %p41 = scmp.eq.s32.totalorder %s19, 1
    %p42 = por %p40, %p41
    %p44 = scmp.ne.s32.totalorder %s27, %s43
    %p45 = scmp.eq.s32.totalorder %s19, 0
    %p46 = por %p44, %p45
    %s48 = sadd.s32 %s47, 1
    %p51 = scmp.eq.s32.totalorder %s13, 1
    %p52 = scmp.ne.s32.totalorder %s47, %s49
    %p53 = scmp.eq.s32.totalorder %s13, 0
    %p54 = por %p52, %p53
    %p55 = scmp.ne.s32.totalorder %s47, %s49
    %p56 = scmp.eq.s32.totalorder %s18, 1
    %p57 = por %p55, %p56
    %p58 = scmp.ne.s32.totalorder %s49, %s50
    %p59 = scmp.eq.s32.totalorder %s18, 0
    %p60 = por %p58, %p59
    %p61 = scmp.ne.s32.totalorder %s49, %s50
    %p62 = scmp.eq.s32.totalorder %s19, 1
    %p63 = por %p61, %p62
    %p65 = scmp.ne.s32.totalorder %s50, %s64
    %p66 = scmp.eq.s32.totalorder %s19, 0
    %p67 = por %p65, %p66
    %s69 = sadd.s32 %s68, 1
    %p72 = scmp.eq.s32.totalorder %s13, 1
    %p73 = scmp.ne.s32.totalorder %s68, %s70
    %p74 = scmp.eq.s32.totalorder %s13, 0
    %p75 = por %p73, %p74
    %p76 = scmp.ne.s32.totalorder %s68, %s70
    %p77 = scmp.eq.s32.totalorder %s18, 1
    %p78 = por %p76, %p77
    %p79 = scmp.ne.s32.totalorder %s70, %s71
    %p80 = scmp.eq.s32.totalorder %s18, 0
    %p81 = por %p79, %p80
    %p82 = scmp.ne.s32.totalorder %s70, %s71
    %p83 = scmp.eq.s32.totalorder %s19, 1
    %p84 = por %p82, %p83
    %p86 = scmp.ne.s32.totalorder %s71, %s85
    %p87 = scmp.eq.s32.totalorder %s19, 0
    %p88 = por %p86, %p87
    %s90 = sadd.s32 %s89, 1
    %p93 = scmp.eq.s32.totalorder %s13, 1
    %p94 = scmp.ne.s32.totalorder %s89, %s91
    %p95 = scmp.eq.s32.totalorder %s13, 0
    %p96 = por %p94, %p95
    %p97 = scmp.ne.s32.totalorder %s89, %s91
    %p98 = scmp.eq.s32.totalorder %s18, 1
    %p99 = por %p97, %p98
    %p100 = scmp.ne.s32.totalorder %s91, %s92
    %p101 = scmp.eq.s32.totalorder %s18, 0
    %p102 = por %p100, %p101
    %p103 = scmp.ne.s32.totalorder %s91, %s92
    %p104 = scmp.eq.s32.totalorder %s19, 1
    %p105 = por %p103, %p104
    %p107 = scmp.ne.s32.totalorder %s92, %s106
    %p108 = scmp.eq.s32.totalorder %s19, 0
    %p109 = por %p107, %p108
    %s111 = sadd.s32 %s110, 1
    %p114 = scmp.eq.s32.totalorder %s13, 1
    %p115 = scmp.ne.s32.totalorder %s110, %s112
    %p116 = scmp.eq.s32.totalorder %s13, 0
    %p117 = por %p115, %p116
    %p118 = scmp.ne.s32.totalorder %s110, %s112
    %p119 = scmp.eq.s32.totalorder %s18, 1
    %p120 = por %p118, %p119
    %p121 = scmp.ne.s32.totalorder %s112, %s113
    %p122 = scmp.eq.s32.totalorder %s18, 0
    %p123 = por %p121, %p122
    %p124 = scmp.ne.s32.totalorder %s112, %s113
    %p125 = scmp.eq.s32.totalorder %s19, 1
    %p126 = por %p124, %p125
    %p128 = scmp.ne.s32.totalorder %s113, %s127
    %p129 = scmp.eq.s32.totalorder %s19, 0
    %p130 = por %p128, %p129
    %s132 = sadd.s32 %s131, 1
    %p135 = scmp.eq.s32.totalorder %s13, 1
    %p136 = scmp.ne.s32.totalorder %s131, %s133
    %p137 = scmp.eq.s32.totalorder %s13, 0
    %p138 = por %p136, %p137
    %p139 = scmp.ne.s32.totalorder %s131, %s133
    %p140 = scmp.eq.s32.totalorder %s18, 1
    %p141 = por %p139, %p140
    %p142 = scmp.ne.s32.totalorder %s133, %s134
    %p143 = scmp.eq.s32.totalorder %s18, 0
    %p144 = por %p142, %p143
    %p145 = scmp.ne.s32.totalorder %s133, %s134
    %p146 = scmp.eq.s32.totalorder %s19, 1
    %p147 = por %p145, %p146
    %p149 = scmp.ne.s32.totalorder %s134, %s148
    %p150 = scmp.eq.s32.totalorder %s19, 0
    %p151 = por %p149, %p150
    %s153 = sadd.s32 %s152, 1
    %p156 = scmp.eq.s32.totalorder %s13, 1
    %p157 = scmp.ne.s32.totalorder %s152, %s154
    %p158 = scmp.eq.s32.totalorder %s13, 0
    %p159 = por %p157, %p158
    %p160 = scmp.ne.s32.totalorder %s152, %s154
    %p161 = scmp.eq.s32.totalorder %s18, 1
    %p162 = por %p160, %p161
    %p163 = scmp.ne.s32.totalorder %s154, %s155
    %p164 = scmp.eq.s32.totalorder %s18, 0
    %p165 = por %p163, %p164
    %p166 = scmp.ne.s32.totalorder %s154, %s155
    %p167 = scmp.eq.s32.totalorder %s19, 1
    %p168 = por %p166, %p167
    %p170 = scmp.ne.s32.totalorder %s155, %s169
    %p171 = scmp.eq.s32.totalorder %s19, 0
    %p172 = por %p170, %p171
    %s173 = ssub.s32 %s13, %s20
    %p174 = scmp.eq.s32.totalorder %s173, 0
    %s176 = sadd.s32 %s175, 1
    %s177 = scalar_select %p174, %s175, %s176
    %p180 = pneg %p174
    %p181 = scmp.eq.s32.totalorder %s13, 1
    %p182 = por %p180, %p181
    %p183 = scmp.ne.s32.totalorder %s175, %s178
    %p184 = scmp.eq.s32.totalorder %s13, 0
    %p185 = por %p183, %p184
    %p186 = scmp.ne.s32.totalorder %s175, %s178
    %p187 = scmp.eq.s32.totalorder %s18, 1
    %p188 = por %p186, %p187
    %p189 = scmp.ne.s32.totalorder %s178, %s179
    %p190 = scmp.eq.s32.totalorder %s18, 0
    %p191 = por %p189, %p190
    %p192 = scmp.ne.s32.totalorder %s178, %s179
    %p193 = scmp.eq.s32.totalorder %s19, 1
    %p194 = por %p192, %p193
    %p196 = scmp.ne.s32.totalorder %s179, %s195
    %p197 = scmp.eq.s32.totalorder %s19, 0
    %p198 = por %p196, %p197
    %p199 = scmp.le.s32.totalorder 1, %s13
    %p200 = scmp.lt.s32.totalorder %s13, 3
    %p201 = pnand %p199, %p200
    %p202 = pneg %p201
    // Predicated region
    $region9: #{tpu_custom_call.1} parent=5 // pred_check
      _
    $region10: #{tpu_custom_call.1} parent=5 // pred_check_branch
      %204 = sbr.rel (%p201) target = $region12
    $region11: #{tpu_custom_call.1} parent=5 // pred_region
      %s205 = ssub.s32 %s13, 1
      // Predicated region
      $region13: #{tpu_custom_call.1} parent=11 // pred_check
        %p206 = pneg %p60
      $region14: #{tpu_custom_call.1} parent=11 // pred_check_branch
        %208 = sbr.rel (%p206) target = $region16
      $region15: #{tpu_custom_call.1} parent=11 // pred_region
        _
      $region16: #{tpu_custom_call.1} parent=11 // pred_fallthru
        _
      // Predicated region
      $region17: #{tpu_custom_call.1} parent=11 // pred_check
        %p209 = pneg %p81
      $region18: #{tpu_custom_call.1} parent=11 // pred_check_branch
        %211 = sbr.rel (%p209) target = $region20
      $region19: #{tpu_custom_call.1} parent=11 // pred_region
        _
      $region20: #{tpu_custom_call.1} parent=11 // pred_fallthru
        _
      // Predicated region
      $region21: #{tpu_custom_call.1} parent=11 // pred_check
        %p212 = pneg %p102
      $region22: #{tpu_custom_call.1} parent=11 // pred_check_branch
        %214 = sbr.rel (%p212) target = $region24
      $region23: #{tpu_custom_call.1} parent=11 // pred_region
        _
      $region24: #{tpu_custom_call.1} parent=11 // pred_fallthru
        _
      // Predicated region
      $region25: #{tpu_custom_call.1} parent=11 // pred_check
        %p215 = pneg %p123
      $region26: #{tpu_custom_call.1} parent=11 // pred_check_branch
        %217 = sbr.rel (%p215) target = $region28
      $region27: #{tpu_custom_call.1} parent=11 // pred_region
        _
      $region28: #{tpu_custom_call.1} parent=11 // pred_fallthru
        _
      // Predicated region
      $region29: #{tpu_custom_call.1} parent=11 // pred_check
        %p218 = pneg %p144
      $region30: #{tpu_custom_call.1} parent=11 // pred_check_branch
        %220 = sbr.rel (%p218) target = $region32
      $region31: #{tpu_custom_call.1} parent=11 // pred_region
        _
      $region32: #{tpu_custom_call.1} parent=11 // pred_fallthru
        _
      // Predicated region
      $region33: #{tpu_custom_call.1} parent=11 // pred_check
        %p221 = pneg %p165
      $region34: #{tpu_custom_call.1} parent=11 // pred_check_branch
        %223 = sbr.rel (%p221) target = $region36
      $region35: #{tpu_custom_call.1} parent=11 // pred_region
        _
      $region36: #{tpu_custom_call.1} parent=11 // pred_fallthru
        _
    $region12: #{tpu_custom_call.1} parent=5 // pred_fallthru
      _
    %p224 = scmp.lt.s32.totalorder %s13, 2
    // Predicated region
    $region37: #{tpu_custom_call.1} parent=5 // pred_check
      %p225 = pneg %p224
    $region38: #{tpu_custom_call.1} parent=5 // pred_check_branch
      %227 = sbr.rel (%p225) target = $region40
    $region39: #{tpu_custom_call.1} parent=5 // pred_region
      // Predicated region
      $region41: #{tpu_custom_call.1} parent=39 // pred_check
        %p228 = pneg %p33
      $region42: #{tpu_custom_call.1} parent=39 // pred_check_branch
        %230 = sbr.rel (%p228) target = $region44
      $region43: #{tpu_custom_call.1} parent=39 // pred_region
        %p231 = scmp.lt.s32.totalorder %s13, 1
        %s232 = scalar_select %p231, %s13, 1
        %s233 = smul.addr %s232, 43
        %s234 = smul.addr %s233, 4
        %s235 = scalar_lea.vmem %s0, %s234
      $region44: #{tpu_custom_call.1} parent=39 // pred_fallthru
        _
    $region40: #{tpu_custom_call.1} parent=5 // pred_fallthru
      _
    %p236 = scmp.le.s32.totalorder 1, %s13
    %p237 = scmp.lt.s32.totalorder %s13, 3
    %p238 = pnand %p236, %p237
    %p239 = pneg %p238
    // Predicated region
    $region45: #{tpu_custom_call.1} parent=5 // pred_check
      _
    $region46: #{tpu_custom_call.1} parent=5 // pred_check_branch
      %241 = sbr.rel (%p238) target = $region48
    $region47: #{tpu_custom_call.1} parent=5 // pred_region
      %s242 = ssub.s32 %s13, 1
      %p243 = scmp.lt.s32.totalorder %s18, 1
      %s244 = scalar_select %p243, %s18, 1
      %s245 = smul.addr %s244, 43
      %s246 = smul.addr %s245, 4
      %s247 = scalar_lea.vmem %s0, %s246
      %p248 = pneg %p39
      %p249 = pneg %p36
      %p250 = pneg %p60
      %p251 = pneg %p57
      %p252 = pneg %p81
      %p253 = pneg %p78
      %p254 = pneg %p102
      %p255 = pneg %p99
      %p256 = pneg %p123
      %p257 = pneg %p120
      %p258 = pneg %p144
      %p259 = pneg %p141
      %p260 = pneg %p165
      %p261 = pneg %p162
      %p262 = pneg %p191
      %p263 = pneg %p188
      %p264 = scmp.lt.s32.totalorder %s18, 1
      %s265 = scalar_select %p264, %s18, 1
      %s266 = smul.addr %s265, 36
      %s267 = smul.addr %s266, 8
      %s268 = scalar_lea.vmem %s7, %s267
      %p269 = scmp.lt.s32.totalorder %s18, 1
      %s270 = scalar_select %p269, %s18, 1
      %s271 = smul.addr %s270, 43
      %s272 = smul.addr %s271, 4
      %s273 = scalar_lea.vmem %s0, %s272
      %p274 = scmp.lt.s32.totalorder %s18, 1
      %s275 = scalar_select %p274, %s18, 1
      %s276 = smul.addr %s275, 36
      %s277 = smul.addr %s276, 8
      %s278 = scalar_lea.vmem %s7, %s277
      %v280 = vld [vmem:[%s273] sm:$0xf]
      %v281 = vld [vmem:[%s273 + $0x4] sm:$0xf]
      %v282 = vld [vmem:[%s273 + $0x8] sm:$0xf]
      %v283 = vld [vmem:[%s273 + $0xc] sm:$0xf]
      %v284 = vld [vmem:[%s273 + $0x10] sm:$0xf]
      %v285 = vld [vmem:[%s273 + $0x14] sm:$0xf]
      %v286 = vld [vmem:[%s273 + $0x18] sm:$0xf]
      %v287 = vld [vmem:[%s273 + $0x1c] sm:$0xf]
      %v288 = vld [vmem:[%s273 + $0x20] sm:$0xf]
      %v289 = vld [vmem:[%s273 + $0x24] sm:$0xf]
      %v290 = vld [vmem:[%s273 + $0x28] sm:$0xf]
      %v291 = vld [vmem:[%s273 + $0x2c] sm:$0xf]
      %v292 = vld [vmem:[%s273 + $0x30] sm:$0xf]
      %v293 = vld [vmem:[%s273 + $0x34] sm:$0xf]
      %v294 = vld [vmem:[%s273 + $0x38] sm:$0xf]
      %v295 = vld [vmem:[%s273 + $0x3c] sm:$0xf]
      %v296 = vld [vmem:[%s273 + $0x40] sm:$0xf]
      %v297 = vld [vmem:[%s273 + $0x44] sm:$0xf]
      %v298 = vld [vmem:[%s273 + $0x48] sm:$0xf]
      %v299 = vld [vmem:[%s273 + $0x4c] sm:$0xf]
      %v300 = vld [vmem:[%s273 + $0x50] sm:$0xf]
      %v301 = vld [vmem:[%s273 + $0x54] sm:$0xf]
      %v302 = vld [vmem:[%s273 + $0x58] sm:$0xf]
      %v303 = vld [vmem:[%s273 + $0x5c] sm:$0xf]
      %v304 = vld [vmem:[%s273 + $0x60] sm:$0xf]
      %v305 = vld [vmem:[%s273 + $0x64] sm:$0xf]
      %v306 = vld [vmem:[%s273 + $0x68] sm:$0xf]
      %v307 = vld [vmem:[%s273 + $0x6c] sm:$0xf]
      %v308 = vld [vmem:[%s273 + $0x70] sm:$0xf]
      %v309 = vld [vmem:[%s273 + $0x74] sm:$0xf]
      %v310 = vld [vmem:[%s273 + $0x78] sm:$0xf]
      %v311 = vld [vmem:[%s273 + $0x7c] sm:$0xf]
      %v312 = vld [vmem:[%s273 + $0x80] sm:$0xf]
      %v313 = vld [vmem:[%s273 + $0x84] sm:$0xf]
      %v314 = vld [vmem:[%s273 + $0x88] sm:$0xf]
      %v315 = vld [vmem:[%s273 + $0x8c] sm:$0xf]
      %v316 = vld [vmem:[%s273 + $0x90] sm:$0x1]
      %v317 = vld [vmem:[%s273] sm:$0xe]
      %v354 = vunpack.c.l.b16 %v280
      %v355 = vunpack.c.l.b16 %v281
      %v356 = vunpack.c.l.b16 %v282
      %v357 = vunpack.c.l.b16 %v283
      %v358 = vunpack.c.l.b16 %v284
      %v359 = vunpack.c.l.b16 %v285
      %v360 = vunpack.c.l.b16 %v286
      %v361 = vunpack.c.l.b16 %v287
      %v362 = vunpack.c.l.b16 %v288
      %v363 = vunpack.c.l.b16 %v289
      %v364 = vunpack.c.l.b16 %v290
      %v365 = vunpack.c.l.b16 %v291
      %v366 = vunpack.c.l.b16 %v292
      %v367 = vunpack.c.l.b16 %v293
      %v368 = vunpack.c.l.b16 %v294
      %v369 = vunpack.c.l.b16 %v295
      %v370 = vunpack.c.l.b16 %v296
      %v371 = vunpack.c.l.b16 %v297
      %v372 = vunpack.c.l.b16 %v298
      %v373 = vunpack.c.l.b16 %v299
      %v374 = vunpack.c.l.b16 %v300
      %v375 = vunpack.c.l.b16 %v301
      %v376 = vunpack.c.l.b16 %v302
      %v377 = vunpack.c.l.b16 %v303
      %v378 = vunpack.c.l.b16 %v304
      %v379 = vunpack.c.l.b16 %v305
      %v380 = vunpack.c.l.b16 %v306
      %v381 = vunpack.c.l.b16 %v307
      %v382 = vunpack.c.l.b16 %v308
      %v383 = vunpack.c.l.b16 %v309
      %v384 = vunpack.c.l.b16 %v310
      %v385 = vunpack.c.l.b16 %v311
      %v386 = vunpack.c.l.b16 %v312
      %v387 = vunpack.c.l.b16 %v313
      %v388 = vunpack.c.l.b16 %v314
      %v389 = vunpack.c.l.b16 %v315
      %v390 = vpack.c.b16 %v355, %v354
      %v391 = vpack.c.b16 %v357, %v356
      %v392 = vpack.c.b16 %v359, %v358
      %v393 = vpack.c.b16 %v361, %v360
      %v394 = vpack.c.b16 %v363, %v362
      %v395 = vpack.c.b16 %v365, %v364
      %v396 = vpack.c.b16 %v367, %v366
      %v397 = vpack.c.b16 %v369, %v368
      %v398 = vpack.c.b16 %v371, %v370
      %v399 = vpack.c.b16 %v373, %v372
      %v400 = vpack.c.b16 %v375, %v374
      %v401 = vpack.c.b16 %v377, %v376
      %v402 = vpack.c.b16 %v379, %v378
      %v403 = vpack.c.b16 %v381, %v380
      %v404 = vpack.c.b16 %v383, %v382
      %v405 = vpack.c.b16 %v385, %v384
      %v406 = vpack.c.b16 %v387, %v386
      %v407 = vpack.c.b16 %v389, %v388
      %v409 = vunpack.c.l.b16 %v316
      %v410 = vpack.c.b16 %v409, %v409
      %vm411 = vsmask.f32 7424
      %v413 = vshrl.u32 %v390, 16
      %v415 = vshll.u32 %v390, 16
      %v417 = vrot.slane %v415, 1
      %v418 = vor.u32 %v413, %v417
      %v420 = vshll.u32 %v391, 16
      %v422 = vrot.slane %v420, 1
      %v423 = vsel %vm411, %v418, %v422
      %v424 = vshrl.u32 %v391, 16
      %v426 = vor.u32 %v424, %v422
      %v428 = vshll.u32 %v392, 16
      %v430 = vrot.slane %v428, 1
      %v431 = vsel %vm411, %v426, %v430
      %v432 = vshrl.u32 %v392, 16
      %v434 = vor.u32 %v432, %v430
      %v436 = vshll.u32 %v393, 16
      %v438 = vrot.slane %v436, 1
      %v439 = vsel %vm411, %v434, %v438
      %v440 = vshrl.u32 %v393, 16
      %v442 = vor.u32 %v440, %v438
      %v444 = vshll.u32 %v394, 16
      %v446 = vrot.slane %v444, 1
      %v447 = vsel %vm411, %v442, %v446
      %v448 = vshrl.u32 %v394, 16
      %v450 = vor.u32 %v448, %v446
      %v452 = vshll.u32 %v395, 16
      %v454 = vrot.slane %v452, 1
      %v455 = vsel %vm411, %v450, %v454
      %v456 = vshrl.u32 %v395, 16
      %v458 = vor.u32 %v456, %v454
      %v460 = vshll.u32 %v396, 16
      %v462 = vrot.slane %v460, 1
      %v463 = vsel %vm411, %v458, %v462
      %v464 = vshrl.u32 %v396, 16
      %v466 = vor.u32 %v464, %v462
      %v468 = vshll.u32 %v397, 16
      %v470 = vrot.slane %v468, 1
      %v471 = vsel %vm411, %v466, %v470
      %v472 = vshrl.u32 %v397, 16
      %v474 = vor.u32 %v472, %v470
      %v476 = vshll.u32 %v398, 16
      %v478 = vrot.slane %v476, 1
      %v479 = vsel %vm411, %v474, %v478
      %v480 = vshrl.u32 %v398, 16
      %v482 = vor.u32 %v480, %v478
      %v484 = vshll.u32 %v399, 16
      %v486 = vrot.slane %v484, 1
      %v487 = vsel %vm411, %v482, %v486
      %v488 = vshrl.u32 %v399, 16
      %v490 = vor.u32 %v488, %v486
      %v492 = vshll.u32 %v400, 16
      %v494 = vrot.slane %v492, 1
      %v495 = vsel %vm411, %v490, %v494
      %v496 = vshrl.u32 %v400, 16
      %v498 = vor.u32 %v496, %v494
      %v500 = vshll.u32 %v401, 16
      %v502 = vrot.slane %v500, 1
      %v503 = vsel %vm411, %v498, %v502
      %v504 = vshrl.u32 %v401, 16
      %v506 = vor.u32 %v504, %v502
      %v508 = vshll.u32 %v402, 16
      %v510 = vrot.slane %v508, 1
      %v511 = vsel %vm411, %v506, %v510
      %v512 = vshrl.u32 %v402, 16
      %v514 = vor.u32 %v512, %v510
      %v516 = vshll.u32 %v403, 16
      %v518 = vrot.slane %v516, 1
      %v519 = vsel %vm411, %v514, %v518
      %v520 = vshrl.u32 %v403, 16
      %v522 = vor.u32 %v520, %v518
      %v524 = vshll.u32 %v404, 16
      %v526 = vrot.slane %v524, 1
      %v527 = vsel %vm411, %v522, %v526
      %v528 = vshrl.u32 %v404, 16
      %v530 = vor.u32 %v528, %v526
      %v532 = vshll.u32 %v405, 16
      %v534 = vrot.slane %v532, 1
      %v535 = vsel %vm411, %v530, %v534
      %v536 = vshrl.u32 %v405, 16
      %v538 = vor.u32 %v536, %v534
      %v540 = vshll.u32 %v406, 16
      %v542 = vrot.slane %v540, 1
      %v543 = vsel %vm411, %v538, %v542
      %v544 = vshrl.u32 %v406, 16
      %v546 = vor.u32 %v544, %v542
      %v548 = vshll.u32 %v407, 16
      %v550 = vrot.slane %v548, 1
      %v551 = vsel %vm411, %v546, %v550
      %v552 = vshrl.u32 %v407, 16
      %v554 = vor.u32 %v552, %v550
      %v556 = vshll.u32 %v410, 16
      %v558 = vrot.slane %v556, 1
      %v559 = vsel %vm411, %v554, %v558
      %560 = vrot.lane.b32.xlu0 %v423, 4
      %v561 = vpop.permute.xlu0 %560
      %562 = vrot.lane.b32.xlu0 %v431, 4
      %v563 = vpop.permute.xlu0 %562
      %564 = vrot.lane.b32.xlu0 %v439, 4
      %v565 = vpop.permute.xlu0 %564
      %566 = vrot.lane.b32.xlu0 %v447, 4
      %v567 = vpop.permute.xlu0 %566
      %568 = vrot.lane.b32.xlu0 %v455, 4
      %v569 = vpop.permute.xlu0 %568
      %570 = vrot.lane.b32.xlu0 %v463, 4
      %v571 = vpop.permute.xlu0 %570
      %572 = vrot.lane.b32.xlu0 %v471, 4
      %v573 = vpop.permute.xlu0 %572
      %574 = vrot.lane.b32.xlu0 %v479, 4
      %v575 = vpop.permute.xlu0 %574
      %576 = vrot.lane.b32.xlu0 %v487, 4
      %v577 = vpop.permute.xlu0 %576
      %578 = vrot.lane.b32.xlu0 %v495, 4
      %v579 = vpop.permute.xlu0 %578
      %580 = vrot.lane.b32.xlu0 %v503, 4
      %v581 = vpop.permute.xlu0 %580
      %582 = vrot.lane.b32.xlu0 %v511, 4
      %v583 = vpop.permute.xlu0 %582
      %584 = vrot.lane.b32.xlu0 %v519, 4
      %v585 = vpop.permute.xlu0 %584
      %586 = vrot.lane.b32.xlu0 %v527, 4
      %v587 = vpop.permute.xlu0 %586
      %588 = vrot.lane.b32.xlu0 %v535, 4
      %v589 = vpop.permute.xlu0 %588
      %590 = vrot.lane.b32.xlu0 %v543, 4
      %v591 = vpop.permute.xlu0 %590
      %592 = vrot.lane.b32.xlu0 %v551, 4
      %v593 = vpop.permute.xlu0 %592
      %594 = vrot.lane.b32.xlu0 %v559, 4
      %v595 = vpop.permute.xlu0 %594
      %v597 = vunpack.c.l.b16 %v317
      %v598 = vpack.c.b16 %v355, %v597
      %vm599 = vcmask 1046528
      %v600 = vrot.slane %v598, 1
      %v601 = vrot.slane %v391, 1
      %v602 = vsel %vm599, %v600, %v601
      %v603 = vrot.slane %v392, 1
      %v604 = vsel %vm599, %v601, %v603
      %v605 = vrot.slane %v393, 1
      %v606 = vsel %vm599, %v603, %v605
      %v607 = vrot.slane %v394, 1
      %v608 = vsel %vm599, %v605, %v607
      %v609 = vrot.slane %v395, 1
      %v610 = vsel %vm599, %v607, %v609
      %v611 = vrot.slane %v396, 1
      %v612 = vsel %vm599, %v609, %v611
      %v613 = vrot.slane %v397, 1
      %v614 = vsel %vm599, %v611, %v613
      %v615 = vrot.slane %v398, 1
      %v616 = vsel %vm599, %v613, %v615
      %v617 = vrot.slane %v399, 1
      %v618 = vsel %vm599, %v615, %v617
      %v619 = vrot.slane %v400, 1
      %v620 = vsel %vm599, %v617, %v619
      %v621 = vrot.slane %v401, 1
      %v622 = vsel %vm599, %v619, %v621
      %v623 = vrot.slane %v402, 1
      %v624 = vsel %vm599, %v621, %v623
      %v625 = vrot.slane %v403, 1
      %v626 = vsel %vm599, %v623, %v625
      %v627 = vrot.slane %v404, 1
      %v628 = vsel %vm599, %v625, %v627
      %v629 = vrot.slane %v405, 1
      %v630 = vsel %vm599, %v627, %v629
      %v631 = vrot.slane %v406, 1
      %v632 = vsel %vm599, %v629, %v631
      %v633 = vrot.slane %v407, 1
      %v634 = vsel %vm599, %v631, %v633
      %v635 = vrot.slane %v410, 1
      %v636 = vsel %vm599, %v633, %v635
      %637 = vrot.lane.b32.xlu0 %v602, 8
      %v638 = vpop.permute.xlu0 %637
      %639 = vrot.lane.b32.xlu0 %v604, 8
      %v640 = vpop.permute.xlu0 %639
      %641 = vrot.lane.b32.xlu0 %v606, 8
      %v642 = vpop.permute.xlu0 %641
      %643 = vrot.lane.b32.xlu0 %v608, 8
      %v644 = vpop.permute.xlu0 %643
      %645 = vrot.lane.b32.xlu0 %v610, 8
      %v646 = vpop.permute.xlu0 %645
      %647 = vrot.lane.b32.xlu0 %v612, 8
      %v648 = vpop.permute.xlu0 %647
      %649 = vrot.lane.b32.xlu0 %v614, 8
      %v650 = vpop.permute.xlu0 %649
      %651 = vrot.lane.b32.xlu0 %v616, 8
      %v652 = vpop.permute.xlu0 %651
      %653 = vrot.lane.b32.xlu0 %v618, 8
      %v654 = vpop.permute.xlu0 %653
      %655 = vrot.lane.b32.xlu0 %v620, 8
      %v656 = vpop.permute.xlu0 %655
      %657 = vrot.lane.b32.xlu0 %v622, 8
      %v658 = vpop.permute.xlu0 %657
      %659 = vrot.lane.b32.xlu0 %v624, 8
      %v660 = vpop.permute.xlu0 %659
      %661 = vrot.lane.b32.xlu0 %v626, 8
      %v662 = vpop.permute.xlu0 %661
      %663 = vrot.lane.b32.xlu0 %v628, 8
      %v664 = vpop.permute.xlu0 %663
      %665 = vrot.lane.b32.xlu0 %v630, 8
      %v666 = vpop.permute.xlu0 %665
      %667 = vrot.lane.b32.xlu0 %v632, 8
      %v668 = vpop.permute.xlu0 %667
      %669 = vrot.lane.b32.xlu0 %v634, 8
      %v670 = vpop.permute.xlu0 %669
      %671 = vrot.lane.b32.xlu0 %v636, 8
      %v672 = vpop.permute.xlu0 %671
      %vm673 = vcmask 31744
      %v675 = vsel %vm673, %v390, %v561
      %v677 = vsel %vm673, %v391, %v563
      %v679 = vsel %vm673, %v392, %v565
      %v681 = vsel %vm673, %v393, %v567
      %v683 = vsel %vm673, %v394, %v569
      %v685 = vsel %vm673, %v395, %v571
      %v687 = vsel %vm673, %v396, %v573
      %v689 = vsel %vm673, %v397, %v575
      %v691 = vsel %vm673, %v398, %v577
      %v693 = vsel %vm673, %v399, %v579
      %v695 = vsel %vm673, %v400, %v581
      %v697 = vsel %vm673, %v401, %v583
      %v699 = vsel %vm673, %v402, %v585
      %v701 = vsel %vm673, %v403, %v587
      %v703 = vsel %vm673, %v404, %v589
      %v705 = vsel %vm673, %v405, %v591
      %v707 = vsel %vm673, %v406, %v593
      %v709 = vsel %vm673, %v407, %v595
      %vm710 = vcmask 64512
      %v712 = vsel %vm710, %v675, %v638
      %v714 = vsel %vm710, %v677, %v640
      %v716 = vsel %vm710, %v679, %v642
      %v718 = vsel %vm710, %v681, %v644
      %v720 = vsel %vm710, %v683, %v646
      %v722 = vsel %vm710, %v685, %v648
      %v724 = vsel %vm710, %v687, %v650
      %v726 = vsel %vm710, %v689, %v652
      %v728 = vsel %vm710, %v691, %v654
      %v730 = vsel %vm710, %v693, %v656
      %v732 = vsel %vm710, %v695, %v658
      %v734 = vsel %vm710, %v697, %v660
      %v736 = vsel %vm710, %v699, %v662
      %v738 = vsel %vm710, %v701, %v664
      %v740 = vsel %vm710, %v703, %v666
      %v742 = vsel %vm710, %v705, %v668
      %v744 = vsel %vm710, %v707, %v670
      %v746 = vsel %vm710, %v709, %v672
      %v747 = vld [vmem:[%s1] sm:$0xf]
      %v748 = vld [vmem:[%s1 + $0x4] sm:$0x3]
      %v749 = vld [vmem:[%s273 + $0x8] sm:$0xe]
      %v750 = vld [vmem:[%s273 + $0x90] sm:$0xf]
      %v751 = vld [vmem:[%s273 + $0x94] sm:$0xf]
      %v752 = vld [vmem:[%s273 + $0x98] sm:$0x1]
      %v753 = vld [vmem:[%s273 + $0x98] sm:$0x3]
      %v754 = vld [vmem:[%s273 + $0x8] sm:$0xc]
      %v759 = vunpack.c.l.b16 %v749
      %v760 = vunpack.c.l.b16 %v750
      %v761 = vunpack.c.l.b16 %v751
      %v762 = vunpack.c.l.b16 %v752
      %v763 = vpack.c.b16 %v357, %v759
      %v764 = vpack.c.b16 %v761, %v760
      %v765 = vpack.c.b16 %v762, %v762
      %v767 = vunpack.c.l.b16 %v753
      %v768 = vpack.c.b16 %v767, %v767
      %v770 = vshrl.u32 %v763, 16
      %v772 = vshll.u32 %v763, 16
      %v774 = vrot.slane %v772, 1
      %v775 = vor.u32 %v770, %v774
      %v776 = vsel %vm411, %v775, %v430
      %v778 = vshll.u32 %v764, 16
      %v780 = vrot.slane %v778, 1
      %v781 = vsel %vm411, %v554, %v780
      %v782 = vshrl.u32 %v764, 16
      %v784 = vor.u32 %v782, %v780
      %v786 = vshll.u32 %v768, 16
      %v788 = vrot.slane %v786, 1
      %v789 = vsel %vm411, %v784, %v788
      %v790 = vshrl.u32 %v768, 16
      %v792 = vor.u32 %v790, %v788
      %793 = vrot.lane.b32.xlu0 %v776, 4
      %v794 = vpop.permute.xlu0 %793
      %795 = vrot.lane.b32.xlu0 %v781, 4
      %v796 = vpop.permute.xlu0 %795
      %797 = vrot.lane.b32.xlu0 %v789, 4
      %v798 = vpop.permute.xlu0 %797
      %799 = vrot.lane.b32.xlu0 %v792, 4
      %v800 = vpop.permute.xlu0 %799
      %v802 = vunpack.c.l.b16 %v754
      %v803 = vpack.c.b16 %v357, %v802
      %v804 = vrot.slane %v803, 1
      %v805 = vsel %vm599, %v804, %v603
      %v806 = vrot.slane %v764, 1
      %v807 = vsel %vm599, %v633, %v806
      %v808 = vrot.slane %v768, 1
      %v809 = vsel %vm599, %v806, %v808
      %810 = vrot.lane.b32.xlu0 %v805, 8
      %v811 = vpop.permute.xlu0 %810
      %812 = vrot.lane.b32.xlu0 %v807, 8
      %v813 = vpop.permute.xlu0 %812
      %814 = vrot.lane.b32.xlu0 %v809, 8
      %v815 = vpop.permute.xlu0 %814
      %816 = vrot.lane.b32.xlu0 %v808, 8
      %v817 = vpop.permute.xlu0 %816
      %v819 = vsel %vm673, %v763, %v794
      %v821 = vsel %vm673, %v407, %v796
      %v823 = vsel %vm673, %v764, %v798
      %v826 = vsel %vm673, %v765, %v800
      %v828 = vsel %vm710, %v819, %v811
      %v830 = vsel %vm710, %v821, %v813
      %v832 = vsel %vm710, %v823, %v815
      %v834 = vsel %vm710, %v826, %v817
      %s835 = scalar_lea.vmem %s1, 8
      %v836 = vld [vmem:[%s835] sm:$0xf]
      %v837 = vld [vmem:[%s835 + $0x4] sm:$0x3]
      %v857 = vrot.slane %v828, 1
      %v858 = vrot.slane %v716, 1
      %v859 = vsel %vm599, %v857, %v858
      %v860 = vrot.slane %v718, 1
      %v861 = vsel %vm599, %v858, %v860
      %v862 = vrot.slane %v720, 1
      %v863 = vsel %vm599, %v860, %v862
      %v864 = vrot.slane %v722, 1
      %v865 = vsel %vm599, %v862, %v864
      %v866 = vrot.slane %v724, 1
      %v867 = vsel %vm599, %v864, %v866
      %v868 = vrot.slane %v726, 1
      %v869 = vsel %vm599, %v866, %v868
      %v870 = vrot.slane %v728, 1
      %v871 = vsel %vm599, %v868, %v870
      %v872 = vrot.slane %v730, 1
      %v873 = vsel %vm599, %v870, %v872
      %v874 = vrot.slane %v732, 1
      %v875 = vsel %vm599, %v872, %v874
      %v876 = vrot.slane %v734, 1
      %v877 = vsel %vm599, %v874, %v876
      %v878 = vrot.slane %v736, 1
      %v879 = vsel %vm599, %v876, %v878
      %v880 = vrot.slane %v738, 1
      %v881 = vsel %vm599, %v878, %v880
      %v882 = vrot.slane %v740, 1
      %v883 = vsel %vm599, %v880, %v882
      %v884 = vrot.slane %v742, 1
      %v885 = vsel %vm599, %v882, %v884
      %v886 = vrot.slane %v744, 1
      %v887 = vsel %vm599, %v884, %v886
      %v888 = vrot.slane %v830, 1
      %v889 = vsel %vm599, %v886, %v888
      %v890 = vrot.slane %v832, 1
      %v891 = vsel %vm599, %v888, %v890
      %v892 = vrot.slane %v834, 1
      %v893 = vsel %vm599, %v890, %v892
      %v896 = vunpack.c.l.b16 %v836
      %v897 = vunpack.c.l.b16 %v837
      %v898 = vpack.c.b16 %v897, %v896
      %vm899 = vcmask 97280
      %v901 = vsel %vm899, %v859, 0
      %v904 = vsel %vm899, %v861, 0
      %v907 = vsel %vm899, %v863, 0
      %v910 = vsel %vm899, %v865, 0
      %v913 = vsel %vm899, %v867, 0
      %v916 = vsel %vm899, %v869, 0
      %v919 = vsel %vm899, %v871, 0
      %v922 = vsel %vm899, %v873, 0
      %v925 = vsel %vm899, %v875, 0
      %v928 = vsel %vm899, %v877, 0
      %v931 = vsel %vm899, %v879, 0
      %v934 = vsel %vm899, %v881, 0
      %v937 = vsel %vm899, %v883, 0
      %v940 = vsel %vm899, %v885, 0
      %v943 = vsel %vm899, %v887, 0
      %v946 = vsel %vm899, %v889, 0
      %v949 = vsel %vm899, %v891, 0
      %v952 = vsel %vm899, %v893, 0
      %vm954 = vcmask 1045504
      %v956 = vsel %vm954, %v898, 0
      %958 = vmatprep.subr.bf16.mxu0 0
      %959 = vmatpush1.bf16.msra.mxu0 0
      %960 = vmatprep.subr.bf16.mxu0 0
      %961 = vmatpush1.bf16.msra.mxu0 0
      %962 = vmatprep.subr.bf16.mxu0 0
      %963 = vmatpush1.bf16.msra.mxu0 0
      %964 = vmatprep.subr.bf16.mxu0 0
      %965 = vmatpush1.bf16.msra.mxu0 0
      %966 = vmatprep.subr.bf16.mxu0 0
      %967 = vmatpush1.bf16.msra.mxu0 0
      %968 = vmatprep.subr.bf16.mxu0 0
      %969 = vmatpush1.bf16.msra.mxu0 0
      %970 = vmatprep.subr.bf16.mxu0 0
      %971 = vmatpush1.bf16.msra.mxu0 0
      %972 = vmatprep.subr.bf16.mxu0 0
      %973 = vmatpush1.bf16.msra.mxu0 %v956
      %974 = vmatprep.subr.bf16.mxu0 0
      %975 = vmatpush2.bf16.msra.mxu0 0
      %976 = vmatprep.subr.bf16.mxu0 0
      %977 = vmatpush2.bf16.msra.mxu0 0
      %978 = vmatprep.subr.bf16.mxu0 0
      %979 = vmatpush2.bf16.msra.mxu0 0
      %980 = vmatprep.subr.bf16.mxu0 0
      %981 = vmatpush2.bf16.msra.mxu0 0
      %982 = vmatprep.subr.bf16.mxu0 0
      %983 = vmatpush2.bf16.msra.mxu0 0
      %984 = vmatprep.subr.bf16.mxu0 0
      %985 = vmatpush2.bf16.msra.mxu0 0
      %986 = vmatprep.subr.bf16.mxu0 0
      %987 = vmatpush2.bf16.msra.mxu0 0
      %988 = vmatprep.subr.bf16.mxu0 0
      %989 = vmatpush2.bf16.msra.mxu0 0
      %990 = vmatprep.mubr.bf16.mxu0 0
      %991 = vmatmul.mubr.bf16.gmra.mxu0 %v901
      %v992 = vpop.f32.mrf.mxu0
      %v993 = vadd.f32 0.0, %v992
      %v994 = vpop.f32.mrf.mxu0
      %v995 = vpop.f32.mrf.mxu0
      %v996 = vadd.f32 0.0, %v995
      %v997 = vpop.f32.mrf.mxu0
      %998 = vmatprep.mubr.bf16.mxu0 0
      %999 = vmatmul.mubr.bf16.gmra.mxu0 %v904
      %v1000 = vpop.f32.mrf.mxu0
      %v1001 = vadd.f32 0.0, %v1000
      %v1002 = vpop.f32.mrf.mxu0
      %v1003 = vpop.f32.mrf.mxu0
      %v1004 = vadd.f32 0.0, %v1003
      %v1005 = vpop.f32.mrf.mxu0
      %1006 = vmatprep.mubr.bf16.mxu0 0
      %1007 = vmatmul.mubr.bf16.gmra.mxu0 %v907
      %v1008 = vpop.f32.mrf.mxu0
      %v1009 = vadd.f32 0.0, %v1008
      %v1010 = vpop.f32.mrf.mxu0
      %v1011 = vpop.f32.mrf.mxu0
      %v1012 = vadd.f32 0.0, %v1011
      %v1013 = vpop.f32.mrf.mxu0
      %1014 = vmatprep.mubr.bf16.mxu0 0
      %1015 = vmatmul.mubr.bf16.gmra.mxu0 %v910
      %v1016 = vpop.f32.mrf.mxu0
      %v1017 = vadd.f32 0.0, %v1016
      %v1018 = vpop.f32.mrf.mxu0
      %v1019 = vpop.f32.mrf.mxu0
      %v1020 = vadd.f32 0.0, %v1019
      %v1021 = vpop.f32.mrf.mxu0
      %1022 = vmatprep.mubr.bf16.mxu0 0
      %1023 = vmatmul.mubr.bf16.gmra.mxu0 %v913
      %v1024 = vpop.f32.mrf.mxu0
      %v1025 = vadd.f32 0.0, %v1024
      %v1026 = vpop.f32.mrf.mxu0
      %v1027 = vpop.f32.mrf.mxu0
      %v1028 = vadd.f32 0.0, %v1027
      %v1029 = vpop.f32.mrf.mxu0
      %1030 = vmatprep.mubr.bf16.mxu0 0
      %1031 = vmatmul.mubr.bf16.gmra.mxu0 %v916
      %v1032 = vpop.f32.mrf.mxu0
      %v1033 = vadd.f32 0.0, %v1032
      %v1034 = vpop.f32.mrf.mxu0
      %v1035 = vpop.f32.mrf.mxu0
      %v1036 = vadd.f32 0.0, %v1035
      %v1037 = vpop.f32.mrf.mxu0
      %1038 = vmatprep.mubr.bf16.mxu0 0
      %1039 = vmatmul.mubr.bf16.gmra.mxu0 %v919
      %v1040 = vpop.f32.mrf.mxu0
      %v1041 = vadd.f32 0.0, %v1040
      %v1042 = vpop.f32.mrf.mxu0
      %v1043 = vpop.f32.mrf.mxu0
      %v1044 = vadd.f32 0.0, %v1043
      %v1045 = vpop.f32.mrf.mxu0
      %1046 = vmatprep.mubr.bf16.mxu0 0
      %1047 = vmatmul.mubr.bf16.gmra.mxu0 %v922
      %v1048 = vpop.f32.mrf.mxu0
      %v1049 = vadd.f32 0.0, %v1048
      %v1050 = vpop.f32.mrf.mxu0
      %v1051 = vpop.f32.mrf.mxu0
      %v1052 = vadd.f32 0.0, %v1051
      %v1053 = vpop.f32.mrf.mxu0
      %1054 = vmatprep.mubr.bf16.mxu0 0
      %1055 = vmatmul.mubr.bf16.gmra.mxu0 %v925
      %v1056 = vpop.f32.mrf.mxu0
      %v1057 = vadd.f32 0.0, %v1056
      %v1058 = vpop.f32.mrf.mxu0
      %v1059 = vpop.f32.mrf.mxu0
      %v1060 = vadd.f32 0.0, %v1059
      %v1061 = vpop.f32.mrf.mxu0
      %1062 = vmatprep.mubr.bf16.mxu0 0
      %1063 = vmatmul.mubr.bf16.gmra.mxu0 %v928
      %v1064 = vpop.f32.mrf.mxu0
      %v1065 = vadd.f32 0.0, %v1064
      %v1066 = vpop.f32.mrf.mxu0
      %v1067 = vpop.f32.mrf.mxu0
      %v1068 = vadd.f32 0.0, %v1067
      %v1069 = vpop.f32.mrf.mxu0
      %1070 = vmatprep.mubr.bf16.mxu0 0
      %1071 = vmatmul.mubr.bf16.gmra.mxu0 %v931
      %v1072 = vpop.f32.mrf.mxu0
      %v1073 = vadd.f32 0.0, %v1072
      %v1074 = vpop.f32.mrf.mxu0
      %v1075 = vpop.f32.mrf.mxu0
      %v1076 = vadd.f32 0.0, %v1075
      %v1077 = vpop.f32.mrf.mxu0
      %1078 = vmatprep.mubr.bf16.mxu0 0
      %1079 = vmatmul.mubr.bf16.gmra.mxu0 %v934
      %v1080 = vpop.f32.mrf.mxu0
      %v1081 = vadd.f32 0.0, %v1080
      %v1082 = vpop.f32.mrf.mxu0
      %v1083 = vpop.f32.mrf.mxu0
      %v1084 = vadd.f32 0.0, %v1083
      %v1085 = vpop.f32.mrf.mxu0
      %1086 = vmatprep.mubr.bf16.mxu0 0
      %1087 = vmatmul.mubr.bf16.gmra.mxu0 %v937
      %v1088 = vpop.f32.mrf.mxu0
      %v1089 = vadd.f32 0.0, %v1088
      %v1090 = vpop.f32.mrf.mxu0
      %v1091 = vpop.f32.mrf.mxu0
      %v1092 = vadd.f32 0.0, %v1091
      %v1093 = vpop.f32.mrf.mxu0
      %1094 = vmatprep.mubr.bf16.mxu0 0
      %1095 = vmatmul.mubr.bf16.gmra.mxu0 %v940
      %v1096 = vpop.f32.mrf.mxu0
      %v1097 = vadd.f32 0.0, %v1096
      %v1098 = vpop.f32.mrf.mxu0
      %v1099 = vpop.f32.mrf.mxu0
      %v1100 = vadd.f32 0.0, %v1099
      %v1101 = vpop.f32.mrf.mxu0
      %1102 = vmatprep.mubr.bf16.mxu0 0
      %1103 = vmatmul.mubr.bf16.gmra.mxu0 %v943
      %v1104 = vpop.f32.mrf.mxu0
      %v1105 = vadd.f32 0.0, %v1104
      %v1106 = vpop.f32.mrf.mxu0
      %v1107 = vpop.f32.mrf.mxu0
      %v1108 = vadd.f32 0.0, %v1107
      %v1109 = vpop.f32.mrf.mxu0
      %1110 = vmatprep.mubr.bf16.mxu0 0
      %1111 = vmatmul.mubr.bf16.gmra.mxu0 %v946
      %v1112 = vpop.f32.mrf.mxu0
      %v1113 = vadd.f32 0.0, %v1112
      %v1114 = vpop.f32.mrf.mxu0
      %v1115 = vpop.f32.mrf.mxu0
      %v1116 = vadd.f32 0.0, %v1115
      %v1117 = vpop.f32.mrf.mxu0
      %1118 = vmatprep.mubr.bf16.mxu0 0
      %1119 = vmatmul.mubr.bf16.gmra.mxu0 %v949
      %v1120 = vpop.f32.mrf.mxu0
      %v1121 = vadd.f32 0.0, %v1120
      %v1122 = vpop.f32.mrf.mxu0
      %v1123 = vpop.f32.mrf.mxu0
      %v1124 = vadd.f32 0.0, %v1123
      %v1125 = vpop.f32.mrf.mxu0
      %1126 = vmatprep.mubr.bf16.mxu0 0
      %1127 = vmatmul.mubr.bf16.gmra.mxu0 %v952
      %v1128 = vpop.f32.mrf.mxu0
      %v1129 = vadd.f32 0.0, %v1128
      %v1130 = vpop.f32.mrf.mxu0
      %v1131 = vpop.f32.mrf.mxu0
      %v1132 = vadd.f32 0.0, %v1131
      %v1133 = vpop.f32.mrf.mxu0
      %1134 = vdwg.mxu0
      %v1137 = vunpack.c.l.b16 %v747
      %v1138 = vunpack.c.l.b16 %v748
      %v1139 = vpack.c.b16 %v1138, %v1137
      %v1140 = vsel %vm899, %v712, 0
      %v1142 = vsel %vm899, %v714, 0
      %v1144 = vsel %vm899, %v716, 0
      %v1146 = vsel %vm899, %v718, 0
      %v1148 = vsel %vm899, %v720, 0
      %v1150 = vsel %vm899, %v722, 0
      %v1152 = vsel %vm899, %v724, 0
      %v1154 = vsel %vm899, %v726, 0
      %v1156 = vsel %vm899, %v728, 0
      %v1158 = vsel %vm899, %v730, 0
      %v1160 = vsel %vm899, %v732, 0
      %v1162 = vsel %vm899, %v734, 0
      %v1164 = vsel %vm899, %v736, 0
      %v1166 = vsel %vm899, %v738, 0
      %v1168 = vsel %vm899, %v740, 0
      %v1170 = vsel %vm899, %v742, 0
      %v1172 = vsel %vm899, %v744, 0
      %v1174 = vsel %vm899, %v746, 0
      %v1177 = vsel %vm954, %v1139, 0
      %1179 = vmatprep.subr.bf16.mxu0 0
      %1180 = vmatpush1.bf16.msra.mxu0 0
      %1181 = vmatprep.subr.bf16.mxu0 0
      %1182 = vmatpush1.bf16.msra.mxu0 0
      %1183 = vmatprep.subr.bf16.mxu0 0
      %1184 = vmatpush1.bf16.msra.mxu0 0
      %1185 = vmatprep.subr.bf16.mxu0 0
      %1186 = vmatpush1.bf16.msra.mxu0 0
      %1187 = vmatprep.subr.bf16.mxu0 0
      %1188 = vmatpush1.bf16.msra.mxu0 0
      %1189 = vmatprep.subr.bf16.mxu0 0
      %1190 = vmatpush1.bf16.msra.mxu0 0
      %1191 = vmatprep.subr.bf16.mxu0 0
      %1192 = vmatpush1.bf16.msra.mxu0 0
      %1193 = vmatprep.subr.bf16.mxu0 0
      %1194 = vmatpush1.bf16.msra.mxu0 %v1177
      %1195 = vmatprep.subr.bf16.mxu0 0
      %1196 = vmatpush2.bf16.msra.mxu0 0
      %1197 = vmatprep.subr.bf16.mxu0 0
      %1198 = vmatpush2.bf16.msra.mxu0 0
      %1199 = vmatprep.subr.bf16.mxu0 0
      %1200 = vmatpush2.bf16.msra.mxu0 0
      %1201 = vmatprep.subr.bf16.mxu0 0
      %1202 = vmatpush2.bf16.msra.mxu0 0
      %1203 = vmatprep.subr.bf16.mxu0 0
      %1204 = vmatpush2.bf16.msra.mxu0 0
      %1205 = vmatprep.subr.bf16.mxu0 0
      %1206 = vmatpush2.bf16.msra.mxu0 0
      %1207 = vmatprep.subr.bf16.mxu0 0
      %1208 = vmatpush2.bf16.msra.mxu0 0
      %1209 = vmatprep.subr.bf16.mxu0 0
      %1210 = vmatpush2.bf16.msra.mxu0 0
      %1211 = vmatprep.mubr.bf16.mxu0 0
      %1212 = vmatmul.mubr.bf16.gmra.mxu0 %v1140
      %v1213 = vpop.f32.mrf.mxu0
      %v1214 = vadd.f32 %v993, %v1213
      %v1215 = vpop.f32.mrf.mxu0
      %v1216 = vpop.f32.mrf.mxu0
      %v1217 = vadd.f32 %v996, %v1216
      %v1218 = vpop.f32.mrf.mxu0
      %1219 = vmatprep.mubr.bf16.mxu0 0
      %1220 = vmatmul.mubr.bf16.gmra.mxu0 %v1142
      %v1221 = vpop.f32.mrf.mxu0
      %v1222 = vadd.f32 %v1001, %v1221
      %v1223 = vpop.f32.mrf.mxu0
      %v1224 = vpop.f32.mrf.mxu0
      %v1225 = vadd.f32 %v1004, %v1224
      %v1226 = vpop.f32.mrf.mxu0
      %1227 = vmatprep.mubr.bf16.mxu0 0
      %1228 = vmatmul.mubr.bf16.gmra.mxu0 %v1144
      %v1229 = vpop.f32.mrf.mxu0
      %v1230 = vadd.f32 %v1009, %v1229
      %v1231 = vpop.f32.mrf.mxu0
      %v1232 = vpop.f32.mrf.mxu0
      %v1233 = vadd.f32 %v1012, %v1232
      %v1234 = vpop.f32.mrf.mxu0
      %1235 = vmatprep.mubr.bf16.mxu0 0
      %1236 = vmatmul.mubr.bf16.gmra.mxu0 %v1146
      %v1237 = vpop.f32.mrf.mxu0
      %v1238 = vadd.f32 %v1017, %v1237
      %v1239 = vpop.f32.mrf.mxu0
      %v1240 = vpop.f32.mrf.mxu0
      %v1241 = vadd.f32 %v1020, %v1240
      %v1242 = vpop.f32.mrf.mxu0
      %1243 = vmatprep.mubr.bf16.mxu0 0
      %1244 = vmatmul.mubr.bf16.gmra.mxu0 %v1148
      %v1245 = vpop.f32.mrf.mxu0
      %v1246 = vadd.f32 %v1025, %v1245
      %v1247 = vpop.f32.mrf.mxu0
      %v1248 = vpop.f32.mrf.mxu0
      %v1249 = vadd.f32 %v1028, %v1248
      %v1250 = vpop.f32.mrf.mxu0
      %1251 = vmatprep.mubr.bf16.mxu0 0
      %1252 = vmatmul.mubr.bf16.gmra.mxu0 %v1150
      %v1253 = vpop.f32.mrf.mxu0
      %v1254 = vadd.f32 %v1033, %v1253
      %v1255 = vpop.f32.mrf.mxu0
      %v1256 = vpop.f32.mrf.mxu0
      %v1257 = vadd.f32 %v1036, %v1256
      %v1258 = vpop.f32.mrf.mxu0
      %1259 = vmatprep.mubr.bf16.mxu0 0
      %1260 = vmatmul.mubr.bf16.gmra.mxu0 %v1152
      %v1261 = vpop.f32.mrf.mxu0
      %v1262 = vadd.f32 %v1041, %v1261
      %v1263 = vpop.f32.mrf.mxu0
      %v1264 = vpop.f32.mrf.mxu0
      %v1265 = vadd.f32 %v1044, %v1264
      %v1266 = vpop.f32.mrf.mxu0
      %1267 = vmatprep.mubr.bf16.mxu0 0
      %1268 = vmatmul.mubr.bf16.gmra.mxu0 %v1154
      %v1269 = vpop.f32.mrf.mxu0
      %v1270 = vadd.f32 %v1049, %v1269
      %v1271 = vpop.f32.mrf.mxu0
      %v1272 = vpop.f32.mrf.mxu0
      %v1273 = vadd.f32 %v1052, %v1272
      %v1274 = vpop.f32.mrf.mxu0
      %1275 = vmatprep.mubr.bf16.mxu0 0
      %1276 = vmatmul.mubr.bf16.gmra.mxu0 %v1156
      %v1277 = vpop.f32.mrf.mxu0
      %v1278 = vadd.f32 %v1057, %v1277
      %v1279 = vpop.f32.mrf.mxu0
      %v1280 = vpop.f32.mrf.mxu0
      %v1281 = vadd.f32 %v1060, %v1280
      %v1282 = vpop.f32.mrf.mxu0
      %1283 = vmatprep.mubr.bf16.mxu0 0
      %1284 = vmatmul.mubr.bf16.gmra.mxu0 %v1158
      %v1285 = vpop.f32.mrf.mxu0
      %v1286 = vadd.f32 %v1065, %v1285
      %v1287 = vpop.f32.mrf.mxu0
      %v1288 = vpop.f32.mrf.mxu0
      %v1289 = vadd.f32 %v1068, %v1288
      %v1290 = vpop.f32.mrf.mxu0
      %1291 = vmatprep.mubr.bf16.mxu0 0
      %1292 = vmatmul.mubr.bf16.gmra.mxu0 %v1160
      %v1293 = vpop.f32.mrf.mxu0
      %v1294 = vadd.f32 %v1073, %v1293
      %v1295 = vpop.f32.mrf.mxu0
      %v1296 = vpop.f32.mrf.mxu0
      %v1297 = vadd.f32 %v1076, %v1296
      %v1298 = vpop.f32.mrf.mxu0
      %1299 = vmatprep.mubr.bf16.mxu0 0
      %1300 = vmatmul.mubr.bf16.gmra.mxu0 %v1162
      %v1301 = vpop.f32.mrf.mxu0
      %v1302 = vadd.f32 %v1081, %v1301
      %v1303 = vpop.f32.mrf.mxu0
      %v1304 = vpop.f32.mrf.mxu0
      %v1305 = vadd.f32 %v1084, %v1304
      %v1306 = vpop.f32.mrf.mxu0
      %1307 = vmatprep.mubr.bf16.mxu0 0
      %1308 = vmatmul.mubr.bf16.gmra.mxu0 %v1164
      %v1309 = vpop.f32.mrf.mxu0
      %v1310 = vadd.f32 %v1089, %v1309
      %v1311 = vpop.f32.mrf.mxu0
      %v1312 = vpop.f32.mrf.mxu0
      %v1313 = vadd.f32 %v1092, %v1312
      %v1314 = vpop.f32.mrf.mxu0
      %1315 = vmatprep.mubr.bf16.mxu0 0
      %1316 = vmatmul.mubr.bf16.gmra.mxu0 %v1166
      %v1317 = vpop.f32.mrf.mxu0
      %v1318 = vadd.f32 %v1097, %v1317
      %v1319 = vpop.f32.mrf.mxu0
      %v1320 = vpop.f32.mrf.mxu0
      %v1321 = vadd.f32 %v1100, %v1320
      %v1322 = vpop.f32.mrf.mxu0
      %1323 = vmatprep.mubr.bf16.mxu0 0
      %1324 = vmatmul.mubr.bf16.gmra.mxu0 %v1168
      %v1325 = vpop.f32.mrf.mxu0
      %v1326 = vadd.f32 %v1105, %v1325
      %v1327 = vpop.f32.mrf.mxu0
      %v1328 = vpop.f32.mrf.mxu0
      %v1329 = vadd.f32 %v1108, %v1328
      %v1330 = vpop.f32.mrf.mxu0
      %1331 = vmatprep.mubr.bf16.mxu0 0
      %1332 = vmatmul.mubr.bf16.gmra.mxu0 %v1170
      %v1333 = vpop.f32.mrf.mxu0
      %v1334 = vadd.f32 %v1113, %v1333
      %v1335 = vpop.f32.mrf.mxu0
      %v1336 = vpop.f32.mrf.mxu0
      %v1337 = vadd.f32 %v1116, %v1336
      %v1338 = vpop.f32.mrf.mxu0
      %1339 = vmatprep.mubr.bf16.mxu0 0
      %1340 = vmatmul.mubr.bf16.gmra.mxu0 %v1172
      %v1341 = vpop.f32.mrf.mxu0
      %v1342 = vadd.f32 %v1121, %v1341
      %v1343 = vpop.f32.mrf.mxu0
      %v1344 = vpop.f32.mrf.mxu0
      %v1345 = vadd.f32 %v1124, %v1344
      %v1346 = vpop.f32.mrf.mxu0
      %1347 = vmatprep.mubr.bf16.mxu0 0
      %1348 = vmatmul.mubr.bf16.gmra.mxu0 %v1174
      %v1349 = vpop.f32.mrf.mxu0
      %v1350 = vadd.f32 %v1129, %v1349
      %v1351 = vpop.f32.mrf.mxu0
      %v1352 = vpop.f32.mrf.mxu0
      %v1353 = vadd.f32 %v1132, %v1352
      %v1354 = vpop.f32.mrf.mxu0
      %1355 = vdwg.mxu0
      %v1356 = vld [vmem:[%s273 + $0x10] sm:$0xc]
      %v1357 = vld [vmem:[%s273 + $0x14] sm:$0xf]
      %v1358 = vld [vmem:[%s273 + $0x18] sm:$0xf]
      %v1359 = vld [vmem:[%s273 + $0x1c] sm:$0xf]
      %v1360 = vld [vmem:[%s273 + $0x20] sm:$0xf]
      %v1361 = vld [vmem:[%s273 + $0x24] sm:$0xf]
      %v1362 = vld [vmem:[%s273 + $0x28] sm:$0xf]
      %v1363 = vld [vmem:[%s273 + $0x2c] sm:$0xf]
      %v1364 = vld [vmem:[%s273 + $0x30] sm:$0xf]
      %v1365 = vld [vmem:[%s273 + $0x34] sm:$0xf]
      %v1366 = vld [vmem:[%s273 + $0x38] sm:$0xf]
      %v1367 = vld [vmem:[%s273 + $0x3c] sm:$0xf]
      %v1368 = vld [vmem:[%s273 + $0x40] sm:$0xf]
      %v1369 = vld [vmem:[%s273 + $0x44] sm:$0xf]
      %v1370 = vld [vmem:[%s273 + $0x48] sm:$0xf]
      %v1371 = vld [vmem:[%s273 + $0x4c] sm:$0xf]
      %v1372 = vld [vmem:[%s273 + $0x50] sm:$0xf]
      %v1373 = vld [vmem:[%s273 + $0x54] sm:$0xf]
      %v1374 = vld [vmem:[%s273 + $0x58] sm:$0xf]
      %v1375 = vld [vmem:[%s273 + $0x5c] sm:$0xf]
      %v1376 = vld [vmem:[%s273 + $0x60] sm:$0xf]
      %v1377 = vld [vmem:[%s273 + $0x64] sm:$0xf]
      %v1378 = vld [vmem:[%s273 + $0x68] sm:$0xf]
      %v1379 = vld [vmem:[%s273 + $0x6c] sm:$0xf]
      %v1380 = vld [vmem:[%s273 + $0x70] sm:$0xf]
      %v1381 = vld [vmem:[%s273 + $0x74] sm:$0xf]
      %v1382 = vld [vmem:[%s273 + $0x78] sm:$0xf]
      %v1383 = vld [vmem:[%s273 + $0x7c] sm:$0xf]
      %v1384 = vld [vmem:[%s273 + $0x80] sm:$0xf]
      %v1385 = vld [vmem:[%s273 + $0x84] sm:$0xf]
      %v1386 = vld [vmem:[%s273 + $0x88] sm:$0xf]
      %v1387 = vld [vmem:[%s273 + $0x8c] sm:$0xf]
      %v1388 = vld [vmem:[%s273 + $0x90] sm:$0xf]
      %v1389 = vld [vmem:[%s273 + $0x94] sm:$0xf]
      %v1390 = vld [vmem:[%s273 + $0x98] sm:$0xf]
      %v1391 = vld [vmem:[%s273 + $0x9c] sm:$0xf]
      %v1392 = vld [vmem:[%s273 + $0xa0] sm:$0x3]
      %v1393 = vld [vmem:[%s273 + $0xa0] sm:$0x7]
      %v1394 = vld [vmem:[%s273 + $0x10] sm:$0x8]
      %v1432 = vunpack.c.l.b16 %v1356
      %v1433 = vunpack.c.l.b16 %v1357
      %v1434 = vunpack.c.l.b16 %v1358
      %v1435 = vunpack.c.l.b16 %v1359
      %v1436 = vunpack.c.l.b16 %v1360
      %v1437 = vunpack.c.l.b16 %v1361
      %v1438 = vunpack.c.l.b16 %v1362
      %v1439 = vunpack.c.l.b16 %v1363
      %v1440 = vunpack.c.l.b16 %v1364
      %v1441 = vunpack.c.l.b16 %v1365
      %v1442 = vunpack.c.l.b16 %v1366
      %v1443 = vunpack.c.l.b16 %v1367
      %v1444 = vunpack.c.l.b16 %v1368
      %v1445 = vunpack.c.l.b16 %v1369
      %v1446 = vunpack.c.l.b16 %v1370
      %v1447 = vunpack.c.l.b16 %v1371
      %v1448 = vunpack.c.l.b16 %v1372
      %v1449 = vunpack.c.l.b16 %v1373
      %v1450 = vunpack.c.l.b16 %v1374
      %v1451 = vunpack.c.l.b16 %v1375
      %v1452 = vunpack.c.l.b16 %v1376
      %v1453 = vunpack.c.l.b16 %v1377
      %v1454 = vunpack.c.l.b16 %v1378
      %v1455 = vunpack.c.l.b16 %v1379
      %v1456 = vunpack.c.l.b16 %v1380
      %v1457 = vunpack.c.l.b16 %v1381
      %v1458 = vunpack.c.l.b16 %v1382
      %v1459 = vunpack.c.l.b16 %v1383
      %v1460 = vunpack.c.l.b16 %v1384
      %v1461 = vunpack.c.l.b16 %v1385
      %v1462 = vunpack.c.l.b16 %v1386
      %v1463 = vunpack.c.l.b16 %v1387
      %v1464 = vunpack.c.l.b16 %v1388
      %v1465 = vunpack.c.l.b16 %v1389
      %v1466 = vunpack.c.l.b16 %v1390
      %v1467 = vunpack.c.l.b16 %v1391
      %v1468 = vunpack.c.l.b16 %v1392
      %v1469 = vpack.c.b16 %v1433, %v1432
      %v1470 = vpack.c.b16 %v1435, %v1434
      %v1471 = vpack.c.b16 %v1437, %v1436
      %v1472 = vpack.c.b16 %v1439, %v1438
      %v1473 = vpack.c.b16 %v1441, %v1440
      %v1474 = vpack.c.b16 %v1443, %v1442
      %v1475 = vpack.c.b16 %v1445, %v1444
      %v1476 = vpack.c.b16 %v1447, %v1446
      %v1477 = vpack.c.b16 %v1449, %v1448
      %v1478 = vpack.c.b16 %v1451, %v1450
      %v1479 = vpack.c.b16 %v1453, %v1452
      %v1480 = vpack.c.b16 %v1455, %v1454
      %v1481 = vpack.c.b16 %v1457, %v1456
      %v1482 = vpack.c.b16 %v1459, %v1458
      %v1483 = vpack.c.b16 %v1461, %v1460
      %v1484 = vpack.c.b16 %v1463, %v1462
      %v1485 = vpack.c.b16 %v1465, %v1464
      %v1486 = vpack.c.b16 %v1467, %v1466
      %v1487 = vpack.c.b16 %v1468, %v1468
      %v1489 = vunpack.c.l.b16 %v1393
      %v1490 = vpack.c.b16 %v1489, %v1489
      %v1492 = vshrl.u32 %v1469, 16
      %v1494 = vshll.u32 %v1469, 16
      %v1496 = vrot.slane %v1494, 1
      %v1497 = vor.u32 %v1492, %v1496
      %v1499 = vshll.u32 %v1470, 16
      %v1501 = vrot.slane %v1499, 1
      %v1502 = vsel %vm411, %v1497, %v1501
      %v1503 = vshrl.u32 %v1470, 16
      %v1505 = vor.u32 %v1503, %v1501
      %v1507 = vshll.u32 %v1471, 16
      %v1509 = vrot.slane %v1507, 1
      %v1510 = vsel %vm411, %v1505, %v1509
      %v1511 = vshrl.u32 %v1471, 16
      %v1513 = vor.u32 %v1511, %v1509
      %v1515 = vshll.u32 %v1472, 16
      %v1517 = vrot.slane %v1515, 1
      %v1518 = vsel %vm411, %v1513, %v1517
      %v1519 = vshrl.u32 %v1472, 16
      %v1521 = vor.u32 %v1519, %v1517
      %v1523 = vshll.u32 %v1473, 16
      %v1525 = vrot.slane %v1523, 1
      %v1526 = vsel %vm411, %v1521, %v1525
      %v1527 = vshrl.u32 %v1473, 16
      %v1529 = vor.u32 %v1527, %v1525
      %v1531 = vshll.u32 %v1474, 16
      %v1533 = vrot.slane %v1531, 1
      %v1534 = vsel %vm411, %v1529, %v1533
      %v1535 = vshrl.u32 %v1474, 16
      %v1537 = vor.u32 %v1535, %v1533
      %v1539 = vshll.u32 %v1475, 16
      %v1541 = vrot.slane %v1539, 1
      %v1542 = vsel %vm411, %v1537, %v1541
      %v1543 = vshrl.u32 %v1475, 16
      %v1545 = vor.u32 %v1543, %v1541
      %v1547 = vshll.u32 %v1476, 16
      %v1549 = vrot.slane %v1547, 1
      %v1550 = vsel %vm411, %v1545, %v1549
      %v1551 = vshrl.u32 %v1476, 16
      %v1553 = vor.u32 %v1551, %v1549
      %v1555 = vshll.u32 %v1477, 16
      %v1557 = vrot.slane %v1555, 1
      %v1558 = vsel %vm411, %v1553, %v1557
      %v1559 = vshrl.u32 %v1477, 16
      %v1561 = vor.u32 %v1559, %v1557
      %v1563 = vshll.u32 %v1478, 16
      %v1565 = vrot.slane %v1563, 1
      %v1566 = vsel %vm411, %v1561, %v1565
      %v1567 = vshrl.u32 %v1478, 16
      %v1569 = vor.u32 %v1567, %v1565
      %v1571 = vshll.u32 %v1479, 16
      %v1573 = vrot.slane %v1571, 1
      %v1574 = vsel %vm411, %v1569, %v1573
      %v1575 = vshrl.u32 %v1479, 16
      %v1577 = vor.u32 %v1575, %v1573
      %v1579 = vshll.u32 %v1480, 16
      %v1581 = vrot.slane %v1579, 1
      %v1582 = vsel %vm411, %v1577, %v1581
      %v1583 = vshrl.u32 %v1480, 16
      %v1585 = vor.u32 %v1583, %v1581
      %v1587 = vshll.u32 %v1481, 16
      %v1589 = vrot.slane %v1587, 1
      %v1590 = vsel %vm411, %v1585, %v1589
      %v1591 = vshrl.u32 %v1481, 16
      %v1593 = vor.u32 %v1591, %v1589
      %v1595 = vshll.u32 %v1482, 16
      %v1597 = vrot.slane %v1595, 1
      %v1598 = vsel %vm411, %v1593, %v1597
      %v1599 = vshrl.u32 %v1482, 16
      %v1601 = vor.u32 %v1599, %v1597
      %v1603 = vshll.u32 %v1483, 16
      %v1605 = vrot.slane %v1603, 1
      %v1606 = vsel %vm411, %v1601, %v1605
      %v1607 = vshrl.u32 %v1483, 16
      %v1609 = vor.u32 %v1607, %v1605
      %v1611 = vshll.u32 %v1484, 16
      %v1613 = vrot.slane %v1611, 1
      %v1614 = vsel %vm411, %v1609, %v1613
      %v1615 = vshrl.u32 %v1484, 16
      %v1617 = vor.u32 %v1615, %v1613
      %v1619 = vshll.u32 %v1485, 16
      %v1621 = vrot.slane %v1619, 1
      %v1622 = vsel %vm411, %v1617, %v1621
      %v1623 = vshrl.u32 %v1485, 16
      %v1625 = vor.u32 %v1623, %v1621
      %v1627 = vshll.u32 %v1486, 16
      %v1629 = vrot.slane %v1627, 1
      %v1630 = vsel %vm411, %v1625, %v1629
      %v1631 = vshrl.u32 %v1486, 16
      %v1633 = vor.u32 %v1631, %v1629
      %v1635 = vshll.u32 %v1490, 16
      %v1637 = vrot.slane %v1635, 1
      %v1638 = vsel %vm411, %v1633, %v1637
      %v1639 = vshrl.u32 %v1490, 16
      %v1641 = vor.u32 %v1639, %v1637
      %1642 = vrot.lane.b32.xlu0 %v1502, 4
      %v1643 = vpop.permute.xlu0 %1642
      %1644 = vrot.lane.b32.xlu0 %v1510, 4
      %v1645 = vpop.permute.xlu0 %1644
      %1646 = vrot.lane.b32.xlu0 %v1518, 4
      %v1647 = vpop.permute.xlu0 %1646
      %1648 = vrot.lane.b32.xlu0 %v1526, 4
      %v1649 = vpop.permute.xlu0 %1648
      %1650 = vrot.lane.b32.xlu0 %v1534, 4
      %v1651 = vpop.permute.xlu0 %1650
      %1652 = vrot.lane.b32.xlu0 %v1542, 4
      %v1653 = vpop.permute.xlu0 %1652
      %1654 = vrot.lane.b32.xlu0 %v1550, 4
      %v1655 = vpop.permute.xlu0 %1654
      %1656 = vrot.lane.b32.xlu0 %v1558, 4
      %v1657 = vpop.permute.xlu0 %1656
      %1658 = vrot.lane.b32.xlu0 %v1566, 4
      %v1659 = vpop.permute.xlu0 %1658
      %1660 = vrot.lane.b32.xlu0 %v1574, 4
      %v1661 = vpop.permute.xlu0 %1660
      %1662 = vrot.lane.b32.xlu0 %v1582, 4
      %v1663 = vpop.permute.xlu0 %1662
      %1664 = vrot.lane.b32.xlu0 %v1590, 4
      %v1665 = vpop.permute.xlu0 %1664
      %1666 = vrot.lane.b32.xlu0 %v1598, 4
      %v1667 = vpop.permute.xlu0 %1666
      %1668 = vrot.lane.b32.xlu0 %v1606, 4
      %v1669 = vpop.permute.xlu0 %1668
      %1670 = vrot.lane.b32.xlu0 %v1614, 4
      %v1671 = vpop.permute.xlu0 %1670
      %1672 = vrot.lane.b32.xlu0 %v1622, 4
      %v1673 = vpop.permute.xlu0 %1672
      %1674 = vrot.lane.b32.xlu0 %v1630, 4
      %v1675 = vpop.permute.xlu0 %1674
      %1676 = vrot.lane.b32.xlu0 %v1638, 4
      %v1677 = vpop.permute.xlu0 %1676
      %1678 = vrot.lane.b32.xlu0 %v1641, 4
      %v1679 = vpop.permute.xlu0 %1678
      %v1681 = vunpack.c.l.b16 %v1394
      %v1682 = vpack.c.b16 %v1433, %v1681
      %v1683 = vrot.slane %v1682, 1
      %v1684 = vrot.slane %v1470, 1
      %v1685 = vsel %vm599, %v1683, %v1684
      %v1686 = vrot.slane %v1471, 1
      %v1687 = vsel %vm599, %v1684, %v1686
      %v1688 = vrot.slane %v1472, 1
      %v1689 = vsel %vm599, %v1686, %v1688
      %v1690 = vrot.slane %v1473, 1
      %v1691 = vsel %vm599, %v1688, %v1690
      %v1692 = vrot.slane %v1474, 1
      %v1693 = vsel %vm599, %v1690, %v1692
      %v1694 = vrot.slane %v1475, 1
      %v1695 = vsel %vm599, %v1692, %v1694
      %v1696 = vrot.slane %v1476, 1
      %v1697 = vsel %vm599, %v1694, %v1696
      %v1698 = vrot.slane %v1477, 1
      %v1699 = vsel %vm599, %v1696, %v1698
      %v1700 = vrot.slane %v1478, 1
      %v1701 = vsel %vm599, %v1698, %v1700
      %v1702 = vrot.slane %v1479, 1
      %v1703 = vsel %vm599, %v1700, %v1702
      %v1704 = vrot.slane %v1480, 1
      %v1705 = vsel %vm599, %v1702, %v1704
      %v1706 = vrot.slane %v1481, 1
      %v1707 = vsel %vm599, %v1704, %v1706
      %v1708 = vrot.slane %v1482, 1
      %v1709 = vsel %vm599, %v1706, %v1708
      %v1710 = vrot.slane %v1483, 1
      %v1711 = vsel %vm599, %v1708, %v1710
      %v1712 = vrot.slane %v1484, 1
      %v1713 = vsel %vm599, %v1710, %v1712
      %v1714 = vrot.slane %v1485, 1
      %v1715 = vsel %vm599, %v1712, %v1714
      %v1716 = vrot.slane %v1486, 1
      %v1717 = vsel %vm599, %v1714, %v1716
      %v1718 = vrot.slane %v1490, 1
      %v1719 = vsel %vm599, %v1716, %v1718
      %1720 = vrot.lane.b32.xlu0 %v1685, 8
      %v1721 = vpop.permute.xlu0 %1720
      %1722 = vrot.lane.b32.xlu0 %v1687, 8
      %v1723 = vpop.permute.xlu0 %1722
      %1724 = vrot.lane.b32.xlu0 %v1689, 8
      %v1725 = vpop.permute.xlu0 %1724
      %1726 = vrot.lane.b32.xlu0 %v1691, 8
      %v1727 = vpop.permute.xlu0 %1726
      %1728 = vrot.lane.b32.xlu0 %v1693, 8
      %v1729 = vpop.permute.xlu0 %1728
      %1730 = vrot.lane.b32.xlu0 %v1695, 8
      %v1731 = vpop.permute.xlu0 %1730
      %1732 = vrot.lane.b32.xlu0 %v1697, 8
      %v1733 = vpop.permute.xlu0 %1732
      %1734 = vrot.lane.b32.xlu0 %v1699, 8
      %v1735 = vpop.permute.xlu0 %1734
      %1736 = vrot.lane.b32.xlu0 %v1701, 8
      %v1737 = vpop.permute.xlu0 %1736
      %1738 = vrot.lane.b32.xlu0 %v1703, 8
      %v1739 = vpop.permute.xlu0 %1738
      %1740 = vrot.lane.b32.xlu0 %v1705, 8
      %v1741 = vpop.permute.xlu0 %1740
      %1742 = vrot.lane.b32.xlu0 %v1707, 8
      %v1743 = vpop.permute.xlu0 %1742
      %1744 = vrot.lane.b32.xlu0 %v1709, 8
      %v1745 = vpop.permute.xlu0 %1744
      %1746 = vrot.lane.b32.xlu0 %v1711, 8
      %v1747 = vpop.permute.xlu0 %1746
      %1748 = vrot.lane.b32.xlu0 %v1713, 8
      %v1749 = vpop.permute.xlu0 %1748
      %1750 = vrot.lane.b32.xlu0 %v1715, 8
      %v1751 = vpop.permute.xlu0 %1750
      %1752 = vrot.lane.b32.xlu0 %v1717, 8
      %v1753 = vpop.permute.xlu0 %1752
      %1754 = vrot.lane.b32.xlu0 %v1719, 8
      %v1755 = vpop.permute.xlu0 %1754
      %1756 = vrot.lane.b32.xlu0 %v1718, 8
      %v1757 = vpop.permute.xlu0 %1756
      %v1759 = vsel %vm673, %v1469, %v1643
      %v1761 = vsel %vm673, %v1470, %v1645
      %v1763 = vsel %vm673, %v1471, %v1647
      %v1765 = vsel %vm673, %v1472, %v1649
      %v1767 = vsel %vm673, %v1473, %v1651
      %v1769 = vsel %vm673, %v1474, %v1653
      %v1771 = vsel %vm673, %v1475, %v1655
      %v1773 = vsel %vm673, %v1476, %v1657
      %v1775 = vsel %vm673, %v1477, %v1659
      %v1777 = vsel %vm673, %v1478, %v1661
      %v1779 = vsel %vm673, %v1479, %v1663
      %v1781 = vsel %vm673, %v1480, %v1665
      %v1783 = vsel %vm673, %v1481, %v1667
      %v1785 = vsel %vm673, %v1482, %v1669
      %v1787 = vsel %vm673, %v1483, %v1671
      %v1789 = vsel %vm673, %v1484, %v1673
      %v1791 = vsel %vm673, %v1485, %v1675
      %v1793 = vsel %vm673, %v1486, %v1677
      %v1796 = vsel %vm673, %v1487, %v1679
      %v1798 = vsel %vm710, %v1759, %v1721
      %v1800 = vsel %vm710, %v1761, %v1723
      %v1802 = vsel %vm710, %v1763, %v1725
      %v1804 = vsel %vm710, %v1765, %v1727
      %v1806 = vsel %vm710, %v1767, %v1729
      %v1808 = vsel %vm710, %v1769, %v1731
      %v1810 = vsel %vm710, %v1771, %v1733
      %v1812 = vsel %vm710, %v1773, %v1735
      %v1814 = vsel %vm710, %v1775, %v1737
      %v1816 = vsel %vm710, %v1777, %v1739
      %v1818 = vsel %vm710, %v1779, %v1741
      %v1820 = vsel %vm710, %v1781, %v1743
      %v1822 = vsel %vm710, %v1783, %v1745
      %v1824 = vsel %vm710, %v1785, %v1747
      %v1826 = vsel %vm710, %v1787, %v1749
      %v1828 = vsel %vm710, %v1789, %v1751
      %v1830 = vsel %vm710, %v1791, %v1753
      %v1832 = vsel %vm710, %v1793, %v1755
      %v1834 = vsel %vm710, %v1796, %v1757
      %s1835 = scalar_lea.vmem %s1, 16
      %v1836 = vld [vmem:[%s1835] sm:$0xf]
      %v1837 = vld [vmem:[%s1835 + $0x4] sm:$0x3]
      %vm1857 = vcmask 1045504
      %v1858 = vrot.slane %v1798, 2
      %v1859 = vrot.slane %v1800, 2
      %v1860 = vsel %vm1857, %v1858, %v1859
      %v1861 = vrot.slane %v1802, 2
      %v1862 = vsel %vm1857, %v1859, %v1861
      %v1863 = vrot.slane %v1804, 2
      %v1864 = vsel %vm1857, %v1861, %v1863
      %v1865 = vrot.slane %v1806, 2
      %v1866 = vsel %vm1857, %v1863, %v1865
      %v1867 = vrot.slane %v1808, 2
      %v1868 = vsel %vm1857, %v1865, %v1867
      %v1869 = vrot.slane %v1810, 2
      %v1870 = vsel %vm1857, %v1867, %v1869
      %v1871 = vrot.slane %v1812, 2
      %v1872 = vsel %vm1857, %v1869, %v1871
      %v1873 = vrot.slane %v1814, 2
      %v1874 = vsel %vm1857, %v1871, %v1873
      %v1875 = vrot.slane %v1816, 2
      %v1876 = vsel %vm1857, %v1873, %v1875
      %v1877 = vrot.slane %v1818, 2
      %v1878 = vsel %vm1857, %v1875, %v1877
      %v1879 = vrot.slane %v1820, 2
      %v1880 = vsel %vm1857, %v1877, %v1879
      %v1881 = vrot.slane %v1822, 2
      %v1882 = vsel %vm1857, %v1879, %v1881
      %v1883 = vrot.slane %v1824, 2
      %v1884 = vsel %vm1857, %v1881, %v1883
      %v1885 = vrot.slane %v1826, 2
      %v1886 = vsel %vm1857, %v1883, %v1885
      %v1887 = vrot.slane %v1828, 2
      %v1888 = vsel %vm1857, %v1885, %v1887
      %v1889 = vrot.slane %v1830, 2
      %v1890 = vsel %vm1857, %v1887, %v1889
      %v1891 = vrot.slane %v1832, 2
      %v1892 = vsel %vm1857, %v1889, %v1891
      %v1893 = vrot.slane %v1834, 2
      %v1894 = vsel %vm1857, %v1891, %v1893
      %v1897 = vunpack.c.l.b16 %v1836
      %v1898 = vunpack.c.l.b16 %v1837
      %v1899 = vpack.c.b16 %v1898, %v1897
      %v1901 = vsel %vm899, %v1860, 0
      %v1904 = vsel %vm899, %v1862, 0
      %v1907 = vsel %vm899, %v1864, 0
      %v1910 = vsel %vm899, %v1866, 0
      %v1913 = vsel %vm899, %v1868, 0
      %v1916 = vsel %vm899, %v1870, 0
      %v1919 = vsel %vm899, %v1872, 0
      %v1922 = vsel %vm899, %v1874, 0
      %v1925 = vsel %vm899, %v1876, 0
      %v1928 = vsel %vm899, %v1878, 0
      %v1931 = vsel %vm899, %v1880, 0
      %v1934 = vsel %vm899, %v1882, 0
      %v1937 = vsel %vm899, %v1884, 0
      %v1940 = vsel %vm899, %v1886, 0
      %v1943 = vsel %vm899, %v1888, 0
      %v1946 = vsel %vm899, %v1890, 0
      %v1949 = vsel %vm899, %v1892, 0
      %v1952 = vsel %vm899, %v1894, 0
      %v1955 = vsel %vm954, %v1899, 0
      %1957 = vmatprep.subr.bf16.mxu0 0
      %1958 = vmatpush1.bf16.msra.mxu0 0
      %1959 = vmatprep.subr.bf16.mxu0 0
      %1960 = vmatpush1.bf16.msra.mxu0 0
      %1961 = vmatprep.subr.bf16.mxu0 0
      %1962 = vmatpush1.bf16.msra.mxu0 0
      %1963 = vmatprep.subr.bf16.mxu0 0
      %1964 = vmatpush1.bf16.msra.mxu0 0
      %1965 = vmatprep.subr.bf16.mxu0 0
      %1966 = vmatpush1.bf16.msra.mxu0 0
      %1967 = vmatprep.subr.bf16.mxu0 0
      %1968 = vmatpush1.bf16.msra.mxu0 0
      %1969 = vmatprep.subr.bf16.mxu0 0
      %1970 = vmatpush1.bf16.msra.mxu0 0
      %1971 = vmatprep.subr.bf16.mxu0 0
      %1972 = vmatpush1.bf16.msra.mxu0 %v1955
      %1973 = vmatprep.subr.bf16.mxu0 0
      %1974 = vmatpush2.bf16.msra.mxu0 0
      %1975 = vmatprep.subr.bf16.mxu0 0
      %1976 = vmatpush2.bf16.msra.mxu0 0
      %1977 = vmatprep.subr.bf16.mxu0 0
      %1978 = vmatpush2.bf16.msra.mxu0 0
      %1979 = vmatprep.subr.bf16.mxu0 0
      %1980 = vmatpush2.bf16.msra.mxu0 0
      %1981 = vmatprep.subr.bf16.mxu0 0
      %1982 = vmatpush2.bf16.msra.mxu0 0
      %1983 = vmatprep.subr.bf16.mxu0 0
      %1984 = vmatpush2.bf16.msra.mxu0 0
      %1985 = vmatprep.subr.bf16.mxu0 0
      %1986 = vmatpush2.bf16.msra.mxu0 0
      %1987 = vmatprep.subr.bf16.mxu0 0
      %1988 = vmatpush2.bf16.msra.mxu0 0
      %1989 = vmatprep.mubr.bf16.mxu0 0
      %1990 = vmatmul.mubr.bf16.gmra.mxu0 %v1901
      %v1991 = vpop.f32.mrf.mxu0
      %v1992 = vadd.f32 0.0, %v1991
      %v1993 = vpop.f32.mrf.mxu0
      %v1994 = vpop.f32.mrf.mxu0
      %v1995 = vadd.f32 0.0, %v1994
      %v1996 = vpop.f32.mrf.mxu0
      %1997 = vmatprep.mubr.bf16.mxu0 0
      %1998 = vmatmul.mubr.bf16.gmra.mxu0 %v1904
      %v1999 = vpop.f32.mrf.mxu0
      %v2000 = vadd.f32 0.0, %v1999
      %v2001 = vpop.f32.mrf.mxu0
      %v2002 = vpop.f32.mrf.mxu0
      %v2003 = vadd.f32 0.0, %v2002
      %v2004 = vpop.f32.mrf.mxu0
      %2005 = vmatprep.mubr.bf16.mxu0 0
      %2006 = vmatmul.mubr.bf16.gmra.mxu0 %v1907
      %v2007 = vpop.f32.mrf.mxu0
      %v2008 = vadd.f32 0.0, %v2007
      %v2009 = vpop.f32.mrf.mxu0
      %v2010 = vpop.f32.mrf.mxu0
      %v2011 = vadd.f32 0.0, %v2010
      %v2012 = vpop.f32.mrf.mxu0
      %2013 = vmatprep.mubr.bf16.mxu0 0
      %2014 = vmatmul.mubr.bf16.gmra.mxu0 %v1910
      %v2015 = vpop.f32.mrf.mxu0
      %v2016 = vadd.f32 0.0, %v2015
      %v2017 = vpop.f32.mrf.mxu0
      %v2018 = vpop.f32.mrf.mxu0
      %v2019 = vadd.f32 0.0, %v2018
      %v2020 = vpop.f32.mrf.mxu0
      %2021 = vmatprep.mubr.bf16.mxu0 0
      %2022 = vmatmul.mubr.bf16.gmra.mxu0 %v1913
      %v2023 = vpop.f32.mrf.mxu0
      %v2024 = vadd.f32 0.0, %v2023
      %v2025 = vpop.f32.mrf.mxu0
      %v2026 = vpop.f32.mrf.mxu0
      %v2027 = vadd.f32 0.0, %v2026
      %v2028 = vpop.f32.mrf.mxu0
      %2029 = vmatprep.mubr.bf16.mxu0 0
      %2030 = vmatmul.mubr.bf16.gmra.mxu0 %v1916
      %v2031 = vpop.f32.mrf.mxu0
      %v2032 = vadd.f32 0.0, %v2031
      %v2033 = vpop.f32.mrf.mxu0
      %v2034 = vpop.f32.mrf.mxu0
      %v2035 = vadd.f32 0.0, %v2034
      %v2036 = vpop.f32.mrf.mxu0
      %2037 = vmatprep.mubr.bf16.mxu0 0
      %2038 = vmatmul.mubr.bf16.gmra.mxu0 %v1919
      %v2039 = vpop.f32.mrf.mxu0
      %v2040 = vadd.f32 0.0, %v2039
      %v2041 = vpop.f32.mrf.mxu0
      %v2042 = vpop.f32.mrf.mxu0
      %v2043 = vadd.f32 0.0, %v2042
      %v2044 = vpop.f32.mrf.mxu0
      %2045 = vmatprep.mubr.bf16.mxu0 0
      %2046 = vmatmul.mubr.bf16.gmra.mxu0 %v1922
      %v2047 = vpop.f32.mrf.mxu0
      %v2048 = vadd.f32 0.0, %v2047
      %v2049 = vpop.f32.mrf.mxu0
      %v2050 = vpop.f32.mrf.mxu0
      %v2051 = vadd.f32 0.0, %v2050
      %v2052 = vpop.f32.mrf.mxu0
      %2053 = vmatprep.mubr.bf16.mxu0 0
      %2054 = vmatmul.mubr.bf16.gmra.mxu0 %v1925
      %v2055 = vpop.f32.mrf.mxu0
      %v2056 = vadd.f32 0.0, %v2055
      %v2057 = vpop.f32.mrf.mxu0
      %v2058 = vpop.f32.mrf.mxu0
      %v2059 = vadd.f32 0.0, %v2058
      %v2060 = vpop.f32.mrf.mxu0
      %2061 = vmatprep.mubr.bf16.mxu0 0
      %2062 = vmatmul.mubr.bf16.gmra.mxu0 %v1928
      %v2063 = vpop.f32.mrf.mxu0
      %v2064 = vadd.f32 0.0, %v2063
      %v2065 = vpop.f32.mrf.mxu0
      %v2066 = vpop.f32.mrf.mxu0
      %v2067 = vadd.f32 0.0, %v2066
      %v2068 = vpop.f32.mrf.mxu0
      %2069 = vmatprep.mubr.bf16.mxu0 0
      %2070 = vmatmul.mubr.bf16.gmra.mxu0 %v1931
      %v2071 = vpop.f32.mrf.mxu0
      %v2072 = vadd.f32 0.0, %v2071
      %v2073 = vpop.f32.mrf.mxu0
      %v2074 = vpop.f32.mrf.mxu0
      %v2075 = vadd.f32 0.0, %v2074
      %v2076 = vpop.f32.mrf.mxu0
      %2077 = vmatprep.mubr.bf16.mxu0 0
      %2078 = vmatmul.mubr.bf16.gmra.mxu0 %v1934
      %v2079 = vpop.f32.mrf.mxu0
      %v2080 = vadd.f32 0.0, %v2079
      %v2081 = vpop.f32.mrf.mxu0
      %v2082 = vpop.f32.mrf.mxu0
      %v2083 = vadd.f32 0.0, %v2082
      %v2084 = vpop.f32.mrf.mxu0
      %2085 = vmatprep.mubr.bf16.mxu0 0
      %2086 = vmatmul.mubr.bf16.gmra.mxu0 %v1937
      %v2087 = vpop.f32.mrf.mxu0
      %v2088 = vadd.f32 0.0, %v2087
      %v2089 = vpop.f32.mrf.mxu0
      %v2090 = vpop.f32.mrf.mxu0
      %v2091 = vadd.f32 0.0, %v2090
      %v2092 = vpop.f32.mrf.mxu0
      %2093 = vmatprep.mubr.bf16.mxu0 0
      %2094 = vmatmul.mubr.bf16.gmra.mxu0 %v1940
      %v2095 = vpop.f32.mrf.mxu0
      %v2096 = vadd.f32 0.0, %v2095
      %v2097 = vpop.f32.mrf.mxu0
      %v2098 = vpop.f32.mrf.mxu0
      %v2099 = vadd.f32 0.0, %v2098
      %v2100 = vpop.f32.mrf.mxu0
      %2101 = vmatprep.mubr.bf16.mxu0 0
      %2102 = vmatmul.mubr.bf16.gmra.mxu0 %v1943
      %v2103 = vpop.f32.mrf.mxu0
      %v2104 = vadd.f32 0.0, %v2103
      %v2105 = vpop.f32.mrf.mxu0
      %v2106 = vpop.f32.mrf.mxu0
      %v2107 = vadd.f32 0.0, %v2106
      %v2108 = vpop.f32.mrf.mxu0
      %2109 = vmatprep.mubr.bf16.mxu0 0
      %2110 = vmatmul.mubr.bf16.gmra.mxu0 %v1946
      %v2111 = vpop.f32.mrf.mxu0
      %v2112 = vadd.f32 0.0, %v2111
      %v2113 = vpop.f32.mrf.mxu0
      %v2114 = vpop.f32.mrf.mxu0
      %v2115 = vadd.f32 0.0, %v2114
      %v2116 = vpop.f32.mrf.mxu0
      %2117 = vmatprep.mubr.bf16.mxu0 0
      %2118 = vmatmul.mubr.bf16.gmra.mxu0 %v1949
      %v2119 = vpop.f32.mrf.mxu0
      %v2120 = vadd.f32 0.0, %v2119
      %v2121 = vpop.f32.mrf.mxu0
      %v2122 = vpop.f32.mrf.mxu0
      %v2123 = vadd.f32 0.0, %v2122
      %v2124 = vpop.f32.mrf.mxu0
      %2125 = vmatprep.mubr.bf16.mxu0 0
      %2126 = vmatmul.mubr.bf16.gmra.mxu0 %v1952
      %v2127 = vpop.f32.mrf.mxu0
      %v2128 = vadd.f32 0.0, %v2127
      %v2129 = vpop.f32.mrf.mxu0
      %v2130 = vpop.f32.mrf.mxu0
      %v2131 = vadd.f32 0.0, %v2130
      %v2132 = vpop.f32.mrf.mxu0
      %2133 = vdwg.mxu0
      %v2134 = vadd.f32 %v1214, %v1992
      %v2135 = vadd.f32 %v1217, %v1995
      %v2136 = vadd.f32 %v1222, %v2000
      %v2137 = vadd.f32 %v1225, %v2003
      %v2138 = vadd.f32 %v1230, %v2008
      %v2139 = vadd.f32 %v1233, %v2011
      %v2140 = vadd.f32 %v1238, %v2016
      %v2141 = vadd.f32 %v1241, %v2019
      %v2142 = vadd.f32 %v1246, %v2024
      %v2143 = vadd.f32 %v1249, %v2027
      %v2144 = vadd.f32 %v1254, %v2032
      %v2145 = vadd.f32 %v1257, %v2035
      %v2146 = vadd.f32 %v1262, %v2040
      %v2147 = vadd.f32 %v1265, %v2043
      %v2148 = vadd.f32 %v1270, %v2048
      %v2149 = vadd.f32 %v1273, %v2051
      %v2150 = vadd.f32 %v1278, %v2056
      %v2151 = vadd.f32 %v1281, %v2059
      %v2152 = vadd.f32 %v1286, %v2064
      %v2153 = vadd.f32 %v1289, %v2067
      %v2154 = vadd.f32 %v1294, %v2072
      %v2155 = vadd.f32 %v1297, %v2075
      %v2156 = vadd.f32 %v1302, %v2080
      %v2157 = vadd.f32 %v1305, %v2083
      %v2158 = vadd.f32 %v1310, %v2088
      %v2159 = vadd.f32 %v1313, %v2091
      %v2160 = vadd.f32 %v1318, %v2096
      %v2161 = vadd.f32 %v1321, %v2099
      %v2162 = vadd.f32 %v1326, %v2104
      %v2163 = vadd.f32 %v1329, %v2107
      %v2164 = vadd.f32 %v1334, %v2112
      %v2165 = vadd.f32 %v1337, %v2115
      %v2166 = vadd.f32 %v1342, %v2120
      %v2167 = vadd.f32 %v1345, %v2123
      %v2168 = vadd.f32 %v1350, %v2128
      %v2169 = vadd.f32 %v1353, %v2131
      %v2170 = vlaneseq
      %v2171 = vshrl.u32 %v2170, 7
      %v2172 = vadd.s32 %v2171, 8
      %v2173 = vadd.s32 %v2171, 16
      %v2174 = vadd.s32 %v2171, 24
      %v2175 = vadd.s32 %v2171, 32
      %v2176 = vadd.s32 %v2171, 40
      %v2177 = vadd.s32 %v2171, 48
      %v2178 = vadd.s32 %v2171, 56
      %v2179 = vadd.s32 %v2171, 64
      %v2180 = vadd.s32 %v2171, 72
      %v2181 = vadd.s32 %v2171, 80
      %v2182 = vadd.s32 %v2171, 88
      %v2183 = vadd.s32 %v2171, 96
      %v2184 = vadd.s32 %v2171, 104
      %v2185 = vadd.s32 %v2171, 112
      %v2186 = vadd.s32 %v2171, 120
      %v2187 = vadd.s32 %v2171, 128
      %v2188 = vadd.s32 %v2171, 136
      %v2189 = vadd.s32 %v2171, 144
      %v2190 = vadd.s32 %v2171, 152
      %v2191 = vadd.s32 %v2171, 160
      %v2192 = vadd.s32 %v2171, 168
      %v2193 = vadd.s32 %v2171, 176
      %v2194 = vadd.s32 %v2171, 184
      %v2195 = vadd.s32 %v2171, 192
      %v2196 = vadd.s32 %v2171, 200
      %v2197 = vadd.s32 %v2171, 208
      %v2198 = vadd.s32 %v2171, 216
      %v2199 = vadd.s32 %v2171, 224
      %v2200 = vadd.s32 %v2171, 232
      %v2201 = vadd.s32 %v2171, 240
      %v2202 = vadd.s32 %v2171, 248
      %v2203 = vadd.s32 %v2171, 256
      %v2204 = vadd.s32 %v2171, 264
      %v2205 = vadd.s32 %v2171, 272
      %v2206 = vadd.s32 %v2171, 280
      %vm2207 = vcmp.lt.s32.totalorder %v2171, 0
      %v2208 = vsub.s32 0, %v2171
      %v2209 = vsel %vm2207, %v2208, %v2171
      %v2210 = vmul.u32.u64.compose %v2209, 3817748708
      %v2211 = vextract.low.u32 %v2210
      %v2212 = vextract.high.u32 %v2210
      %v2213 = vshrl.u32 %v2212, 4
      %v2214 = vmul.u32 %v2213, 18
      %v2215 = vsub.s32 %v2209, %v2214
      %v2216 = vsub.s32 0, %v2215
      %v2217 = vsel %vm2207, %v2216, %v2215
      %vm2218 = vcmp.lt.s32.totalorder %v2172, 0
      %v2219 = vsub.s32 0, %v2172
      %v2220 = vsel %vm2218, %v2219, %v2172
      %v2221 = vmul.u32.u64.compose %v2220, 3817748708
      %v2222 = vextract.low.u32 %v2221
      %v2223 = vextract.high.u32 %v2221
      %v2224 = vshrl.u32 %v2223, 4
      %v2225 = vmul.u32 %v2224, 18
      %v2226 = vsub.s32 %v2220, %v2225
      %v2227 = vsub.s32 0, %v2226
      %v2228 = vsel %vm2218, %v2227, %v2226
      %vm2229 = vcmp.lt.s32.totalorder %v2173, 0
      %v2230 = vsub.s32 0, %v2173
      %v2231 = vsel %vm2229, %v2230, %v2173
      %v2232 = vmul.u32.u64.compose %v2231, 3817748708
      %v2233 = vextract.low.u32 %v2232
      %v2234 = vextract.high.u32 %v2232
      %v2235 = vshrl.u32 %v2234, 4
      %v2236 = vmul.u32 %v2235, 18
      %v2237 = vsub.s32 %v2231, %v2236
      %v2238 = vsub.s32 0, %v2237
      %v2239 = vsel %vm2229, %v2238, %v2237
      %vm2240 = vcmp.lt.s32.totalorder %v2174, 0
      %v2241 = vsub.s32 0, %v2174
      %v2242 = vsel %vm2240, %v2241, %v2174
      %v2243 = vmul.u32.u64.compose %v2242, 3817748708
      %v2244 = vextract.low.u32 %v2243
      %v2245 = vextract.high.u32 %v2243
      %v2246 = vshrl.u32 %v2245, 4
      %v2247 = vmul.u32 %v2246, 18
      %v2248 = vsub.s32 %v2242, %v2247
      %v2249 = vsub.s32 0, %v2248
      %v2250 = vsel %vm2240, %v2249, %v2248
      %vm2251 = vcmp.lt.s32.totalorder %v2175, 0
      %v2252 = vsub.s32 0, %v2175
      %v2253 = vsel %vm2251, %v2252, %v2175
      %v2254 = vmul.u32.u64.compose %v2253, 3817748708
      %v2255 = vextract.low.u32 %v2254
      %v2256 = vextract.high.u32 %v2254
      %v2257 = vshrl.u32 %v2256, 4
      %v2258 = vmul.u32 %v2257, 18
      %v2259 = vsub.s32 %v2253, %v2258
      %v2260 = vsub.s32 0, %v2259
      %v2261 = vsel %vm2251, %v2260, %v2259
      %vm2262 = vcmp.lt.s32.totalorder %v2176, 0
      %v2263 = vsub.s32 0, %v2176
      %v2264 = vsel %vm2262, %v2263, %v2176
      %v2265 = vmul.u32.u64.compose %v2264, 3817748708
      %v2266 = vextract.low.u32 %v2265
      %v2267 = vextract.high.u32 %v2265
      %v2268 = vshrl.u32 %v2267, 4
      %v2269 = vmul.u32 %v2268, 18
      %v2270 = vsub.s32 %v2264, %v2269
      %v2271 = vsub.s32 0, %v2270
      %v2272 = vsel %vm2262, %v2271, %v2270
      %vm2273 = vcmp.lt.s32.totalorder %v2177, 0
      %v2274 = vsub.s32 0, %v2177
      %v2275 = vsel %vm2273, %v2274, %v2177
      %v2276 = vmul.u32.u64.compose %v2275, 3817748708
      %v2277 = vextract.low.u32 %v2276
      %v2278 = vextract.high.u32 %v2276
      %v2279 = vshrl.u32 %v2278, 4
      %v2280 = vmul.u32 %v2279, 18
      %v2281 = vsub.s32 %v2275, %v2280
      %v2282 = vsub.s32 0, %v2281
      %v2283 = vsel %vm2273, %v2282, %v2281
      %vm2284 = vcmp.lt.s32.totalorder %v2178, 0
      %v2285 = vsub.s32 0, %v2178
      %v2286 = vsel %vm2284, %v2285, %v2178
      %v2287 = vmul.u32.u64.compose %v2286, 3817748708
      %v2288 = vextract.low.u32 %v2287
      %v2289 = vextract.high.u32 %v2287
      %v2290 = vshrl.u32 %v2289, 4
      %v2291 = vmul.u32 %v2290, 18
      %v2292 = vsub.s32 %v2286, %v2291
      %v2293 = vsub.s32 0, %v2292
      %v2294 = vsel %vm2284, %v2293, %v2292
      %vm2295 = vcmp.lt.s32.totalorder %v2179, 0
      %v2296 = vsub.s32 0, %v2179
      %v2297 = vsel %vm2295, %v2296, %v2179
      %v2298 = vmul.u32.u64.compose %v2297, 3817748708
      %v2299 = vextract.low.u32 %v2298
      %v2300 = vextract.high.u32 %v2298
      %v2301 = vshrl.u32 %v2300, 4
      %v2302 = vmul.u32 %v2301, 18
      %v2303 = vsub.s32 %v2297, %v2302
      %v2304 = vsub.s32 0, %v2303
      %v2305 = vsel %vm2295, %v2304, %v2303
      %vm2306 = vcmp.lt.s32.totalorder %v2180, 0
      %v2307 = vsub.s32 0, %v2180
      %v2308 = vsel %vm2306, %v2307, %v2180
      %v2309 = vmul.u32.u64.compose %v2308, 3817748708
      %v2310 = vextract.low.u32 %v2309
      %v2311 = vextract.high.u32 %v2309
      %v2312 = vshrl.u32 %v2311, 4
      %v2313 = vmul.u32 %v2312, 18
      %v2314 = vsub.s32 %v2308, %v2313
      %v2315 = vsub.s32 0, %v2314
      %v2316 = vsel %vm2306, %v2315, %v2314
      %vm2317 = vcmp.lt.s32.totalorder %v2181, 0
      %v2318 = vsub.s32 0, %v2181
      %v2319 = vsel %vm2317, %v2318, %v2181
      %v2320 = vmul.u32.u64.compose %v2319, 3817748708
      %v2321 = vextract.low.u32 %v2320
      %v2322 = vextract.high.u32 %v2320
      %v2323 = vshrl.u32 %v2322, 4
      %v2324 = vmul.u32 %v2323, 18
      %v2325 = vsub.s32 %v2319, %v2324
      %v2326 = vsub.s32 0, %v2325
      %v2327 = vsel %vm2317, %v2326, %v2325
      %vm2328 = vcmp.lt.s32.totalorder %v2182, 0
      %v2329 = vsub.s32 0, %v2182
      %v2330 = vsel %vm2328, %v2329, %v2182
      %v2331 = vmul.u32.u64.compose %v2330, 3817748708
      %v2332 = vextract.low.u32 %v2331
      %v2333 = vextract.high.u32 %v2331
      %v2334 = vshrl.u32 %v2333, 4
      %v2335 = vmul.u32 %v2334, 18
      %v2336 = vsub.s32 %v2330, %v2335
      %v2337 = vsub.s32 0, %v2336
      %v2338 = vsel %vm2328, %v2337, %v2336
      %vm2339 = vcmp.lt.s32.totalorder %v2183, 0
      %v2340 = vsub.s32 0, %v2183
      %v2341 = vsel %vm2339, %v2340, %v2183
      %v2342 = vmul.u32.u64.compose %v2341, 3817748708
      %v2343 = vextract.low.u32 %v2342
      %v2344 = vextract.high.u32 %v2342
      %v2345 = vshrl.u32 %v2344, 4
      %v2346 = vmul.u32 %v2345, 18
      %v2347 = vsub.s32 %v2341, %v2346
      %v2348 = vsub.s32 0, %v2347
      %v2349 = vsel %vm2339, %v2348, %v2347
      %vm2350 = vcmp.lt.s32.totalorder %v2184, 0
      %v2351 = vsub.s32 0, %v2184
      %v2352 = vsel %vm2350, %v2351, %v2184
      %v2353 = vmul.u32.u64.compose %v2352, 3817748708
      %v2354 = vextract.low.u32 %v2353
      %v2355 = vextract.high.u32 %v2353
      %v2356 = vshrl.u32 %v2355, 4
      %v2357 = vmul.u32 %v2356, 18
      %v2358 = vsub.s32 %v2352, %v2357
      %v2359 = vsub.s32 0, %v2358
      %v2360 = vsel %vm2350, %v2359, %v2358
      %vm2361 = vcmp.lt.s32.totalorder %v2185, 0
      %v2362 = vsub.s32 0, %v2185
      %v2363 = vsel %vm2361, %v2362, %v2185
      %v2364 = vmul.u32.u64.compose %v2363, 3817748708
      %v2365 = vextract.low.u32 %v2364
      %v2366 = vextract.high.u32 %v2364
      %v2367 = vshrl.u32 %v2366, 4
      %v2368 = vmul.u32 %v2367, 18
      %v2369 = vsub.s32 %v2363, %v2368
      %v2370 = vsub.s32 0, %v2369
      %v2371 = vsel %vm2361, %v2370, %v2369
      %vm2372 = vcmp.lt.s32.totalorder %v2186, 0
      %v2373 = vsub.s32 0, %v2186
      %v2374 = vsel %vm2372, %v2373, %v2186
      %v2375 = vmul.u32.u64.compose %v2374, 3817748708
      %v2376 = vextract.low.u32 %v2375
      %v2377 = vextract.high.u32 %v2375
      %v2378 = vshrl.u32 %v2377, 4
      %v2379 = vmul.u32 %v2378, 18
      %v2380 = vsub.s32 %v2374, %v2379
      %v2381 = vsub.s32 0, %v2380
      %v2382 = vsel %vm2372, %v2381, %v2380
      %vm2383 = vcmp.lt.s32.totalorder %v2187, 0
      %v2384 = vsub.s32 0, %v2187
      %v2385 = vsel %vm2383, %v2384, %v2187
      %v2386 = vmul.u32.u64.compose %v2385, 3817748708
      %v2387 = vextract.low.u32 %v2386
      %v2388 = vextract.high.u32 %v2386
      %v2389 = vshrl.u32 %v2388, 4
      %v2390 = vmul.u32 %v2389, 18
      %v2391 = vsub.s32 %v2385, %v2390
      %v2392 = vsub.s32 0, %v2391
      %v2393 = vsel %vm2383, %v2392, %v2391
      %vm2394 = vcmp.lt.s32.totalorder %v2188, 0
      %v2395 = vsub.s32 0, %v2188
      %v2396 = vsel %vm2394, %v2395, %v2188
      %v2397 = vmul.u32.u64.compose %v2396, 3817748708
      %v2398 = vextract.low.u32 %v2397
      %v2399 = vextract.high.u32 %v2397
      %v2400 = vshrl.u32 %v2399, 4
      %v2401 = vmul.u32 %v2400, 18
      %v2402 = vsub.s32 %v2396, %v2401
      %v2403 = vsub.s32 0, %v2402
      %v2404 = vsel %vm2394, %v2403, %v2402
      %vm2405 = vcmp.lt.s32.totalorder %v2189, 0
      %v2406 = vsub.s32 0, %v2189
      %v2407 = vsel %vm2405, %v2406, %v2189
      %v2408 = vmul.u32.u64.compose %v2407, 3817748708
      %v2409 = vextract.low.u32 %v2408
      %v2410 = vextract.high.u32 %v2408
      %v2411 = vshrl.u32 %v2410, 4
      %v2412 = vmul.u32 %v2411, 18
      %v2413 = vsub.s32 %v2407, %v2412
      %v2414 = vsub.s32 0, %v2413
      %v2415 = vsel %vm2405, %v2414, %v2413
      %vm2416 = vcmp.lt.s32.totalorder %v2190, 0
      %v2417 = vsub.s32 0, %v2190
      %v2418 = vsel %vm2416, %v2417, %v2190
      %v2419 = vmul.u32.u64.compose %v2418, 3817748708
      %v2420 = vextract.low.u32 %v2419
      %v2421 = vextract.high.u32 %v2419
      %v2422 = vshrl.u32 %v2421, 4
      %v2423 = vmul.u32 %v2422, 18
      %v2424 = vsub.s32 %v2418, %v2423
      %v2425 = vsub.s32 0, %v2424
      %v2426 = vsel %vm2416, %v2425, %v2424
      %vm2427 = vcmp.lt.s32.totalorder %v2191, 0
      %v2428 = vsub.s32 0, %v2191
      %v2429 = vsel %vm2427, %v2428, %v2191
      %v2430 = vmul.u32.u64.compose %v2429, 3817748708
      %v2431 = vextract.low.u32 %v2430
      %v2432 = vextract.high.u32 %v2430
      %v2433 = vshrl.u32 %v2432, 4
      %v2434 = vmul.u32 %v2433, 18
      %v2435 = vsub.s32 %v2429, %v2434
      %v2436 = vsub.s32 0, %v2435
      %v2437 = vsel %vm2427, %v2436, %v2435
      %vm2438 = vcmp.lt.s32.totalorder %v2192, 0
      %v2439 = vsub.s32 0, %v2192
      %v2440 = vsel %vm2438, %v2439, %v2192
      %v2441 = vmul.u32.u64.compose %v2440, 3817748708
      %v2442 = vextract.low.u32 %v2441
      %v2443 = vextract.high.u32 %v2441
      %v2444 = vshrl.u32 %v2443, 4
      %v2445 = vmul.u32 %v2444, 18
      %v2446 = vsub.s32 %v2440, %v2445
      %v2447 = vsub.s32 0, %v2446
      %v2448 = vsel %vm2438, %v2447, %v2446
      %vm2449 = vcmp.lt.s32.totalorder %v2193, 0
      %v2450 = vsub.s32 0, %v2193
      %v2451 = vsel %vm2449, %v2450, %v2193
      %v2452 = vmul.u32.u64.compose %v2451, 3817748708
      %v2453 = vextract.low.u32 %v2452
      %v2454 = vextract.high.u32 %v2452
      %v2455 = vshrl.u32 %v2454, 4
      %v2456 = vmul.u32 %v2455, 18
      %v2457 = vsub.s32 %v2451, %v2456
      %v2458 = vsub.s32 0, %v2457
      %v2459 = vsel %vm2449, %v2458, %v2457
      %vm2460 = vcmp.lt.s32.totalorder %v2194, 0
      %v2461 = vsub.s32 0, %v2194
      %v2462 = vsel %vm2460, %v2461, %v2194
      %v2463 = vmul.u32.u64.compose %v2462, 3817748708
      %v2464 = vextract.low.u32 %v2463
      %v2465 = vextract.high.u32 %v2463
      %v2466 = vshrl.u32 %v2465, 4
      %v2467 = vmul.u32 %v2466, 18
      %v2468 = vsub.s32 %v2462, %v2467
      %v2469 = vsub.s32 0, %v2468
      %v2470 = vsel %vm2460, %v2469, %v2468
      %vm2471 = vcmp.lt.s32.totalorder %v2195, 0
      %v2472 = vsub.s32 0, %v2195
      %v2473 = vsel %vm2471, %v2472, %v2195
      %v2474 = vmul.u32.u64.compose %v2473, 3817748708
      %v2475 = vextract.low.u32 %v2474
      %v2476 = vextract.high.u32 %v2474
      %v2477 = vshrl.u32 %v2476, 4
      %v2478 = vmul.u32 %v2477, 18
      %v2479 = vsub.s32 %v2473, %v2478
      %v2480 = vsub.s32 0, %v2479
      %v2481 = vsel %vm2471, %v2480, %v2479
      %vm2482 = vcmp.lt.s32.totalorder %v2196, 0
      %v2483 = vsub.s32 0, %v2196
      %v2484 = vsel %vm2482, %v2483, %v2196
      %v2485 = vmul.u32.u64.compose %v2484, 3817748708
      %v2486 = vextract.low.u32 %v2485
      %v2487 = vextract.high.u32 %v2485
      %v2488 = vshrl.u32 %v2487, 4
      %v2489 = vmul.u32 %v2488, 18
      %v2490 = vsub.s32 %v2484, %v2489
      %v2491 = vsub.s32 0, %v2490
      %v2492 = vsel %vm2482, %v2491, %v2490
      %vm2493 = vcmp.lt.s32.totalorder %v2197, 0
      %v2494 = vsub.s32 0, %v2197
      %v2495 = vsel %vm2493, %v2494, %v2197
      %v2496 = vmul.u32.u64.compose %v2495, 3817748708
      %v2497 = vextract.low.u32 %v2496
      %v2498 = vextract.high.u32 %v2496
      %v2499 = vshrl.u32 %v2498, 4
      %v2500 = vmul.u32 %v2499, 18
      %v2501 = vsub.s32 %v2495, %v2500
      %v2502 = vsub.s32 0, %v2501
      %v2503 = vsel %vm2493, %v2502, %v2501
      %vm2504 = vcmp.lt.s32.totalorder %v2198, 0
      %v2505 = vsub.s32 0, %v2198
      %v2506 = vsel %vm2504, %v2505, %v2198
      %v2507 = vmul.u32.u64.compose %v2506, 3817748708
      %v2508 = vextract.low.u32 %v2507
      %v2509 = vextract.high.u32 %v2507
      %v2510 = vshrl.u32 %v2509, 4
      %v2511 = vmul.u32 %v2510, 18
      %v2512 = vsub.s32 %v2506, %v2511
      %v2513 = vsub.s32 0, %v2512
      %v2514 = vsel %vm2504, %v2513, %v2512
      %vm2515 = vcmp.lt.s32.totalorder %v2199, 0
      %v2516 = vsub.s32 0, %v2199
      %v2517 = vsel %vm2515, %v2516, %v2199
      %v2518 = vmul.u32.u64.compose %v2517, 3817748708
      %v2519 = vextract.low.u32 %v2518
      %v2520 = vextract.high.u32 %v2518
      %v2521 = vshrl.u32 %v2520, 4
      %v2522 = vmul.u32 %v2521, 18
      %v2523 = vsub.s32 %v2517, %v2522
      %v2524 = vsub.s32 0, %v2523
      %v2525 = vsel %vm2515, %v2524, %v2523
      %vm2526 = vcmp.lt.s32.totalorder %v2200, 0
      %v2527 = vsub.s32 0, %v2200
      %v2528 = vsel %vm2526, %v2527, %v2200
      %v2529 = vmul.u32.u64.compose %v2528, 3817748708
      %v2530 = vextract.low.u32 %v2529
      %v2531 = vextract.high.u32 %v2529
      %v2532 = vshrl.u32 %v2531, 4
      %v2533 = vmul.u32 %v2532, 18
      %v2534 = vsub.s32 %v2528, %v2533
      %v2535 = vsub.s32 0, %v2534
      %v2536 = vsel %vm2526, %v2535, %v2534
      %vm2537 = vcmp.lt.s32.totalorder %v2201, 0
      %v2538 = vsub.s32 0, %v2201
      %v2539 = vsel %vm2537, %v2538, %v2201
      %v2540 = vmul.u32.u64.compose %v2539, 3817748708
      %v2541 = vextract.low.u32 %v2540
      %v2542 = vextract.high.u32 %v2540
      %v2543 = vshrl.u32 %v2542, 4
      %v2544 = vmul.u32 %v2543, 18
      %v2545 = vsub.s32 %v2539, %v2544
      %v2546 = vsub.s32 0, %v2545
      %v2547 = vsel %vm2537, %v2546, %v2545
      %vm2548 = vcmp.lt.s32.totalorder %v2202, 0
      %v2549 = vsub.s32 0, %v2202
      %v2550 = vsel %vm2548, %v2549, %v2202
      %v2551 = vmul.u32.u64.compose %v2550, 3817748708
      %v2552 = vextract.low.u32 %v2551
      %v2553 = vextract.high.u32 %v2551
      %v2554 = vshrl.u32 %v2553, 4
      %v2555 = vmul.u32 %v2554, 18
      %v2556 = vsub.s32 %v2550, %v2555
      %v2557 = vsub.s32 0, %v2556
      %v2558 = vsel %vm2548, %v2557, %v2556
      %vm2559 = vcmp.lt.s32.totalorder %v2203, 0
      %v2560 = vsub.s32 0, %v2203
      %v2561 = vsel %vm2559, %v2560, %v2203
      %v2562 = vmul.u32.u64.compose %v2561, 3817748708
      %v2563 = vextract.low.u32 %v2562
      %v2564 = vextract.high.u32 %v2562
      %v2565 = vshrl.u32 %v2564, 4
      %v2566 = vmul.u32 %v2565, 18
      %v2567 = vsub.s32 %v2561, %v2566
      %v2568 = vsub.s32 0, %v2567
      %v2569 = vsel %vm2559, %v2568, %v2567
      %vm2570 = vcmp.lt.s32.totalorder %v2204, 0
      %v2571 = vsub.s32 0, %v2204
      %v2572 = vsel %vm2570, %v2571, %v2204
      %v2573 = vmul.u32.u64.compose %v2572, 3817748708
      %v2574 = vextract.low.u32 %v2573
      %v2575 = vextract.high.u32 %v2573
      %v2576 = vshrl.u32 %v2575, 4
      %v2577 = vmul.u32 %v2576, 18
      %v2578 = vsub.s32 %v2572, %v2577
      %v2579 = vsub.s32 0, %v2578
      %v2580 = vsel %vm2570, %v2579, %v2578
      %vm2581 = vcmp.lt.s32.totalorder %v2205, 0
      %v2582 = vsub.s32 0, %v2205
      %v2583 = vsel %vm2581, %v2582, %v2205
      %v2584 = vmul.u32.u64.compose %v2583, 3817748708
      %v2585 = vextract.low.u32 %v2584
      %v2586 = vextract.high.u32 %v2584
      %v2587 = vshrl.u32 %v2586, 4
      %v2588 = vmul.u32 %v2587, 18
      %v2589 = vsub.s32 %v2583, %v2588
      %v2590 = vsub.s32 0, %v2589
      %v2591 = vsel %vm2581, %v2590, %v2589
      %vm2592 = vcmp.lt.s32.totalorder %v2206, 0
      %v2593 = vsub.s32 0, %v2206
      %v2594 = vsel %vm2592, %v2593, %v2206
      %v2595 = vmul.u32.u64.compose %v2594, 3817748708
      %v2596 = vextract.low.u32 %v2595
      %v2597 = vextract.high.u32 %v2595
      %v2598 = vshrl.u32 %v2597, 4
      %v2599 = vmul.u32 %v2598, 18
      %v2600 = vsub.s32 %v2594, %v2599
      %v2601 = vsub.s32 0, %v2600
      %v2602 = vsel %vm2592, %v2601, %v2600
      %vm2603 = vcmp.ne.s32.totalorder %v2217, 0
      %vm2604 = vcmp.ne.s32.totalorder %v2228, 0
      %vm2605 = vcmp.ne.s32.totalorder %v2239, 0
      %vm2606 = vcmp.ne.s32.totalorder %v2250, 0
      %vm2607 = vcmp.ne.s32.totalorder %v2261, 0
      %vm2608 = vcmp.ne.s32.totalorder %v2272, 0
      %vm2609 = vcmp.ne.s32.totalorder %v2283, 0
      %vm2610 = vcmp.ne.s32.totalorder %v2294, 0
      %vm2611 = vcmp.ne.s32.totalorder %v2305, 0
      %vm2612 = vcmp.ne.s32.totalorder %v2316, 0
      %vm2613 = vcmp.ne.s32.totalorder %v2327, 0
      %vm2614 = vcmp.ne.s32.totalorder %v2338, 0
      %vm2615 = vcmp.ne.s32.totalorder %v2349, 0
      %vm2616 = vcmp.ne.s32.totalorder %v2360, 0
      %vm2617 = vcmp.ne.s32.totalorder %v2371, 0
      %vm2618 = vcmp.ne.s32.totalorder %v2382, 0
      %vm2619 = vcmp.ne.s32.totalorder %v2393, 0
      %vm2620 = vcmp.ne.s32.totalorder %v2404, 0
      %vm2621 = vcmp.ne.s32.totalorder %v2415, 0
      %vm2622 = vcmp.ne.s32.totalorder %v2426, 0
      %vm2623 = vcmp.ne.s32.totalorder %v2437, 0
      %vm2624 = vcmp.ne.s32.totalorder %v2448, 0
      %vm2625 = vcmp.ne.s32.totalorder %v2459, 0
      %vm2626 = vcmp.ne.s32.totalorder %v2470, 0
      %vm2627 = vcmp.ne.s32.totalorder %v2481, 0
      %vm2628 = vcmp.ne.s32.totalorder %v2492, 0
      %vm2629 = vcmp.ne.s32.totalorder %v2503, 0
      %vm2630 = vcmp.ne.s32.totalorder %v2514, 0
      %vm2631 = vcmp.ne.s32.totalorder %v2525, 0
      %vm2632 = vcmp.ne.s32.totalorder %v2536, 0
      %vm2633 = vcmp.ne.s32.totalorder %v2547, 0
      %vm2634 = vcmp.ne.s32.totalorder %v2558, 0
      %vm2635 = vcmp.ne.s32.totalorder %v2569, 0
      %vm2636 = vcmp.ne.s32.totalorder %v2580, 0
      %vm2637 = vcmp.ne.s32.totalorder %v2591, 0
      %vm2638 = vcmp.ne.s32.totalorder %v2602, 0
      %vm2639 = vcmp.lt.s32.totalorder %v2217, 0
      %vm2640 = vcmp.lt.s32.totalorder %v2228, 0
      %vm2641 = vcmp.lt.s32.totalorder %v2239, 0
      %vm2642 = vcmp.lt.s32.totalorder %v2250, 0
      %vm2643 = vcmp.lt.s32.totalorder %v2261, 0
      %vm2644 = vcmp.lt.s32.totalorder %v2272, 0
      %vm2645 = vcmp.lt.s32.totalorder %v2283, 0
      %vm2646 = vcmp.lt.s32.totalorder %v2294, 0
      %vm2647 = vcmp.lt.s32.totalorder %v2305, 0
      %vm2648 = vcmp.lt.s32.totalorder %v2316, 0
      %vm2649 = vcmp.lt.s32.totalorder %v2327, 0
      %vm2650 = vcmp.lt.s32.totalorder %v2338, 0
      %vm2651 = vcmp.lt.s32.totalorder %v2349, 0
      %vm2652 = vcmp.lt.s32.totalorder %v2360, 0
      %vm2653 = vcmp.lt.s32.totalorder %v2371, 0
      %vm2654 = vcmp.lt.s32.totalorder %v2382, 0
      %vm2655 = vcmp.lt.s32.totalorder %v2393, 0
      %vm2656 = vcmp.lt.s32.totalorder %v2404, 0
      %vm2657 = vcmp.lt.s32.totalorder %v2415, 0
      %vm2658 = vcmp.lt.s32.totalorder %v2426, 0
      %vm2659 = vcmp.lt.s32.totalorder %v2437, 0
      %vm2660 = vcmp.lt.s32.totalorder %v2448, 0
      %vm2661 = vcmp.lt.s32.totalorder %v2459, 0
      %vm2662 = vcmp.lt.s32.totalorder %v2470, 0
      %vm2663 = vcmp.lt.s32.totalorder %v2481, 0
      %vm2664 = vcmp.lt.s32.totalorder %v2492, 0
      %vm2665 = vcmp.lt.s32.totalorder %v2503, 0
      %vm2666 = vcmp.lt.s32.totalorder %v2514, 0
      %vm2667 = vcmp.lt.s32.totalorder %v2525, 0
      %vm2668 = vcmp.lt.s32.totalorder %v2536, 0
      %vm2669 = vcmp.lt.s32.totalorder %v2547, 0
      %vm2670 = vcmp.lt.s32.totalorder %v2558, 0
      %vm2671 = vcmp.lt.s32.totalorder %v2569, 0
      %vm2672 = vcmp.lt.s32.totalorder %v2580, 0
      %vm2673 = vcmp.lt.s32.totalorder %v2591, 0
      %vm2674 = vcmp.lt.s32.totalorder %v2602, 0
      %vm2675 = vmand %vm2639, %vm2603
      %vm2676 = vmand %vm2640, %vm2604
      %vm2677 = vmand %vm2641, %vm2605
      %vm2678 = vmand %vm2642, %vm2606
      %vm2679 = vmand %vm2643, %vm2607
      %vm2680 = vmand %vm2644, %vm2608
      %vm2681 = vmand %vm2645, %vm2609
      %vm2682 = vmand %vm2646, %vm2610
      %vm2683 = vmand %vm2647, %vm2611
      %vm2684 = vmand %vm2648, %vm2612
      %vm2685 = vmand %vm2649, %vm2613
      %vm2686 = vmand %vm2650, %vm2614
      %vm2687 = vmand %vm2651, %vm2615
      %vm2688 = vmand %vm2652, %vm2616
      %vm2689 = vmand %vm2653, %vm2617
      %vm2690 = vmand %vm2654, %vm2618
      %vm2691 = vmand %vm2655, %vm2619
      %vm2692 = vmand %vm2656, %vm2620
      %vm2693 = vmand %vm2657, %vm2621
      %vm2694 = vmand %vm2658, %vm2622
      %vm2695 = vmand %vm2659, %vm2623
      %vm2696 = vmand %vm2660, %vm2624
      %vm2697 = vmand %vm2661, %vm2625
      %vm2698 = vmand %vm2662, %vm2626
      %vm2699 = vmand %vm2663, %vm2627
      %vm2700 = vmand %vm2664, %vm2628
      %vm2701 = vmand %vm2665, %vm2629
      %vm2702 = vmand %vm2666, %vm2630
      %vm2703 = vmand %vm2667, %vm2631
      %vm2704 = vmand %vm2668, %vm2632
      %vm2705 = vmand %vm2669, %vm2633
      %vm2706 = vmand %vm2670, %vm2634
      %vm2707 = vmand %vm2671, %vm2635
      %vm2708 = vmand %vm2672, %vm2636
      %vm2709 = vmand %vm2673, %vm2637
      %vm2710 = vmand %vm2674, %vm2638
      %v2711 = vadd.s32 %v2217, 18
      %v2712 = vadd.s32 %v2228, 18
      %v2713 = vadd.s32 %v2239, 18
      %v2714 = vadd.s32 %v2250, 18
      %v2715 = vadd.s32 %v2261, 18
      %v2716 = vadd.s32 %v2272, 18
      %v2717 = vadd.s32 %v2283, 18
      %v2718 = vadd.s32 %v2294, 18
      %v2719 = vadd.s32 %v2305, 18
      %v2720 = vadd.s32 %v2316, 18
      %v2721 = vadd.s32 %v2327, 18
      %v2722 = vadd.s32 %v2338, 18
      %v2723 = vadd.s32 %v2349, 18
      %v2724 = vadd.s32 %v2360, 18
      %v2725 = vadd.s32 %v2371, 18
      %v2726 = vadd.s32 %v2382, 18
      %v2727 = vadd.s32 %v2393, 18
      %v2728 = vadd.s32 %v2404, 18
      %v2729 = vadd.s32 %v2415, 18
      %v2730 = vadd.s32 %v2426, 18
      %v2731 = vadd.s32 %v2437, 18
      %v2732 = vadd.s32 %v2448, 18
      %v2733 = vadd.s32 %v2459, 18
      %v2734 = vadd.s32 %v2470, 18
      %v2735 = vadd.s32 %v2481, 18
      %v2736 = vadd.s32 %v2492, 18
      %v2737 = vadd.s32 %v2503, 18
      %v2738 = vadd.s32 %v2514, 18
      %v2739 = vadd.s32 %v2525, 18
      %v2740 = vadd.s32 %v2536, 18
      %v2741 = vadd.s32 %v2547, 18
      %v2742 = vadd.s32 %v2558, 18
      %v2743 = vadd.s32 %v2569, 18
      %v2744 = vadd.s32 %v2580, 18
      %v2745 = vadd.s32 %v2591, 18
      %v2746 = vadd.s32 %v2602, 18
      %v2747 = vsel %vm2675, %v2711, %v2217
      %v2748 = vsel %vm2676, %v2712, %v2228
      %v2749 = vsel %vm2677, %v2713, %v2239
      %v2750 = vsel %vm2678, %v2714, %v2250
      %v2751 = vsel %vm2679, %v2715, %v2261
      %v2752 = vsel %vm2680, %v2716, %v2272
      %v2753 = vsel %vm2681, %v2717, %v2283
      %v2754 = vsel %vm2682, %v2718, %v2294
      %v2755 = vsel %vm2683, %v2719, %v2305
      %v2756 = vsel %vm2684, %v2720, %v2316
      %v2757 = vsel %vm2685, %v2721, %v2327
      %v2758 = vsel %vm2686, %v2722, %v2338
      %v2759 = vsel %vm2687, %v2723, %v2349
      %v2760 = vsel %vm2688, %v2724, %v2360
      %v2761 = vsel %vm2689, %v2725, %v2371
      %v2762 = vsel %vm2690, %v2726, %v2382
      %v2763 = vsel %vm2691, %v2727, %v2393
      %v2764 = vsel %vm2692, %v2728, %v2404
      %v2765 = vsel %vm2693, %v2729, %v2415
      %v2766 = vsel %vm2694, %v2730, %v2426
      %v2767 = vsel %vm2695, %v2731, %v2437
      %v2768 = vsel %vm2696, %v2732, %v2448
      %v2769 = vsel %vm2697, %v2733, %v2459
      %v2770 = vsel %vm2698, %v2734, %v2470
      %v2771 = vsel %vm2699, %v2735, %v2481
      %v2772 = vsel %vm2700, %v2736, %v2492
      %v2773 = vsel %vm2701, %v2737, %v2503
      %v2774 = vsel %vm2702, %v2738, %v2514
      %v2775 = vsel %vm2703, %v2739, %v2525
      %v2776 = vsel %vm2704, %v2740, %v2536
      %v2777 = vsel %vm2705, %v2741, %v2547
      %v2778 = vsel %vm2706, %v2742, %v2558
      %v2779 = vsel %vm2707, %v2743, %v2569
      %v2780 = vsel %vm2708, %v2744, %v2580
      %v2781 = vsel %vm2709, %v2745, %v2591
      %v2782 = vsel %vm2710, %v2746, %v2602
      %vm2783 = vcmp.lt.s32.totalorder %v2747, 16
      %vm2784 = vcmp.lt.s32.totalorder %v2748, 16
      %vm2785 = vcmp.lt.s32.totalorder %v2749, 16
      %vm2786 = vcmp.lt.s32.totalorder %v2750, 16
      %vm2787 = vcmp.lt.s32.totalorder %v2751, 16
      %vm2788 = vcmp.lt.s32.totalorder %v2752, 16
      %vm2789 = vcmp.lt.s32.totalorder %v2753, 16
      %vm2790 = vcmp.lt.s32.totalorder %v2754, 16
      %vm2791 = vcmp.lt.s32.totalorder %v2755, 16
      %vm2792 = vcmp.lt.s32.totalorder %v2756, 16
      %vm2793 = vcmp.lt.s32.totalorder %v2757, 16
      %vm2794 = vcmp.lt.s32.totalorder %v2758, 16
      %vm2795 = vcmp.lt.s32.totalorder %v2759, 16
      %vm2796 = vcmp.lt.s32.totalorder %v2760, 16
      %vm2797 = vcmp.lt.s32.totalorder %v2761, 16
      %vm2798 = vcmp.lt.s32.totalorder %v2762, 16
      %vm2799 = vcmp.lt.s32.totalorder %v2763, 16
      %vm2800 = vcmp.lt.s32.totalorder %v2764, 16
      %vm2801 = vcmp.lt.s32.totalorder %v2765, 16
      %vm2802 = vcmp.lt.s32.totalorder %v2766, 16
      %vm2803 = vcmp.lt.s32.totalorder %v2767, 16
      %vm2804 = vcmp.lt.s32.totalorder %v2768, 16
      %vm2805 = vcmp.lt.s32.totalorder %v2769, 16
      %vm2806 = vcmp.lt.s32.totalorder %v2770, 16
      %vm2807 = vcmp.lt.s32.totalorder %v2771, 16
      %vm2808 = vcmp.lt.s32.totalorder %v2772, 16
      %vm2809 = vcmp.lt.s32.totalorder %v2773, 16
      %vm2810 = vcmp.lt.s32.totalorder %v2774, 16
      %vm2811 = vcmp.lt.s32.totalorder %v2775, 16
      %vm2812 = vcmp.lt.s32.totalorder %v2776, 16
      %vm2813 = vcmp.lt.s32.totalorder %v2777, 16
      %vm2814 = vcmp.lt.s32.totalorder %v2778, 16
      %vm2815 = vcmp.lt.s32.totalorder %v2779, 16
      %vm2816 = vcmp.lt.s32.totalorder %v2780, 16
      %vm2817 = vcmp.lt.s32.totalorder %v2781, 16
      %vm2818 = vcmp.lt.s32.totalorder %v2782, 16
      %v2819 = vld [vmem:[%s2] sm:$0x1]
      %v2821 = vlaneseq
      %v2822 = vshrl.u32 %v2821, 7
      %v2823 = vsub.s32 0, %v2822
      %v2824 = vrot.slane %v2819, %v2823
      %v2826 = vmul.f32 %v2134, %v2824
      %v2827 = vmul.f32 %v2135, %v2824
      %v2828 = vmul.f32 %v2136, %v2824
      %v2829 = vmul.f32 %v2137, %v2824
      %v2830 = vmul.f32 %v2138, %v2824
      %v2831 = vmul.f32 %v2139, %v2824
      %v2832 = vmul.f32 %v2140, %v2824
      %v2833 = vmul.f32 %v2141, %v2824
      %v2834 = vmul.f32 %v2142, %v2824
      %v2835 = vmul.f32 %v2143, %v2824
      %v2836 = vmul.f32 %v2144, %v2824
      %v2837 = vmul.f32 %v2145, %v2824
      %v2838 = vmul.f32 %v2146, %v2824
      %v2839 = vmul.f32 %v2147, %v2824
      %v2840 = vmul.f32 %v2148, %v2824
      %v2841 = vmul.f32 %v2149, %v2824
      %v2842 = vmul.f32 %v2150, %v2824
      %v2843 = vmul.f32 %v2151, %v2824
      %v2844 = vmul.f32 %v2152, %v2824
      %v2845 = vmul.f32 %v2153, %v2824
      %v2846 = vmul.f32 %v2154, %v2824
      %v2847 = vmul.f32 %v2155, %v2824
      %v2848 = vmul.f32 %v2156, %v2824
      %v2849 = vmul.f32 %v2157, %v2824
      %v2850 = vmul.f32 %v2158, %v2824
      %v2851 = vmul.f32 %v2159, %v2824
      %v2852 = vmul.f32 %v2160, %v2824
      %v2853 = vmul.f32 %v2161, %v2824
      %v2854 = vmul.f32 %v2162, %v2824
      %v2855 = vmul.f32 %v2163, %v2824
      %v2856 = vmul.f32 %v2164, %v2824
      %v2857 = vmul.f32 %v2165, %v2824
      %v2858 = vmul.f32 %v2166, %v2824
      %v2859 = vmul.f32 %v2167, %v2824
      %v2860 = vmul.f32 %v2168, %v2824
      %v2861 = vmul.f32 %v2169, %v2824
      %v2862 = vld [vmem:[%s3] sm:$0x1]
      %v2864 = vlaneseq
      %v2865 = vshrl.u32 %v2864, 7
      %v2866 = vsub.s32 0, %v2865
      %v2867 = vrot.slane %v2862, %v2866
      %v2869 = vadd.f32 %v2826, %v2867
      %v2870 = vadd.f32 %v2827, %v2867
      %v2871 = vadd.f32 %v2828, %v2867
      %v2872 = vadd.f32 %v2829, %v2867
      %v2873 = vadd.f32 %v2830, %v2867
      %v2874 = vadd.f32 %v2831, %v2867
      %v2875 = vadd.f32 %v2832, %v2867
      %v2876 = vadd.f32 %v2833, %v2867
      %v2877 = vadd.f32 %v2834, %v2867
      %v2878 = vadd.f32 %v2835, %v2867
      %v2879 = vadd.f32 %v2836, %v2867
      %v2880 = vadd.f32 %v2837, %v2867
      %v2881 = vadd.f32 %v2838, %v2867
      %v2882 = vadd.f32 %v2839, %v2867
      %v2883 = vadd.f32 %v2840, %v2867
      %v2884 = vadd.f32 %v2841, %v2867
      %v2885 = vadd.f32 %v2842, %v2867
      %v2886 = vadd.f32 %v2843, %v2867
      %v2887 = vadd.f32 %v2844, %v2867
      %v2888 = vadd.f32 %v2845, %v2867
      %v2889 = vadd.f32 %v2846, %v2867
      %v2890 = vadd.f32 %v2847, %v2867
      %v2891 = vadd.f32 %v2848, %v2867
      %v2892 = vadd.f32 %v2849, %v2867
      %v2893 = vadd.f32 %v2850, %v2867
      %v2894 = vadd.f32 %v2851, %v2867
      %v2895 = vadd.f32 %v2852, %v2867
      %v2896 = vadd.f32 %v2853, %v2867
      %v2897 = vadd.f32 %v2854, %v2867
      %v2898 = vadd.f32 %v2855, %v2867
      %v2899 = vadd.f32 %v2856, %v2867
      %v2900 = vadd.f32 %v2857, %v2867
      %v2901 = vadd.f32 %v2858, %v2867
      %v2902 = vadd.f32 %v2859, %v2867
      %v2903 = vadd.f32 %v2860, %v2867
      %v2904 = vadd.f32 %v2861, %v2867
      %v2905 = vmax.f32 %v2869, 0.0
      %v2906 = vmax.f32 %v2870, 0.0
      %v2907 = vmax.f32 %v2871, 0.0
      %v2908 = vmax.f32 %v2872, 0.0
      %v2909 = vmax.f32 %v2873, 0.0
      %v2910 = vmax.f32 %v2874, 0.0
      %v2911 = vmax.f32 %v2875, 0.0
      %v2912 = vmax.f32 %v2876, 0.0
      %v2913 = vmax.f32 %v2877, 0.0
      %v2914 = vmax.f32 %v2878, 0.0
      %v2915 = vmax.f32 %v2879, 0.0
      %v2916 = vmax.f32 %v2880, 0.0
      %v2917 = vmax.f32 %v2881, 0.0
      %v2918 = vmax.f32 %v2882, 0.0
      %v2919 = vmax.f32 %v2883, 0.0
      %v2920 = vmax.f32 %v2884, 0.0
      %v2921 = vmax.f32 %v2885, 0.0
      %v2922 = vmax.f32 %v2886, 0.0
      %v2923 = vmax.f32 %v2887, 0.0
      %v2924 = vmax.f32 %v2888, 0.0
      %v2925 = vmax.f32 %v2889, 0.0
      %v2926 = vmax.f32 %v2890, 0.0
      %v2927 = vmax.f32 %v2891, 0.0
      %v2928 = vmax.f32 %v2892, 0.0
      %v2929 = vmax.f32 %v2893, 0.0
      %v2930 = vmax.f32 %v2894, 0.0
      %v2931 = vmax.f32 %v2895, 0.0
      %v2932 = vmax.f32 %v2896, 0.0
      %v2933 = vmax.f32 %v2897, 0.0
      %v2934 = vmax.f32 %v2898, 0.0
      %v2935 = vmax.f32 %v2899, 0.0
      %v2936 = vmax.f32 %v2900, 0.0
      %v2937 = vmax.f32 %v2901, 0.0
      %v2938 = vmax.f32 %v2902, 0.0
      %v2939 = vmax.f32 %v2903, 0.0
      %v2940 = vmax.f32 %v2904, 0.0
      %v2941 = vsel %vm2783, 1, 0
      %v2942 = vsel %vm2784, 1, 0
      %v2943 = vsel %vm2785, 1, 0
      %v2944 = vsel %vm2786, 1, 0
      %v2945 = vsel %vm2787, 1, 0
      %v2946 = vsel %vm2788, 1, 0
      %v2947 = vsel %vm2789, 1, 0
      %v2948 = vsel %vm2790, 1, 0
      %v2949 = vsel %vm2791, 1, 0
      %v2950 = vsel %vm2792, 1, 0
      %v2951 = vsel %vm2793, 1, 0
      %v2952 = vsel %vm2794, 1, 0
      %v2953 = vsel %vm2795, 1, 0
      %v2954 = vsel %vm2796, 1, 0
      %v2955 = vsel %vm2797, 1, 0
      %v2956 = vsel %vm2798, 1, 0
      %v2957 = vsel %vm2799, 1, 0
      %v2958 = vsel %vm2800, 1, 0
      %v2959 = vsel %vm2801, 1, 0
      %v2960 = vsel %vm2802, 1, 0
      %v2961 = vsel %vm2803, 1, 0
      %v2962 = vsel %vm2804, 1, 0
      %v2963 = vsel %vm2805, 1, 0
      %v2964 = vsel %vm2806, 1, 0
      %v2965 = vsel %vm2807, 1, 0
      %v2966 = vsel %vm2808, 1, 0
      %v2967 = vsel %vm2809, 1, 0
      %v2968 = vsel %vm2810, 1, 0
      %v2969 = vsel %vm2811, 1, 0
      %v2970 = vsel %vm2812, 1, 0
      %v2971 = vsel %vm2813, 1, 0
      %v2972 = vsel %vm2814, 1, 0
      %v2973 = vsel %vm2815, 1, 0
      %v2974 = vsel %vm2816, 1, 0
      %v2975 = vsel %vm2817, 1, 0
      %v2976 = vsel %vm2818, 1, 0
      %vm2977 = vcmp.eq.s32.totalorder %v2941, 1
      %vm2978 = vcmp.eq.s32.totalorder %v2942, 1
      %vm2979 = vcmp.eq.s32.totalorder %v2943, 1
      %vm2980 = vcmp.eq.s32.totalorder %v2944, 1
      %vm2981 = vcmp.eq.s32.totalorder %v2945, 1
      %vm2982 = vcmp.eq.s32.totalorder %v2946, 1
      %vm2983 = vcmp.eq.s32.totalorder %v2947, 1
      %vm2984 = vcmp.eq.s32.totalorder %v2948, 1
      %vm2985 = vcmp.eq.s32.totalorder %v2949, 1
      %vm2986 = vcmp.eq.s32.totalorder %v2950, 1
      %vm2987 = vcmp.eq.s32.totalorder %v2951, 1
      %vm2988 = vcmp.eq.s32.totalorder %v2952, 1
      %vm2989 = vcmp.eq.s32.totalorder %v2953, 1
      %vm2990 = vcmp.eq.s32.totalorder %v2954, 1
      %vm2991 = vcmp.eq.s32.totalorder %v2955, 1
      %vm2992 = vcmp.eq.s32.totalorder %v2956, 1
      %vm2993 = vcmp.eq.s32.totalorder %v2957, 1
      %vm2994 = vcmp.eq.s32.totalorder %v2958, 1
      %vm2995 = vcmp.eq.s32.totalorder %v2959, 1
      %vm2996 = vcmp.eq.s32.totalorder %v2960, 1
      %vm2997 = vcmp.eq.s32.totalorder %v2961, 1
      %vm2998 = vcmp.eq.s32.totalorder %v2962, 1
      %vm2999 = vcmp.eq.s32.totalorder %v2963, 1
      %vm3000 = vcmp.eq.s32.totalorder %v2964, 1
      %vm3001 = vcmp.eq.s32.totalorder %v2965, 1
      %vm3002 = vcmp.eq.s32.totalorder %v2966, 1
      %vm3003 = vcmp.eq.s32.totalorder %v2967, 1
      %vm3004 = vcmp.eq.s32.totalorder %v2968, 1
      %vm3005 = vcmp.eq.s32.totalorder %v2969, 1
      %vm3006 = vcmp.eq.s32.totalorder %v2970, 1
      %vm3007 = vcmp.eq.s32.totalorder %v2971, 1
      %vm3008 = vcmp.eq.s32.totalorder %v2972, 1
      %vm3009 = vcmp.eq.s32.totalorder %v2973, 1
      %vm3010 = vcmp.eq.s32.totalorder %v2974, 1
      %vm3011 = vcmp.eq.s32.totalorder %v2975, 1
      %vm3012 = vcmp.eq.s32.totalorder %v2976, 1
      %v3013 = vsel %vm2977, %v2905, 0.0
      %v3014 = vsel %vm2978, %v2906, 0.0
      %v3015 = vsel %vm2979, %v2907, 0.0
      %v3016 = vsel %vm2980, %v2908, 0.0
      %v3017 = vsel %vm2981, %v2909, 0.0
      %v3018 = vsel %vm2982, %v2910, 0.0
      %v3019 = vsel %vm2983, %v2911, 0.0
      %v3020 = vsel %vm2984, %v2912, 0.0
      %v3021 = vsel %vm2985, %v2913, 0.0
      %v3022 = vsel %vm2986, %v2914, 0.0
      %v3023 = vsel %vm2987, %v2915, 0.0
      %v3024 = vsel %vm2988, %v2916, 0.0
      %v3025 = vsel %vm2989, %v2917, 0.0
      %v3026 = vsel %vm2990, %v2918, 0.0
      %v3027 = vsel %vm2991, %v2919, 0.0
      %v3028 = vsel %vm2992, %v2920, 0.0
      %v3029 = vsel %vm2993, %v2921, 0.0
      %v3030 = vsel %vm2994, %v2922, 0.0
      %v3031 = vsel %vm2995, %v2923, 0.0
      %v3032 = vsel %vm2996, %v2924, 0.0
      %v3033 = vsel %vm2997, %v2925, 0.0
      %v3034 = vsel %vm2998, %v2926, 0.0
      %v3035 = vsel %vm2999, %v2927, 0.0
      %v3036 = vsel %vm3000, %v2928, 0.0
      %v3037 = vsel %vm3001, %v2929, 0.0
      %v3038 = vsel %vm3002, %v2930, 0.0
      %v3039 = vsel %vm3003, %v2931, 0.0
      %v3040 = vsel %vm3004, %v2932, 0.0
      %v3041 = vsel %vm3005, %v2933, 0.0
      %v3042 = vsel %vm3006, %v2934, 0.0
      %v3043 = vsel %vm3007, %v2935, 0.0
      %v3044 = vsel %vm3008, %v2936, 0.0
      %v3045 = vsel %vm3009, %v2937, 0.0
      %v3046 = vsel %vm3010, %v2938, 0.0
      %v3047 = vsel %vm3011, %v2939, 0.0
      %v3048 = vsel %vm3012, %v2940, 0.0
      %vm3049 = vcmask 27648
      %3050 = vst.msk [vmem:[#allocation2] sm:$0xf] %vm3049, 0
      %3051 = vst.msk [vmem:[#allocation2 + $0x4] sm:$0xf] %vm3049, 0
      %vm3052 = vcmask 25600
      %vm3053 = vsmask.f32 1280
      %vm3054 = vmand %vm3052, %vm3053
      %v3055 = vld [vmem:[#allocation2 + $0x8] sm:$0x3]
      %v3056 = vsel %vm3054, 0, %v3055
      %3057 = vst [vmem:[#allocation2 + $0x8] sm:$0x3] %v3056
      %vm3058 = vcmask 27649
      %vm3059 = vsmask.f32 7942
      %vm3060 = vmand %vm3058, %vm3059
      %v3061 = vld [vmem:[#allocation2 + $0x98] sm:$0xe]
      %v3062 = vsel %vm3060, 0, %v3061
      %3063 = vst [vmem:[#allocation2 + $0x98] sm:$0xe] %v3062
      %3064 = vst.msk [vmem:[#allocation2 + $0x9c] sm:$0xf] %vm3049, 0
      %3065 = vst.msk [vmem:[#allocation2 + $0xa0] sm:$0xf] %vm3049, 0
      %3066 = vst.msk [vmem:[#allocation2 + $0xa4] sm:$0xf] %vm3049, 0
      %vm3067 = vcmask 26624
      %3068 = vst.msk [vmem:[#allocation2 + $0xa8] sm:$0x7] %vm3067, 0
      %v3069 = vpack.c.bf16 %v3014, %v3013
      %v3070 = vpack.c.bf16 %v3016, %v3015
      %v3071 = vpack.c.bf16 %v3018, %v3017
      %v3072 = vpack.c.bf16 %v3020, %v3019
      %v3073 = vpack.c.bf16 %v3022, %v3021
      %v3074 = vpack.c.bf16 %v3024, %v3023
      %v3075 = vpack.c.bf16 %v3026, %v3025
      %v3076 = vpack.c.bf16 %v3028, %v3027
      %v3077 = vpack.c.bf16 %v3030, %v3029
      %v3078 = vpack.c.bf16 %v3032, %v3031
      %v3079 = vpack.c.bf16 %v3034, %v3033
      %v3080 = vpack.c.bf16 %v3036, %v3035
      %v3081 = vpack.c.bf16 %v3038, %v3037
      %v3082 = vpack.c.bf16 %v3040, %v3039
      %v3083 = vpack.c.bf16 %v3042, %v3041
      %v3084 = vpack.c.bf16 %v3044, %v3043
      %v3085 = vpack.c.bf16 %v3046, %v3045
      %v3086 = vpack.c.bf16 %v3048, %v3047
      %v3105 = vunpack.c.l.b16 %v3069
      %v3106 = vunpack.c.h.b16 %v3069
      %v3107 = vunpack.c.l.b16 %v3070
      %v3108 = vunpack.c.h.b16 %v3070
      %v3109 = vunpack.c.l.b16 %v3071
      %v3110 = vunpack.c.h.b16 %v3071
      %v3111 = vunpack.c.l.b16 %v3072
      %v3112 = vunpack.c.h.b16 %v3072
      %v3113 = vunpack.c.l.b16 %v3073
      %v3114 = vunpack.c.h.b16 %v3073
      %v3115 = vunpack.c.l.b16 %v3074
      %v3116 = vunpack.c.h.b16 %v3074
      %v3117 = vunpack.c.l.b16 %v3075
      %v3118 = vunpack.c.h.b16 %v3075
      %v3119 = vunpack.c.l.b16 %v3076
      %v3120 = vunpack.c.h.b16 %v3076
      %v3121 = vunpack.c.l.b16 %v3077
      %v3122 = vunpack.c.h.b16 %v3077
      %v3123 = vunpack.c.l.b16 %v3078
      %v3124 = vunpack.c.h.b16 %v3078
      %v3125 = vunpack.c.l.b16 %v3079
      %v3126 = vunpack.c.h.b16 %v3079
      %v3127 = vunpack.c.l.b16 %v3080
      %v3128 = vunpack.c.h.b16 %v3080
      %v3129 = vunpack.c.l.b16 %v3081
      %v3130 = vunpack.c.h.b16 %v3081
      %v3131 = vunpack.c.l.b16 %v3082
      %v3132 = vunpack.c.h.b16 %v3082
      %v3133 = vunpack.c.l.b16 %v3083
      %v3134 = vunpack.c.h.b16 %v3083
      %v3135 = vunpack.c.l.b16 %v3084
      %v3136 = vunpack.c.h.b16 %v3084
      %v3137 = vunpack.c.l.b16 %v3085
      %v3138 = vunpack.c.h.b16 %v3085
      %v3139 = vunpack.c.l.b16 %v3086
      %v3140 = vunpack.c.h.b16 %v3086
      %v3141 = vpack.c.b16 %v3105, %v3105
      %v3142 = vpack.c.b16 %v3106, %v3106
      %v3143 = vpack.c.b16 %v3107, %v3107
      %v3144 = vpack.c.b16 %v3108, %v3108
      %v3145 = vpack.c.b16 %v3109, %v3109
      %v3146 = vpack.c.b16 %v3110, %v3110
      %v3147 = vpack.c.b16 %v3111, %v3111
      %v3148 = vpack.c.b16 %v3112, %v3112
      %v3149 = vpack.c.b16 %v3113, %v3113
      %v3150 = vpack.c.b16 %v3114, %v3114
      %v3151 = vpack.c.b16 %v3115, %v3115
      %v3152 = vpack.c.b16 %v3116, %v3116
      %v3153 = vpack.c.b16 %v3117, %v3117
      %v3154 = vpack.c.b16 %v3118, %v3118
      %v3155 = vpack.c.b16 %v3119, %v3119
      %v3156 = vpack.c.b16 %v3120, %v3120
      %v3157 = vpack.c.b16 %v3121, %v3121
      %v3158 = vpack.c.b16 %v3122, %v3122
      %v3159 = vpack.c.b16 %v3123, %v3123
      %v3160 = vpack.c.b16 %v3124, %v3124
      %v3161 = vpack.c.b16 %v3125, %v3125
      %v3162 = vpack.c.b16 %v3126, %v3126
      %v3163 = vpack.c.b16 %v3127, %v3127
      %v3164 = vpack.c.b16 %v3128, %v3128
      %v3165 = vpack.c.b16 %v3129, %v3129
      %v3166 = vpack.c.b16 %v3130, %v3130
      %v3167 = vpack.c.b16 %v3131, %v3131
      %v3168 = vpack.c.b16 %v3132, %v3132
      %v3169 = vpack.c.b16 %v3133, %v3133
      %v3170 = vpack.c.b16 %v3134, %v3134
      %v3171 = vpack.c.b16 %v3135, %v3135
      %v3172 = vpack.c.b16 %v3136, %v3136
      %v3173 = vpack.c.b16 %v3137, %v3137
      %v3174 = vpack.c.b16 %v3138, %v3138
      %v3175 = vpack.c.b16 %v3139, %v3139
      %v3176 = vpack.c.b16 %v3140, %v3140
      %vm3177 = vsmask.f32 5392
      %vm3178 = vmor %vm3053, %vm3177
      %v3180 = vshrl.u32 %v3141, 16
      %v3182 = vrot.slane %v3180, 6
      %v3183 = vshll.u32 %v3141, 16
      %v3185 = vrot.slane %v3183, 7
      %v3186 = vor.u32 %v3182, %v3185
      %v3187 = vrot.slane %v3186, 4
      %v3189 = vshrl.u32 %v3142, 16
      %v3191 = vrot.slane %v3189, 6
      %v3192 = vshll.u32 %v3142, 16
      %v3194 = vrot.slane %v3192, 7
      %v3195 = vor.u32 %v3191, %v3194
      %v3196 = vsel %vm3178, %v3187, %v3195
      %v3197 = vrot.slane %v3195, 4
      %v3199 = vshrl.u32 %v3143, 16
      %v3201 = vrot.slane %v3199, 6
      %v3202 = vshll.u32 %v3143, 16
      %v3204 = vrot.slane %v3202, 7
      %v3205 = vor.u32 %v3201, %v3204
      %v3206 = vsel %vm3178, %v3197, %v3205
      %v3207 = vrot.slane %v3205, 4
      %v3209 = vshrl.u32 %v3144, 16
      %v3211 = vrot.slane %v3209, 6
      %v3212 = vshll.u32 %v3144, 16
      %v3214 = vrot.slane %v3212, 7
      %v3215 = vor.u32 %v3211, %v3214
      %v3216 = vsel %vm3178, %v3207, %v3215
      %v3217 = vrot.slane %v3215, 4
      %v3219 = vshrl.u32 %v3145, 16
      %v3221 = vrot.slane %v3219, 6
      %v3222 = vshll.u32 %v3145, 16
      %v3224 = vrot.slane %v3222, 7
      %v3225 = vor.u32 %v3221, %v3224
      %v3226 = vsel %vm3178, %v3217, %v3225
      %v3227 = vrot.slane %v3225, 4
      %v3229 = vshrl.u32 %v3146, 16
      %v3231 = vrot.slane %v3229, 6
      %v3232 = vshll.u32 %v3146, 16
      %v3234 = vrot.slane %v3232, 7
      %v3235 = vor.u32 %v3231, %v3234
      %v3236 = vsel %vm3178, %v3227, %v3235
      %v3237 = vrot.slane %v3235, 4
      %v3239 = vshrl.u32 %v3147, 16
      %v3241 = vrot.slane %v3239, 6
      %v3242 = vshll.u32 %v3147, 16
      %v3244 = vrot.slane %v3242, 7
      %v3245 = vor.u32 %v3241, %v3244
      %v3246 = vsel %vm3178, %v3237, %v3245
      %v3247 = vrot.slane %v3245, 4
      %v3249 = vshrl.u32 %v3148, 16
      %v3251 = vrot.slane %v3249, 6
      %v3252 = vshll.u32 %v3148, 16
      %v3254 = vrot.slane %v3252, 7
      %v3255 = vor.u32 %v3251, %v3254
      %v3256 = vsel %vm3178, %v3247, %v3255
      %v3257 = vrot.slane %v3255, 4
      %v3259 = vshrl.u32 %v3149, 16
      %v3261 = vrot.slane %v3259, 6
      %v3262 = vshll.u32 %v3149, 16
      %v3264 = vrot.slane %v3262, 7
      %v3265 = vor.u32 %v3261, %v3264
      %v3266 = vsel %vm3178, %v3257, %v3265
      %v3267 = vrot.slane %v3265, 4
      %v3269 = vshrl.u32 %v3150, 16
      %v3271 = vrot.slane %v3269, 6
      %v3272 = vshll.u32 %v3150, 16
      %v3274 = vrot.slane %v3272, 7
      %v3275 = vor.u32 %v3271, %v3274
      %v3276 = vsel %vm3178, %v3267, %v3275
      %v3277 = vrot.slane %v3275, 4
      %v3279 = vshrl.u32 %v3151, 16
      %v3281 = vrot.slane %v3279, 6
      %v3282 = vshll.u32 %v3151, 16
      %v3284 = vrot.slane %v3282, 7
      %v3285 = vor.u32 %v3281, %v3284
      %v3286 = vsel %vm3178, %v3277, %v3285
      %v3287 = vrot.slane %v3285, 4
      %v3289 = vshrl.u32 %v3152, 16
      %v3291 = vrot.slane %v3289, 6
      %v3292 = vshll.u32 %v3152, 16
      %v3294 = vrot.slane %v3292, 7
      %v3295 = vor.u32 %v3291, %v3294
      %v3296 = vsel %vm3178, %v3287, %v3295
      %v3297 = vrot.slane %v3295, 4
      %v3299 = vshrl.u32 %v3153, 16
      %v3301 = vrot.slane %v3299, 6
      %v3302 = vshll.u32 %v3153, 16
      %v3304 = vrot.slane %v3302, 7
      %v3305 = vor.u32 %v3301, %v3304
      %v3306 = vsel %vm3178, %v3297, %v3305
      %v3307 = vrot.slane %v3305, 4
      %v3309 = vshrl.u32 %v3154, 16
      %v3311 = vrot.slane %v3309, 6
      %v3312 = vshll.u32 %v3154, 16
      %v3314 = vrot.slane %v3312, 7
      %v3315 = vor.u32 %v3311, %v3314
      %v3316 = vsel %vm3178, %v3307, %v3315
      %v3317 = vrot.slane %v3315, 4
      %v3319 = vshrl.u32 %v3155, 16
      %v3321 = vrot.slane %v3319, 6
      %v3322 = vshll.u32 %v3155, 16
      %v3324 = vrot.slane %v3322, 7
      %v3325 = vor.u32 %v3321, %v3324
      %v3326 = vsel %vm3178, %v3317, %v3325
      %v3327 = vrot.slane %v3325, 4
      %v3329 = vshrl.u32 %v3156, 16
      %v3331 = vrot.slane %v3329, 6
      %v3332 = vshll.u32 %v3156, 16
      %v3334 = vrot.slane %v3332, 7
      %v3335 = vor.u32 %v3331, %v3334
      %v3336 = vsel %vm3178, %v3327, %v3335
      %v3337 = vrot.slane %v3335, 4
      %v3339 = vshrl.u32 %v3157, 16
      %v3341 = vrot.slane %v3339, 6
      %v3342 = vshll.u32 %v3157, 16
      %v3344 = vrot.slane %v3342, 7
      %v3345 = vor.u32 %v3341, %v3344
      %v3346 = vsel %vm3178, %v3337, %v3345
      %v3347 = vrot.slane %v3345, 4
      %v3349 = vshrl.u32 %v3158, 16
      %v3351 = vrot.slane %v3349, 6
      %v3352 = vshll.u32 %v3158, 16
      %v3354 = vrot.slane %v3352, 7
      %v3355 = vor.u32 %v3351, %v3354
      %v3356 = vsel %vm3178, %v3347, %v3355
      %v3357 = vrot.slane %v3355, 4
      %v3359 = vshrl.u32 %v3159, 16
      %v3361 = vrot.slane %v3359, 6
      %v3362 = vshll.u32 %v3159, 16
      %v3364 = vrot.slane %v3362, 7
      %v3365 = vor.u32 %v3361, %v3364
      %v3366 = vsel %vm3178, %v3357, %v3365
      %v3367 = vrot.slane %v3365, 4
      %v3369 = vshrl.u32 %v3160, 16
      %v3371 = vrot.slane %v3369, 6
      %v3372 = vshll.u32 %v3160, 16
      %v3374 = vrot.slane %v3372, 7
      %v3375 = vor.u32 %v3371, %v3374
      %v3376 = vsel %vm3178, %v3367, %v3375
      %v3377 = vrot.slane %v3375, 4
      %v3379 = vshrl.u32 %v3161, 16
      %v3381 = vrot.slane %v3379, 6
      %v3382 = vshll.u32 %v3161, 16
      %v3384 = vrot.slane %v3382, 7
      %v3385 = vor.u32 %v3381, %v3384
      %v3386 = vsel %vm3178, %v3377, %v3385
      %v3387 = vrot.slane %v3385, 4
      %v3389 = vshrl.u32 %v3162, 16
      %v3391 = vrot.slane %v3389, 6
      %v3392 = vshll.u32 %v3162, 16
      %v3394 = vrot.slane %v3392, 7
      %v3395 = vor.u32 %v3391, %v3394
      %v3396 = vsel %vm3178, %v3387, %v3395
      %v3397 = vrot.slane %v3395, 4
      %v3399 = vshrl.u32 %v3163, 16
      %v3401 = vrot.slane %v3399, 6
      %v3402 = vshll.u32 %v3163, 16
      %v3404 = vrot.slane %v3402, 7
      %v3405 = vor.u32 %v3401, %v3404
      %v3406 = vsel %vm3178, %v3397, %v3405
      %v3407 = vrot.slane %v3405, 4
      %v3409 = vshrl.u32 %v3164, 16
      %v3411 = vrot.slane %v3409, 6
      %v3412 = vshll.u32 %v3164, 16
      %v3414 = vrot.slane %v3412, 7
      %v3415 = vor.u32 %v3411, %v3414
      %v3416 = vsel %vm3178, %v3407, %v3415
      %v3417 = vrot.slane %v3415, 4
      %v3419 = vshrl.u32 %v3165, 16
      %v3421 = vrot.slane %v3419, 6
      %v3422 = vshll.u32 %v3165, 16
      %v3424 = vrot.slane %v3422, 7
      %v3425 = vor.u32 %v3421, %v3424
      %v3426 = vsel %vm3178, %v3417, %v3425
      %v3427 = vrot.slane %v3425, 4
      %v3429 = vshrl.u32 %v3166, 16
      %v3431 = vrot.slane %v3429, 6
      %v3432 = vshll.u32 %v3166, 16
      %v3434 = vrot.slane %v3432, 7
      %v3435 = vor.u32 %v3431, %v3434
      %v3436 = vsel %vm3178, %v3427, %v3435
      %v3437 = vrot.slane %v3435, 4
      %v3439 = vshrl.u32 %v3167, 16
      %v3441 = vrot.slane %v3439, 6
      %v3442 = vshll.u32 %v3167, 16
      %v3444 = vrot.slane %v3442, 7
      %v3445 = vor.u32 %v3441, %v3444
      %v3446 = vsel %vm3178, %v3437, %v3445
      %v3447 = vrot.slane %v3445, 4
      %v3449 = vshrl.u32 %v3168, 16
      %v3451 = vrot.slane %v3449, 6
      %v3452 = vshll.u32 %v3168, 16
      %v3454 = vrot.slane %v3452, 7
      %v3455 = vor.u32 %v3451, %v3454
      %v3456 = vsel %vm3178, %v3447, %v3455
      %v3457 = vrot.slane %v3455, 4
      %v3459 = vshrl.u32 %v3169, 16
      %v3461 = vrot.slane %v3459, 6
      %v3462 = vshll.u32 %v3169, 16
      %v3464 = vrot.slane %v3462, 7
      %v3465 = vor.u32 %v3461, %v3464
      %v3466 = vsel %vm3178, %v3457, %v3465
      %v3467 = vrot.slane %v3465, 4
      %v3469 = vshrl.u32 %v3170, 16
      %v3471 = vrot.slane %v3469, 6
      %v3472 = vshll.u32 %v3170, 16
      %v3474 = vrot.slane %v3472, 7
      %v3475 = vor.u32 %v3471, %v3474
      %v3476 = vsel %vm3178, %v3467, %v3475
      %v3477 = vrot.slane %v3475, 4
      %v3479 = vshrl.u32 %v3171, 16
      %v3481 = vrot.slane %v3479, 6
      %v3482 = vshll.u32 %v3171, 16
      %v3484 = vrot.slane %v3482, 7
      %v3485 = vor.u32 %v3481, %v3484
      %v3486 = vsel %vm3178, %v3477, %v3485
      %v3487 = vrot.slane %v3485, 4
      %v3489 = vshrl.u32 %v3172, 16
      %v3491 = vrot.slane %v3489, 6
      %v3492 = vshll.u32 %v3172, 16
      %v3494 = vrot.slane %v3492, 7
      %v3495 = vor.u32 %v3491, %v3494
      %v3496 = vsel %vm3178, %v3487, %v3495
      %v3497 = vrot.slane %v3495, 4
      %v3499 = vshrl.u32 %v3173, 16
      %v3501 = vrot.slane %v3499, 6
      %v3502 = vshll.u32 %v3173, 16
      %v3504 = vrot.slane %v3502, 7
      %v3505 = vor.u32 %v3501, %v3504
      %v3506 = vsel %vm3178, %v3497, %v3505
      %v3507 = vrot.slane %v3505, 4
      %v3509 = vshrl.u32 %v3174, 16
      %v3511 = vrot.slane %v3509, 6
      %v3512 = vshll.u32 %v3174, 16
      %v3514 = vrot.slane %v3512, 7
      %v3515 = vor.u32 %v3511, %v3514
      %v3516 = vsel %vm3178, %v3507, %v3515
      %v3517 = vrot.slane %v3515, 4
      %v3519 = vshrl.u32 %v3175, 16
      %v3521 = vrot.slane %v3519, 6
      %v3522 = vshll.u32 %v3175, 16
      %v3524 = vrot.slane %v3522, 7
      %v3525 = vor.u32 %v3521, %v3524
      %v3526 = vsel %vm3178, %v3517, %v3525
      %v3527 = vrot.slane %v3525, 4
      %v3529 = vshrl.u32 %v3176, 16
      %v3531 = vrot.slane %v3529, 6
      %v3532 = vshll.u32 %v3176, 16
      %v3534 = vrot.slane %v3532, 7
      %v3535 = vor.u32 %v3531, %v3534
      %v3536 = vsel %vm3178, %v3527, %v3535
      %v3537 = vrot.slane %v3535, 4
      %v3575 = vld [vmem:[#allocation2 + $0x8] sm:$0xe]
      %v3576 = vsel %vm3060, %v3186, %v3575
      %3577 = vst [vmem:[#allocation2 + $0x8] sm:$0xe] %v3576
      %3578 = vst.msk [vmem:[#allocation2 + $0xc] sm:$0xf] %vm3049, %v3196
      %3579 = vst.msk [vmem:[#allocation2 + $0x10] sm:$0xf] %vm3049, %v3206
      %3580 = vst.msk [vmem:[#allocation2 + $0x14] sm:$0xf] %vm3049, %v3216
      %3581 = vst.msk [vmem:[#allocation2 + $0x18] sm:$0xf] %vm3049, %v3226
      %3582 = vst.msk [vmem:[#allocation2 + $0x1c] sm:$0xf] %vm3049, %v3236
      %3583 = vst.msk [vmem:[#allocation2 + $0x20] sm:$0xf] %vm3049, %v3246
      %3584 = vst.msk [vmem:[#allocation2 + $0x24] sm:$0xf] %vm3049, %v3256
      %3585 = vst.msk [vmem:[#allocation2 + $0x28] sm:$0xf] %vm3049, %v3266
      %3586 = vst.msk [vmem:[#allocation2 + $0x2c] sm:$0xf] %vm3049, %v3276
      %3587 = vst.msk [vmem:[#allocation2 + $0x30] sm:$0xf] %vm3049, %v3286
      %3588 = vst.msk [vmem:[#allocation2 + $0x34] sm:$0xf] %vm3049, %v3296
      %3589 = vst.msk [vmem:[#allocation2 + $0x38] sm:$0xf] %vm3049, %v3306
      %3590 = vst.msk [vmem:[#allocation2 + $0x3c] sm:$0xf] %vm3049, %v3316
      %3591 = vst.msk [vmem:[#allocation2 + $0x40] sm:$0xf] %vm3049, %v3326
      %3592 = vst.msk [vmem:[#allocation2 + $0x44] sm:$0xf] %vm3049, %v3336
      %3593 = vst.msk [vmem:[#allocation2 + $0x48] sm:$0xf] %vm3049, %v3346
      %3594 = vst.msk [vmem:[#allocation2 + $0x4c] sm:$0xf] %vm3049, %v3356
      %3595 = vst.msk [vmem:[#allocation2 + $0x50] sm:$0xf] %vm3049, %v3366
      %3596 = vst.msk [vmem:[#allocation2 + $0x54] sm:$0xf] %vm3049, %v3376
      %3597 = vst.msk [vmem:[#allocation2 + $0x58] sm:$0xf] %vm3049, %v3386
      %3598 = vst.msk [vmem:[#allocation2 + $0x5c] sm:$0xf] %vm3049, %v3396
      %3599 = vst.msk [vmem:[#allocation2 + $0x60] sm:$0xf] %vm3049, %v3406
      %3600 = vst.msk [vmem:[#allocation2 + $0x64] sm:$0xf] %vm3049, %v3416
      %3601 = vst.msk [vmem:[#allocation2 + $0x68] sm:$0xf] %vm3049, %v3426
      %3602 = vst.msk [vmem:[#allocation2 + $0x6c] sm:$0xf] %vm3049, %v3436
      %3603 = vst.msk [vmem:[#allocation2 + $0x70] sm:$0xf] %vm3049, %v3446
      %3604 = vst.msk [vmem:[#allocation2 + $0x74] sm:$0xf] %vm3049, %v3456
      %3605 = vst.msk [vmem:[#allocation2 + $0x78] sm:$0xf] %vm3049, %v3466
      %3606 = vst.msk [vmem:[#allocation2 + $0x7c] sm:$0xf] %vm3049, %v3476
      %3607 = vst.msk [vmem:[#allocation2 + $0x80] sm:$0xf] %vm3049, %v3486
      %3608 = vst.msk [vmem:[#allocation2 + $0x84] sm:$0xf] %vm3049, %v3496
      %3609 = vst.msk [vmem:[#allocation2 + $0x88] sm:$0xf] %vm3049, %v3506
      %3610 = vst.msk [vmem:[#allocation2 + $0x8c] sm:$0xf] %vm3049, %v3516
      %3611 = vst.msk [vmem:[#allocation2 + $0x90] sm:$0xf] %vm3049, %v3526
      %3612 = vst.msk [vmem:[#allocation2 + $0x94] sm:$0xf] %vm3049, %v3536
      %v3613 = vld [vmem:[#allocation2 + $0x98] sm:$0x3]
      %v3614 = vsel %vm3054, %v3537, %v3613
      %3615 = vst [vmem:[#allocation2 + $0x98] sm:$0x3] %v3614
      %v3616 = vld [vmem:[#allocation2] sm:$0xf]
      %v3617 = vld [vmem:[#allocation2 + $0x4] sm:$0xf]
      %v3618 = vld [vmem:[#allocation2 + $0x8] sm:$0xf]
      %v3619 = vld [vmem:[#allocation2 + $0xc] sm:$0xf]
      %v3620 = vld [vmem:[#allocation2 + $0x10] sm:$0xf]
      %v3621 = vld [vmem:[#allocation2 + $0x14] sm:$0xf]
      %v3622 = vld [vmem:[#allocation2 + $0x18] sm:$0xf]
      %v3623 = vld [vmem:[#allocation2 + $0x1c] sm:$0xf]
      %v3624 = vld [vmem:[#allocation2 + $0x20] sm:$0xf]
      %v3625 = vld [vmem:[#allocation2 + $0x24] sm:$0xf]
      %v3626 = vld [vmem:[#allocation2 + $0x28] sm:$0xf]
      %v3627 = vld [vmem:[#allocation2 + $0x2c] sm:$0xf]
      %v3628 = vld [vmem:[#allocation2 + $0x30] sm:$0xf]
      %v3629 = vld [vmem:[#allocation2 + $0x34] sm:$0xf]
      %v3630 = vld [vmem:[#allocation2 + $0x38] sm:$0xf]
      %v3631 = vld [vmem:[#allocation2 + $0x3c] sm:$0xf]
      %v3632 = vld [vmem:[#allocation2 + $0x40] sm:$0xf]
      %v3633 = vld [vmem:[#allocation2 + $0x44] sm:$0xf]
      %v3634 = vld [vmem:[#allocation2 + $0x48] sm:$0xf]
      %v3635 = vld [vmem:[#allocation2 + $0x4c] sm:$0xf]
      %v3636 = vld [vmem:[#allocation2 + $0x50] sm:$0xf]
      %v3637 = vld [vmem:[#allocation2 + $0x54] sm:$0xf]
      %v3638 = vld [vmem:[#allocation2 + $0x58] sm:$0xf]
      %v3639 = vld [vmem:[#allocation2 + $0x5c] sm:$0xf]
      %v3640 = vld [vmem:[#allocation2 + $0x60] sm:$0xf]
      %v3641 = vld [vmem:[#allocation2 + $0x64] sm:$0xf]
      %v3642 = vld [vmem:[#allocation2 + $0x68] sm:$0xf]
      %v3643 = vld [vmem:[#allocation2 + $0x6c] sm:$0xf]
      %v3644 = vld [vmem:[#allocation2 + $0x70] sm:$0xf]
      %v3645 = vld [vmem:[#allocation2 + $0x74] sm:$0xf]
      %v3646 = vld [vmem:[#allocation2 + $0x78] sm:$0xf]
      %v3647 = vld [vmem:[#allocation2 + $0x7c] sm:$0xf]
      %v3648 = vld [vmem:[#allocation2 + $0x80] sm:$0xf]
      %v3649 = vld [vmem:[#allocation2 + $0x84] sm:$0xf]
      %v3650 = vld [vmem:[#allocation2 + $0x88] sm:$0xf]
      %v3651 = vld [vmem:[#allocation2 + $0x8c] sm:$0xf]
      %v3652 = vld [vmem:[#allocation2 + $0x90] sm:$0x1]
      %v3653 = vld [vmem:[#allocation2] sm:$0xe]
      %v3690 = vunpack.c.l.b16 %v3616
      %v3691 = vunpack.c.l.b16 %v3617
      %v3692 = vunpack.c.l.b16 %v3618
      %v3693 = vunpack.c.l.b16 %v3619
      %v3694 = vunpack.c.l.b16 %v3620
      %v3695 = vunpack.c.l.b16 %v3621
      %v3696 = vunpack.c.l.b16 %v3622
      %v3697 = vunpack.c.l.b16 %v3623
      %v3698 = vunpack.c.l.b16 %v3624
      %v3699 = vunpack.c.l.b16 %v3625
      %v3700 = vunpack.c.l.b16 %v3626
      %v3701 = vunpack.c.l.b16 %v3627
      %v3702 = vunpack.c.l.b16 %v3628
      %v3703 = vunpack.c.l.b16 %v3629
      %v3704 = vunpack.c.l.b16 %v3630
      %v3705 = vunpack.c.l.b16 %v3631
      %v3706 = vunpack.c.l.b16 %v3632
      %v3707 = vunpack.c.l.b16 %v3633
      %v3708 = vunpack.c.l.b16 %v3634
      %v3709 = vunpack.c.l.b16 %v3635
      %v3710 = vunpack.c.l.b16 %v3636
      %v3711 = vunpack.c.l.b16 %v3637
      %v3712 = vunpack.c.l.b16 %v3638
      %v3713 = vunpack.c.l.b16 %v3639
      %v3714 = vunpack.c.l.b16 %v3640
      %v3715 = vunpack.c.l.b16 %v3641
      %v3716 = vunpack.c.l.b16 %v3642
      %v3717 = vunpack.c.l.b16 %v3643
      %v3718 = vunpack.c.l.b16 %v3644
      %v3719 = vunpack.c.l.b16 %v3645
      %v3720 = vunpack.c.l.b16 %v3646
      %v3721 = vunpack.c.l.b16 %v3647
      %v3722 = vunpack.c.l.b16 %v3648
      %v3723 = vunpack.c.l.b16 %v3649
      %v3724 = vunpack.c.l.b16 %v3650
      %v3725 = vunpack.c.l.b16 %v3651
      %v3726 = vpack.c.b16 %v3691, %v3690
      %v3727 = vpack.c.b16 %v3693, %v3692
      %v3728 = vpack.c.b16 %v3695, %v3694
      %v3729 = vpack.c.b16 %v3697, %v3696
      %v3730 = vpack.c.b16 %v3699, %v3698
      %v3731 = vpack.c.b16 %v3701, %v3700
      %v3732 = vpack.c.b16 %v3703, %v3702
      %v3733 = vpack.c.b16 %v3705, %v3704
      %v3734 = vpack.c.b16 %v3707, %v3706
      %v3735 = vpack.c.b16 %v3709, %v3708
      %v3736 = vpack.c.b16 %v3711, %v3710
      %v3737 = vpack.c.b16 %v3713, %v3712
      %v3738 = vpack.c.b16 %v3715, %v3714
      %v3739 = vpack.c.b16 %v3717, %v3716
      %v3740 = vpack.c.b16 %v3719, %v3718
      %v3741 = vpack.c.b16 %v3721, %v3720
      %v3742 = vpack.c.b16 %v3723, %v3722
      %v3743 = vpack.c.b16 %v3725, %v3724
      %v3745 = vunpack.c.l.b16 %v3652
      %v3746 = vpack.c.b16 %v3745, %v3745
      %v3748 = vshrl.u32 %v3726, 16
      %v3750 = vshll.u32 %v3726, 16
      %v3752 = vrot.slane %v3750, 1
      %v3753 = vor.u32 %v3748, %v3752
      %v3755 = vshll.u32 %v3727, 16
      %v3757 = vrot.slane %v3755, 1
      %v3758 = vsel %vm411, %v3753, %v3757
      %v3759 = vshrl.u32 %v3727, 16
      %v3761 = vor.u32 %v3759, %v3757
      %v3763 = vshll.u32 %v3728, 16
      %v3765 = vrot.slane %v3763, 1
      %v3766 = vsel %vm411, %v3761, %v3765
      %v3767 = vshrl.u32 %v3728, 16
      %v3769 = vor.u32 %v3767, %v3765
      %v3771 = vshll.u32 %v3729, 16
      %v3773 = vrot.slane %v3771, 1
      %v3774 = vsel %vm411, %v3769, %v3773
      %v3775 = vshrl.u32 %v3729, 16
      %v3777 = vor.u32 %v3775, %v3773
      %v3779 = vshll.u32 %v3730, 16
      %v3781 = vrot.slane %v3779, 1
      %v3782 = vsel %vm411, %v3777, %v3781
      %v3783 = vshrl.u32 %v3730, 16
      %v3785 = vor.u32 %v3783, %v3781
      %v3787 = vshll.u32 %v3731, 16
      %v3789 = vrot.slane %v3787, 1
      %v3790 = vsel %vm411, %v3785, %v3789
      %v3791 = vshrl.u32 %v3731, 16
      %v3793 = vor.u32 %v3791, %v3789
      %v3795 = vshll.u32 %v3732, 16
      %v3797 = vrot.slane %v3795, 1
      %v3798 = vsel %vm411, %v3793, %v3797
      %v3799 = vshrl.u32 %v3732, 16
      %v3801 = vor.u32 %v3799, %v3797
      %v3803 = vshll.u32 %v3733, 16
      %v3805 = vrot.slane %v3803, 1
      %v3806 = vsel %vm411, %v3801, %v3805
      %v3807 = vshrl.u32 %v3733, 16
      %v3809 = vor.u32 %v3807, %v3805
      %v3811 = vshll.u32 %v3734, 16
      %v3813 = vrot.slane %v3811, 1
      %v3814 = vsel %vm411, %v3809, %v3813
      %v3815 = vshrl.u32 %v3734, 16
      %v3817 = vor.u32 %v3815, %v3813
      %v3819 = vshll.u32 %v3735, 16
      %v3821 = vrot.slane %v3819, 1
      %v3822 = vsel %vm411, %v3817, %v3821
      %v3823 = vshrl.u32 %v3735, 16
      %v3825 = vor.u32 %v3823, %v3821
      %v3827 = vshll.u32 %v3736, 16
      %v3829 = vrot.slane %v3827, 1
      %v3830 = vsel %vm411, %v3825, %v3829
      %v3831 = vshrl.u32 %v3736, 16
      %v3833 = vor.u32 %v3831, %v3829
      %v3835 = vshll.u32 %v3737, 16
      %v3837 = vrot.slane %v3835, 1
      %v3838 = vsel %vm411, %v3833, %v3837
      %v3839 = vshrl.u32 %v3737, 16
      %v3841 = vor.u32 %v3839, %v3837
      %v3843 = vshll.u32 %v3738, 16
      %v3845 = vrot.slane %v3843, 1
      %v3846 = vsel %vm411, %v3841, %v3845
      %v3847 = vshrl.u32 %v3738, 16
      %v3849 = vor.u32 %v3847, %v3845
      %v3851 = vshll.u32 %v3739, 16
      %v3853 = vrot.slane %v3851, 1
      %v3854 = vsel %vm411, %v3849, %v3853
      %v3855 = vshrl.u32 %v3739, 16
      %v3857 = vor.u32 %v3855, %v3853
      %v3859 = vshll.u32 %v3740, 16
      %v3861 = vrot.slane %v3859, 1
      %v3862 = vsel %vm411, %v3857, %v3861
      %v3863 = vshrl.u32 %v3740, 16
      %v3865 = vor.u32 %v3863, %v3861
      %v3867 = vshll.u32 %v3741, 16
      %v3869 = vrot.slane %v3867, 1
      %v3870 = vsel %vm411, %v3865, %v3869
      %v3871 = vshrl.u32 %v3741, 16
      %v3873 = vor.u32 %v3871, %v3869
      %v3875 = vshll.u32 %v3742, 16
      %v3877 = vrot.slane %v3875, 1
      %v3878 = vsel %vm411, %v3873, %v3877
      %v3879 = vshrl.u32 %v3742, 16
      %v3881 = vor.u32 %v3879, %v3877
      %v3883 = vshll.u32 %v3743, 16
      %v3885 = vrot.slane %v3883, 1
      %v3886 = vsel %vm411, %v3881, %v3885
      %v3887 = vshrl.u32 %v3743, 16
      %v3889 = vor.u32 %v3887, %v3885
      %v3891 = vshll.u32 %v3746, 16
      %v3893 = vrot.slane %v3891, 1
      %v3894 = vsel %vm411, %v3889, %v3893
      %3895 = vrot.lane.b32.xlu0 %v3758, 4
      %v3896 = vpop.permute.xlu0 %3895
      %3897 = vrot.lane.b32.xlu0 %v3766, 4
      %v3898 = vpop.permute.xlu0 %3897
      %3899 = vrot.lane.b32.xlu0 %v3774, 4
      %v3900 = vpop.permute.xlu0 %3899
      %3901 = vrot.lane.b32.xlu0 %v3782, 4
      %v3902 = vpop.permute.xlu0 %3901
      %3903 = vrot.lane.b32.xlu0 %v3790, 4
      %v3904 = vpop.permute.xlu0 %3903
      %3905 = vrot.lane.b32.xlu0 %v3798, 4
      %v3906 = vpop.permute.xlu0 %3905
      %3907 = vrot.lane.b32.xlu0 %v3806, 4
      %v3908 = vpop.permute.xlu0 %3907
      %3909 = vrot.lane.b32.xlu0 %v3814, 4
      %v3910 = vpop.permute.xlu0 %3909
      %3911 = vrot.lane.b32.xlu0 %v3822, 4
      %v3912 = vpop.permute.xlu0 %3911
      %3913 = vrot.lane.b32.xlu0 %v3830, 4
      %v3914 = vpop.permute.xlu0 %3913
      %3915 = vrot.lane.b32.xlu0 %v3838, 4
      %v3916 = vpop.permute.xlu0 %3915
      %3917 = vrot.lane.b32.xlu0 %v3846, 4
      %v3918 = vpop.permute.xlu0 %3917
      %3919 = vrot.lane.b32.xlu0 %v3854, 4
      %v3920 = vpop.permute.xlu0 %3919
      %3921 = vrot.lane.b32.xlu0 %v3862, 4
      %v3922 = vpop.permute.xlu0 %3921
      %3923 = vrot.lane.b32.xlu0 %v3870, 4
      %v3924 = vpop.permute.xlu0 %3923
      %3925 = vrot.lane.b32.xlu0 %v3878, 4
      %v3926 = vpop.permute.xlu0 %3925
      %3927 = vrot.lane.b32.xlu0 %v3886, 4
      %v3928 = vpop.permute.xlu0 %3927
      %3929 = vrot.lane.b32.xlu0 %v3894, 4
      %v3930 = vpop.permute.xlu0 %3929
      %v3932 = vunpack.c.l.b16 %v3653
      %v3933 = vpack.c.b16 %v3691, %v3932
      %v3934 = vrot.slane %v3933, 1
      %v3935 = vrot.slane %v3727, 1
      %v3936 = vsel %vm599, %v3934, %v3935
      %v3937 = vrot.slane %v3728, 1
      %v3938 = vsel %vm599, %v3935, %v3937
      %v3939 = vrot.slane %v3729, 1
      %v3940 = vsel %vm599, %v3937, %v3939
      %v3941 = vrot.slane %v3730, 1
      %v3942 = vsel %vm599, %v3939, %v3941
      %v3943 = vrot.slane %v3731, 1
      %v3944 = vsel %vm599, %v3941, %v3943
      %v3945 = vrot.slane %v3732, 1
      %v3946 = vsel %vm599, %v3943, %v3945
      %v3947 = vrot.slane %v3733, 1
      %v3948 = vsel %vm599, %v3945, %v3947
      %v3949 = vrot.slane %v3734, 1
      %v3950 = vsel %vm599, %v3947, %v3949
      %v3951 = vrot.slane %v3735, 1
      %v3952 = vsel %vm599, %v3949, %v3951
      %v3953 = vrot.slane %v3736, 1
      %v3954 = vsel %vm599, %v3951, %v3953
      %v3955 = vrot.slane %v3737, 1
      %v3956 = vsel %vm599, %v3953, %v3955
      %v3957 = vrot.slane %v3738, 1
      %v3958 = vsel %vm599, %v3955, %v3957
      %v3959 = vrot.slane %v3739, 1
      %v3960 = vsel %vm599, %v3957, %v3959
      %v3961 = vrot.slane %v3740, 1
      %v3962 = vsel %vm599, %v3959, %v3961
      %v3963 = vrot.slane %v3741, 1
      %v3964 = vsel %vm599, %v3961, %v3963
      %v3965 = vrot.slane %v3742, 1
      %v3966 = vsel %vm599, %v3963, %v3965
      %v3967 = vrot.slane %v3743, 1
      %v3968 = vsel %vm599, %v3965, %v3967
      %v3969 = vrot.slane %v3746, 1
      %v3970 = vsel %vm599, %v3967, %v3969
      %3971 = vrot.lane.b32.xlu0 %v3936, 8
      %v3972 = vpop.permute.xlu0 %3971
      %3973 = vrot.lane.b32.xlu0 %v3938, 8
      %v3974 = vpop.permute.xlu0 %3973
      %3975 = vrot.lane.b32.xlu0 %v3940, 8
      %v3976 = vpop.permute.xlu0 %3975
      %3977 = vrot.lane.b32.xlu0 %v3942, 8
      %v3978 = vpop.permute.xlu0 %3977
      %3979 = vrot.lane.b32.xlu0 %v3944, 8
      %v3980 = vpop.permute.xlu0 %3979
      %3981 = vrot.lane.b32.xlu0 %v3946, 8
      %v3982 = vpop.permute.xlu0 %3981
      %3983 = vrot.lane.b32.xlu0 %v3948, 8
      %v3984 = vpop.permute.xlu0 %3983
      %3985 = vrot.lane.b32.xlu0 %v3950, 8
      %v3986 = vpop.permute.xlu0 %3985
      %3987 = vrot.lane.b32.xlu0 %v3952, 8
      %v3988 = vpop.permute.xlu0 %3987
      %3989 = vrot.lane.b32.xlu0 %v3954, 8
      %v3990 = vpop.permute.xlu0 %3989
      %3991 = vrot.lane.b32.xlu0 %v3956, 8
      %v3992 = vpop.permute.xlu0 %3991
      %3993 = vrot.lane.b32.xlu0 %v3958, 8
      %v3994 = vpop.permute.xlu0 %3993
      %3995 = vrot.lane.b32.xlu0 %v3960, 8
      %v3996 = vpop.permute.xlu0 %3995
      %3997 = vrot.lane.b32.xlu0 %v3962, 8
      %v3998 = vpop.permute.xlu0 %3997
      %3999 = vrot.lane.b32.xlu0 %v3964, 8
      %v4000 = vpop.permute.xlu0 %3999
      %4001 = vrot.lane.b32.xlu0 %v3966, 8
      %v4002 = vpop.permute.xlu0 %4001
      %4003 = vrot.lane.b32.xlu0 %v3968, 8
      %v4004 = vpop.permute.xlu0 %4003
      %4005 = vrot.lane.b32.xlu0 %v3970, 8
      %v4006 = vpop.permute.xlu0 %4005
      %v4008 = vsel %vm673, %v3726, %v3896
      %v4010 = vsel %vm673, %v3727, %v3898
      %v4012 = vsel %vm673, %v3728, %v3900
      %v4014 = vsel %vm673, %v3729, %v3902
      %v4016 = vsel %vm673, %v3730, %v3904
      %v4018 = vsel %vm673, %v3731, %v3906
      %v4020 = vsel %vm673, %v3732, %v3908
      %v4022 = vsel %vm673, %v3733, %v3910
      %v4024 = vsel %vm673, %v3734, %v3912
      %v4026 = vsel %vm673, %v3735, %v3914
      %v4028 = vsel %vm673, %v3736, %v3916
      %v4030 = vsel %vm673, %v3737, %v3918
      %v4032 = vsel %vm673, %v3738, %v3920
      %v4034 = vsel %vm673, %v3739, %v3922
      %v4036 = vsel %vm673, %v3740, %v3924
      %v4038 = vsel %vm673, %v3741, %v3926
      %v4040 = vsel %vm673, %v3742, %v3928
      %v4042 = vsel %vm673, %v3743, %v3930
      %v4044 = vsel %vm710, %v4008, %v3972
      %v4046 = vsel %vm710, %v4010, %v3974
      %v4048 = vsel %vm710, %v4012, %v3976
      %v4050 = vsel %vm710, %v4014, %v3978
      %v4052 = vsel %vm710, %v4016, %v3980
      %v4054 = vsel %vm710, %v4018, %v3982
      %v4056 = vsel %vm710, %v4020, %v3984
      %v4058 = vsel %vm710, %v4022, %v3986
      %v4060 = vsel %vm710, %v4024, %v3988
      %v4062 = vsel %vm710, %v4026, %v3990
      %v4064 = vsel %vm710, %v4028, %v3992
      %v4066 = vsel %vm710, %v4030, %v3994
      %v4068 = vsel %vm710, %v4032, %v3996
      %v4070 = vsel %vm710, %v4034, %v3998
      %v4072 = vsel %vm710, %v4036, %v4000
      %v4074 = vsel %vm710, %v4038, %v4002
      %v4076 = vsel %vm710, %v4040, %v4004
      %v4078 = vsel %vm710, %v4042, %v4006
      %v4079 = vld [vmem:[%s4] sm:$0xf]
      %v4080 = vld [vmem:[%s4 + $0x4] sm:$0x3]
      %v4081 = vld [vmem:[#allocation2 + $0x8] sm:$0xe]
      %v4082 = vld [vmem:[#allocation2 + $0x90] sm:$0xf]
      %v4083 = vld [vmem:[#allocation2 + $0x94] sm:$0xf]
      %v4084 = vld [vmem:[#allocation2 + $0x98] sm:$0x1]
      %v4085 = vld [vmem:[#allocation2 + $0x98] sm:$0x3]
      %v4086 = vld [vmem:[#allocation2 + $0x8] sm:$0xc]
      %v4091 = vunpack.c.l.b16 %v4081
      %v4092 = vunpack.c.l.b16 %v4082
      %v4093 = vunpack.c.l.b16 %v4083
      %v4094 = vunpack.c.l.b16 %v4084
      %v4095 = vpack.c.b16 %v3693, %v4091
      %v4096 = vpack.c.b16 %v4093, %v4092
      %v4097 = vpack.c.b16 %v4094, %v4094
      %v4099 = vunpack.c.l.b16 %v4085
      %v4100 = vpack.c.b16 %v4099, %v4099
      %v4102 = vshrl.u32 %v4095, 16
      %v4104 = vshll.u32 %v4095, 16
      %v4106 = vrot.slane %v4104, 1
      %v4107 = vor.u32 %v4102, %v4106
      %v4108 = vsel %vm411, %v4107, %v3765
      %v4110 = vshll.u32 %v4096, 16
      %v4112 = vrot.slane %v4110, 1
      %v4113 = vsel %vm411, %v3889, %v4112
      %v4114 = vshrl.u32 %v4096, 16
      %v4116 = vor.u32 %v4114, %v4112
      %v4118 = vshll.u32 %v4100, 16
      %v4120 = vrot.slane %v4118, 1
      %v4121 = vsel %vm411, %v4116, %v4120
      %v4122 = vshrl.u32 %v4100, 16
      %v4124 = vor.u32 %v4122, %v4120
      %4125 = vrot.lane.b32.xlu0 %v4108, 4
      %v4126 = vpop.permute.xlu0 %4125
      %4127 = vrot.lane.b32.xlu0 %v4113, 4
      %v4128 = vpop.permute.xlu0 %4127
      %4129 = vrot.lane.b32.xlu0 %v4121, 4
      %v4130 = vpop.permute.xlu0 %4129
      %4131 = vrot.lane.b32.xlu0 %v4124, 4
      %v4132 = vpop.permute.xlu0 %4131
      %v4134 = vunpack.c.l.b16 %v4086
      %v4135 = vpack.c.b16 %v3693, %v4134
      %v4136 = vrot.slane %v4135, 1
      %v4137 = vsel %vm599, %v4136, %v3937
      %v4138 = vrot.slane %v4096, 1
      %v4139 = vsel %vm599, %v3967, %v4138
      %v4140 = vrot.slane %v4100, 1
      %v4141 = vsel %vm599, %v4138, %v4140
      %4142 = vrot.lane.b32.xlu0 %v4137, 8
      %v4143 = vpop.permute.xlu0 %4142
      %4144 = vrot.lane.b32.xlu0 %v4139, 8
      %v4145 = vpop.permute.xlu0 %4144
      %4146 = vrot.lane.b32.xlu0 %v4141, 8
      %v4147 = vpop.permute.xlu0 %4146
      %4148 = vrot.lane.b32.xlu0 %v4140, 8
      %v4149 = vpop.permute.xlu0 %4148
      %v4151 = vsel %vm673, %v4095, %v4126
      %v4153 = vsel %vm673, %v3743, %v4128
      %v4155 = vsel %vm673, %v4096, %v4130
      %v4158 = vsel %vm673, %v4097, %v4132
      %v4160 = vsel %vm710, %v4151, %v4143
      %v4162 = vsel %vm710, %v4153, %v4145
      %v4164 = vsel %vm710, %v4155, %v4147
      %v4166 = vsel %vm710, %v4158, %v4149
      %s4167 = scalar_lea.vmem %s4, 8
      %v4168 = vld [vmem:[%s4167] sm:$0xf]
      %v4169 = vld [vmem:[%s4167 + $0x4] sm:$0x3]
      %v4189 = vrot.slane %v4160, 1
      %v4190 = vrot.slane %v4048, 1
      %v4191 = vsel %vm599, %v4189, %v4190
      %v4192 = vrot.slane %v4050, 1
      %v4193 = vsel %vm599, %v4190, %v4192
      %v4194 = vrot.slane %v4052, 1
      %v4195 = vsel %vm599, %v4192, %v4194
      %v4196 = vrot.slane %v4054, 1
      %v4197 = vsel %vm599, %v4194, %v4196
      %v4198 = vrot.slane %v4056, 1
      %v4199 = vsel %vm599, %v4196, %v4198
      %v4200 = vrot.slane %v4058, 1
      %v4201 = vsel %vm599, %v4198, %v4200
      %v4202 = vrot.slane %v4060, 1
      %v4203 = vsel %vm599, %v4200, %v4202
      %v4204 = vrot.slane %v4062, 1
      %v4205 = vsel %vm599, %v4202, %v4204
      %v4206 = vrot.slane %v4064, 1
      %v4207 = vsel %vm599, %v4204, %v4206
      %v4208 = vrot.slane %v4066, 1
      %v4209 = vsel %vm599, %v4206, %v4208
      %v4210 = vrot.slane %v4068, 1
      %v4211 = vsel %vm599, %v4208, %v4210
      %v4212 = vrot.slane %v4070, 1
      %v4213 = vsel %vm599, %v4210, %v4212
      %v4214 = vrot.slane %v4072, 1
      %v4215 = vsel %vm599, %v4212, %v4214
      %v4216 = vrot.slane %v4074, 1
      %v4217 = vsel %vm599, %v4214, %v4216
      %v4218 = vrot.slane %v4076, 1
      %v4219 = vsel %vm599, %v4216, %v4218
      %v4220 = vrot.slane %v4162, 1
      %v4221 = vsel %vm599, %v4218, %v4220
      %v4222 = vrot.slane %v4164, 1
      %v4223 = vsel %vm599, %v4220, %v4222
      %v4224 = vrot.slane %v4166, 1
      %v4225 = vsel %vm599, %v4222, %v4224
      %v4228 = vunpack.c.l.b16 %v4168
      %v4229 = vunpack.c.l.b16 %v4169
      %v4230 = vpack.c.b16 %v4229, %v4228
      %v4232 = vsel %vm899, %v4191, 0
      %v4235 = vsel %vm899, %v4193, 0
      %v4238 = vsel %vm899, %v4195, 0
      %v4241 = vsel %vm899, %v4197, 0
      %v4244 = vsel %vm899, %v4199, 0
      %v4247 = vsel %vm899, %v4201, 0
      %v4250 = vsel %vm899, %v4203, 0
      %v4253 = vsel %vm899, %v4205, 0
      %v4256 = vsel %vm899, %v4207, 0
      %v4259 = vsel %vm899, %v4209, 0
      %v4262 = vsel %vm899, %v4211, 0
      %v4265 = vsel %vm899, %v4213, 0
      %v4268 = vsel %vm899, %v4215, 0
      %v4271 = vsel %vm899, %v4217, 0
      %v4274 = vsel %vm899, %v4219, 0
      %v4277 = vsel %vm899, %v4221, 0
      %v4280 = vsel %vm899, %v4223, 0
      %v4283 = vsel %vm899, %v4225, 0
      %v4286 = vsel %vm954, %v4230, 0
      %4288 = vmatprep.subr.bf16.mxu0 0
      %4289 = vmatpush1.bf16.msra.mxu0 0
      %4290 = vmatprep.subr.bf16.mxu0 0
      %4291 = vmatpush1.bf16.msra.mxu0 0
      %4292 = vmatprep.subr.bf16.mxu0 0
      %4293 = vmatpush1.bf16.msra.mxu0 0
      %4294 = vmatprep.subr.bf16.mxu0 0
      %4295 = vmatpush1.bf16.msra.mxu0 0
      %4296 = vmatprep.subr.bf16.mxu0 0
      %4297 = vmatpush1.bf16.msra.mxu0 0
      %4298 = vmatprep.subr.bf16.mxu0 0
      %4299 = vmatpush1.bf16.msra.mxu0 0
      %4300 = vmatprep.subr.bf16.mxu0 0
      %4301 = vmatpush1.bf16.msra.mxu0 0
      %4302 = vmatprep.subr.bf16.mxu0 0
      %4303 = vmatpush1.bf16.msra.mxu0 %v4286
      %4304 = vmatprep.subr.bf16.mxu0 0
      %4305 = vmatpush2.bf16.msra.mxu0 0
      %4306 = vmatprep.subr.bf16.mxu0 0
      %4307 = vmatpush2.bf16.msra.mxu0 0
      %4308 = vmatprep.subr.bf16.mxu0 0
      %4309 = vmatpush2.bf16.msra.mxu0 0
      %4310 = vmatprep.subr.bf16.mxu0 0
      %4311 = vmatpush2.bf16.msra.mxu0 0
      %4312 = vmatprep.subr.bf16.mxu0 0
      %4313 = vmatpush2.bf16.msra.mxu0 0
      %4314 = vmatprep.subr.bf16.mxu0 0
      %4315 = vmatpush2.bf16.msra.mxu0 0
      %4316 = vmatprep.subr.bf16.mxu0 0
      %4317 = vmatpush2.bf16.msra.mxu0 0
      %4318 = vmatprep.subr.bf16.mxu0 0
      %4319 = vmatpush2.bf16.msra.mxu0 0
      %4320 = vmatprep.mubr.bf16.mxu0 0
      %4321 = vmatmul.mubr.bf16.gmra.mxu0 %v4232
      %v4322 = vpop.f32.mrf.mxu0
      %v4323 = vadd.f32 0.0, %v4322
      %v4324 = vpop.f32.mrf.mxu0
      %v4325 = vpop.f32.mrf.mxu0
      %v4326 = vadd.f32 0.0, %v4325
      %v4327 = vpop.f32.mrf.mxu0
      %4328 = vmatprep.mubr.bf16.mxu0 0
      %4329 = vmatmul.mubr.bf16.gmra.mxu0 %v4235
      %v4330 = vpop.f32.mrf.mxu0
      %v4331 = vadd.f32 0.0, %v4330
      %v4332 = vpop.f32.mrf.mxu0
      %v4333 = vpop.f32.mrf.mxu0
      %v4334 = vadd.f32 0.0, %v4333
      %v4335 = vpop.f32.mrf.mxu0
      %4336 = vmatprep.mubr.bf16.mxu0 0
      %4337 = vmatmul.mubr.bf16.gmra.mxu0 %v4238
      %v4338 = vpop.f32.mrf.mxu0
      %v4339 = vadd.f32 0.0, %v4338
      %v4340 = vpop.f32.mrf.mxu0
      %v4341 = vpop.f32.mrf.mxu0
      %v4342 = vadd.f32 0.0, %v4341
      %v4343 = vpop.f32.mrf.mxu0
      %4344 = vmatprep.mubr.bf16.mxu0 0
      %4345 = vmatmul.mubr.bf16.gmra.mxu0 %v4241
      %v4346 = vpop.f32.mrf.mxu0
      %v4347 = vadd.f32 0.0, %v4346
      %v4348 = vpop.f32.mrf.mxu0
      %v4349 = vpop.f32.mrf.mxu0
      %v4350 = vadd.f32 0.0, %v4349
      %v4351 = vpop.f32.mrf.mxu0
      %4352 = vmatprep.mubr.bf16.mxu0 0
      %4353 = vmatmul.mubr.bf16.gmra.mxu0 %v4244
      %v4354 = vpop.f32.mrf.mxu0
      %v4355 = vadd.f32 0.0, %v4354
      %v4356 = vpop.f32.mrf.mxu0
      %v4357 = vpop.f32.mrf.mxu0
      %v4358 = vadd.f32 0.0, %v4357
      %v4359 = vpop.f32.mrf.mxu0
      %4360 = vmatprep.mubr.bf16.mxu0 0
      %4361 = vmatmul.mubr.bf16.gmra.mxu0 %v4247
      %v4362 = vpop.f32.mrf.mxu0
      %v4363 = vadd.f32 0.0, %v4362
      %v4364 = vpop.f32.mrf.mxu0
      %v4365 = vpop.f32.mrf.mxu0
      %v4366 = vadd.f32 0.0, %v4365
      %v4367 = vpop.f32.mrf.mxu0
      %4368 = vmatprep.mubr.bf16.mxu0 0
      %4369 = vmatmul.mubr.bf16.gmra.mxu0 %v4250
      %v4370 = vpop.f32.mrf.mxu0
      %v4371 = vadd.f32 0.0, %v4370
      %v4372 = vpop.f32.mrf.mxu0
      %v4373 = vpop.f32.mrf.mxu0
      %v4374 = vadd.f32 0.0, %v4373
      %v4375 = vpop.f32.mrf.mxu0
      %4376 = vmatprep.mubr.bf16.mxu0 0
      %4377 = vmatmul.mubr.bf16.gmra.mxu0 %v4253
      %v4378 = vpop.f32.mrf.mxu0
      %v4379 = vadd.f32 0.0, %v4378
      %v4380 = vpop.f32.mrf.mxu0
      %v4381 = vpop.f32.mrf.mxu0
      %v4382 = vadd.f32 0.0, %v4381
      %v4383 = vpop.f32.mrf.mxu0
      %4384 = vmatprep.mubr.bf16.mxu0 0
      %4385 = vmatmul.mubr.bf16.gmra.mxu0 %v4256
      %v4386 = vpop.f32.mrf.mxu0
      %v4387 = vadd.f32 0.0, %v4386
      %v4388 = vpop.f32.mrf.mxu0
      %v4389 = vpop.f32.mrf.mxu0
      %v4390 = vadd.f32 0.0, %v4389
      %v4391 = vpop.f32.mrf.mxu0
      %4392 = vmatprep.mubr.bf16.mxu0 0
      %4393 = vmatmul.mubr.bf16.gmra.mxu0 %v4259
      %v4394 = vpop.f32.mrf.mxu0
      %v4395 = vadd.f32 0.0, %v4394
      %v4396 = vpop.f32.mrf.mxu0
      %v4397 = vpop.f32.mrf.mxu0
      %v4398 = vadd.f32 0.0, %v4397
      %v4399 = vpop.f32.mrf.mxu0
      %4400 = vmatprep.mubr.bf16.mxu0 0
      %4401 = vmatmul.mubr.bf16.gmra.mxu0 %v4262
      %v4402 = vpop.f32.mrf.mxu0
      %v4403 = vadd.f32 0.0, %v4402
      %v4404 = vpop.f32.mrf.mxu0
      %v4405 = vpop.f32.mrf.mxu0
      %v4406 = vadd.f32 0.0, %v4405
      %v4407 = vpop.f32.mrf.mxu0
      %4408 = vmatprep.mubr.bf16.mxu0 0
      %4409 = vmatmul.mubr.bf16.gmra.mxu0 %v4265
      %v4410 = vpop.f32.mrf.mxu0
      %v4411 = vadd.f32 0.0, %v4410
      %v4412 = vpop.f32.mrf.mxu0
      %v4413 = vpop.f32.mrf.mxu0
      %v4414 = vadd.f32 0.0, %v4413
      %v4415 = vpop.f32.mrf.mxu0
      %4416 = vmatprep.mubr.bf16.mxu0 0
      %4417 = vmatmul.mubr.bf16.gmra.mxu0 %v4268
      %v4418 = vpop.f32.mrf.mxu0
      %v4419 = vadd.f32 0.0, %v4418
      %v4420 = vpop.f32.mrf.mxu0
      %v4421 = vpop.f32.mrf.mxu0
      %v4422 = vadd.f32 0.0, %v4421
      %v4423 = vpop.f32.mrf.mxu0
      %4424 = vmatprep.mubr.bf16.mxu0 0
      %4425 = vmatmul.mubr.bf16.gmra.mxu0 %v4271
      %v4426 = vpop.f32.mrf.mxu0
      %v4427 = vadd.f32 0.0, %v4426
      %v4428 = vpop.f32.mrf.mxu0
      %v4429 = vpop.f32.mrf.mxu0
      %v4430 = vadd.f32 0.0, %v4429
      %v4431 = vpop.f32.mrf.mxu0
      %4432 = vmatprep.mubr.bf16.mxu0 0
      %4433 = vmatmul.mubr.bf16.gmra.mxu0 %v4274
      %v4434 = vpop.f32.mrf.mxu0
      %v4435 = vadd.f32 0.0, %v4434
      %v4436 = vpop.f32.mrf.mxu0
      %v4437 = vpop.f32.mrf.mxu0
      %v4438 = vadd.f32 0.0, %v4437
      %v4439 = vpop.f32.mrf.mxu0
      %4440 = vmatprep.mubr.bf16.mxu0 0
      %4441 = vmatmul.mubr.bf16.gmra.mxu0 %v4277
      %v4442 = vpop.f32.mrf.mxu0
      %v4443 = vadd.f32 0.0, %v4442
      %v4444 = vpop.f32.mrf.mxu0
      %v4445 = vpop.f32.mrf.mxu0
      %v4446 = vadd.f32 0.0, %v4445
      %v4447 = vpop.f32.mrf.mxu0
      %4448 = vmatprep.mubr.bf16.mxu0 0
      %4449 = vmatmul.mubr.bf16.gmra.mxu0 %v4280
      %v4450 = vpop.f32.mrf.mxu0
      %v4451 = vadd.f32 0.0, %v4450
      %v4452 = vpop.f32.mrf.mxu0
      %v4453 = vpop.f32.mrf.mxu0
      %v4454 = vadd.f32 0.0, %v4453
      %v4455 = vpop.f32.mrf.mxu0
      %4456 = vmatprep.mubr.bf16.mxu0 0
      %4457 = vmatmul.mubr.bf16.gmra.mxu0 %v4283
      %v4458 = vpop.f32.mrf.mxu0
      %v4459 = vadd.f32 0.0, %v4458
      %v4460 = vpop.f32.mrf.mxu0
      %v4461 = vpop.f32.mrf.mxu0
      %v4462 = vadd.f32 0.0, %v4461
      %v4463 = vpop.f32.mrf.mxu0
      %4464 = vdwg.mxu0
      %v4467 = vunpack.c.l.b16 %v4079
      %v4468 = vunpack.c.l.b16 %v4080
      %v4469 = vpack.c.b16 %v4468, %v4467
      %v4470 = vsel %vm899, %v4044, 0
      %v4472 = vsel %vm899, %v4046, 0
      %v4474 = vsel %vm899, %v4048, 0
      %v4476 = vsel %vm899, %v4050, 0
      %v4478 = vsel %vm899, %v4052, 0
      %v4480 = vsel %vm899, %v4054, 0
      %v4482 = vsel %vm899, %v4056, 0
      %v4484 = vsel %vm899, %v4058, 0
      %v4486 = vsel %vm899, %v4060, 0
      %v4488 = vsel %vm899, %v4062, 0
      %v4490 = vsel %vm899, %v4064, 0
      %v4492 = vsel %vm899, %v4066, 0
      %v4494 = vsel %vm899, %v4068, 0
      %v4496 = vsel %vm899, %v4070, 0
      %v4498 = vsel %vm899, %v4072, 0
      %v4500 = vsel %vm899, %v4074, 0
      %v4502 = vsel %vm899, %v4076, 0
      %v4504 = vsel %vm899, %v4078, 0
      %v4507 = vsel %vm954, %v4469, 0
      %4509 = vmatprep.subr.bf16.mxu0 0
      %4510 = vmatpush1.bf16.msra.mxu0 0
      %4511 = vmatprep.subr.bf16.mxu0 0
      %4512 = vmatpush1.bf16.msra.mxu0 0
      %4513 = vmatprep.subr.bf16.mxu0 0
      %4514 = vmatpush1.bf16.msra.mxu0 0
      %4515 = vmatprep.subr.bf16.mxu0 0
      %4516 = vmatpush1.bf16.msra.mxu0 0
      %4517 = vmatprep.subr.bf16.mxu0 0
      %4518 = vmatpush1.bf16.msra.mxu0 0
      %4519 = vmatprep.subr.bf16.mxu0 0
      %4520 = vmatpush1.bf16.msra.mxu0 0
      %4521 = vmatprep.subr.bf16.mxu0 0
      %4522 = vmatpush1.bf16.msra.mxu0 0
      %4523 = vmatprep.subr.bf16.mxu0 0
      %4524 = vmatpush1.bf16.msra.mxu0 %v4507
      %4525 = vmatprep.subr.bf16.mxu0 0
      %4526 = vmatpush2.bf16.msra.mxu0 0
      %4527 = vmatprep.subr.bf16.mxu0 0
      %4528 = vmatpush2.bf16.msra.mxu0 0
      %4529 = vmatprep.subr.bf16.mxu0 0
      %4530 = vmatpush2.bf16.msra.mxu0 0
      %4531 = vmatprep.subr.bf16.mxu0 0
      %4532 = vmatpush2.bf16.msra.mxu0 0
      %4533 = vmatprep.subr.bf16.mxu0 0
      %4534 = vmatpush2.bf16.msra.mxu0 0
      %4535 = vmatprep.subr.bf16.mxu0 0
      %4536 = vmatpush2.bf16.msra.mxu0 0
      %4537 = vmatprep.subr.bf16.mxu0 0
      %4538 = vmatpush2.bf16.msra.mxu0 0
      %4539 = vmatprep.subr.bf16.mxu0 0
      %4540 = vmatpush2.bf16.msra.mxu0 0
      %4541 = vmatprep.mubr.bf16.mxu0 0
      %4542 = vmatmul.mubr.bf16.gmra.mxu0 %v4470
      %v4543 = vpop.f32.mrf.mxu0
      %v4544 = vadd.f32 %v4323, %v4543
      %v4545 = vpop.f32.mrf.mxu0
      %v4546 = vpop.f32.mrf.mxu0
      %v4547 = vadd.f32 %v4326, %v4546
      %v4548 = vpop.f32.mrf.mxu0
      %4549 = vmatprep.mubr.bf16.mxu0 0
      %4550 = vmatmul.mubr.bf16.gmra.mxu0 %v4472
      %v4551 = vpop.f32.mrf.mxu0
      %v4552 = vadd.f32 %v4331, %v4551
      %v4553 = vpop.f32.mrf.mxu0
      %v4554 = vpop.f32.mrf.mxu0
      %v4555 = vadd.f32 %v4334, %v4554
      %v4556 = vpop.f32.mrf.mxu0
      %4557 = vmatprep.mubr.bf16.mxu0 0
      %4558 = vmatmul.mubr.bf16.gmra.mxu0 %v4474
      %v4559 = vpop.f32.mrf.mxu0
      %v4560 = vadd.f32 %v4339, %v4559
      %v4561 = vpop.f32.mrf.mxu0
      %v4562 = vpop.f32.mrf.mxu0
      %v4563 = vadd.f32 %v4342, %v4562
      %v4564 = vpop.f32.mrf.mxu0
      %4565 = vmatprep.mubr.bf16.mxu0 0
      %4566 = vmatmul.mubr.bf16.gmra.mxu0 %v4476
      %v4567 = vpop.f32.mrf.mxu0
      %v4568 = vadd.f32 %v4347, %v4567
      %v4569 = vpop.f32.mrf.mxu0
      %v4570 = vpop.f32.mrf.mxu0
      %v4571 = vadd.f32 %v4350, %v4570
      %v4572 = vpop.f32.mrf.mxu0
      %4573 = vmatprep.mubr.bf16.mxu0 0
      %4574 = vmatmul.mubr.bf16.gmra.mxu0 %v4478
      %v4575 = vpop.f32.mrf.mxu0
      %v4576 = vadd.f32 %v4355, %v4575
      %v4577 = vpop.f32.mrf.mxu0
      %v4578 = vpop.f32.mrf.mxu0
      %v4579 = vadd.f32 %v4358, %v4578
      %v4580 = vpop.f32.mrf.mxu0
      %4581 = vmatprep.mubr.bf16.mxu0 0
      %4582 = vmatmul.mubr.bf16.gmra.mxu0 %v4480
      %v4583 = vpop.f32.mrf.mxu0
      %v4584 = vadd.f32 %v4363, %v4583
      %v4585 = vpop.f32.mrf.mxu0
      %v4586 = vpop.f32.mrf.mxu0
      %v4587 = vadd.f32 %v4366, %v4586
      %v4588 = vpop.f32.mrf.mxu0
      %4589 = vmatprep.mubr.bf16.mxu0 0
      %4590 = vmatmul.mubr.bf16.gmra.mxu0 %v4482
      %v4591 = vpop.f32.mrf.mxu0
      %v4592 = vadd.f32 %v4371, %v4591
      %v4593 = vpop.f32.mrf.mxu0
      %v4594 = vpop.f32.mrf.mxu0
      %v4595 = vadd.f32 %v4374, %v4594
      %v4596 = vpop.f32.mrf.mxu0
      %4597 = vmatprep.mubr.bf16.mxu0 0
      %4598 = vmatmul.mubr.bf16.gmra.mxu0 %v4484
      %v4599 = vpop.f32.mrf.mxu0
      %v4600 = vadd.f32 %v4379, %v4599
      %v4601 = vpop.f32.mrf.mxu0
      %v4602 = vpop.f32.mrf.mxu0
      %v4603 = vadd.f32 %v4382, %v4602
      %v4604 = vpop.f32.mrf.mxu0
      %4605 = vmatprep.mubr.bf16.mxu0 0
      %4606 = vmatmul.mubr.bf16.gmra.mxu0 %v4486
      %v4607 = vpop.f32.mrf.mxu0
      %v4608 = vadd.f32 %v4387, %v4607
      %v4609 = vpop.f32.mrf.mxu0
      %v4610 = vpop.f32.mrf.mxu0
      %v4611 = vadd.f32 %v4390, %v4610
      %v4612 = vpop.f32.mrf.mxu0
      %4613 = vmatprep.mubr.bf16.mxu0 0
      %4614 = vmatmul.mubr.bf16.gmra.mxu0 %v4488
      %v4615 = vpop.f32.mrf.mxu0
      %v4616 = vadd.f32 %v4395, %v4615
      %v4617 = vpop.f32.mrf.mxu0
      %v4618 = vpop.f32.mrf.mxu0
      %v4619 = vadd.f32 %v4398, %v4618
      %v4620 = vpop.f32.mrf.mxu0
      %4621 = vmatprep.mubr.bf16.mxu0 0
      %4622 = vmatmul.mubr.bf16.gmra.mxu0 %v4490
      %v4623 = vpop.f32.mrf.mxu0
      %v4624 = vadd.f32 %v4403, %v4623
      %v4625 = vpop.f32.mrf.mxu0
      %v4626 = vpop.f32.mrf.mxu0
      %v4627 = vadd.f32 %v4406, %v4626
      %v4628 = vpop.f32.mrf.mxu0
      %4629 = vmatprep.mubr.bf16.mxu0 0
      %4630 = vmatmul.mubr.bf16.gmra.mxu0 %v4492
      %v4631 = vpop.f32.mrf.mxu0
      %v4632 = vadd.f32 %v4411, %v4631
      %v4633 = vpop.f32.mrf.mxu0
      %v4634 = vpop.f32.mrf.mxu0
      %v4635 = vadd.f32 %v4414, %v4634
      %v4636 = vpop.f32.mrf.mxu0
      %4637 = vmatprep.mubr.bf16.mxu0 0
      %4638 = vmatmul.mubr.bf16.gmra.mxu0 %v4494
      %v4639 = vpop.f32.mrf.mxu0
      %v4640 = vadd.f32 %v4419, %v4639
      %v4641 = vpop.f32.mrf.mxu0
      %v4642 = vpop.f32.mrf.mxu0
      %v4643 = vadd.f32 %v4422, %v4642
      %v4644 = vpop.f32.mrf.mxu0
      %4645 = vmatprep.mubr.bf16.mxu0 0
      %4646 = vmatmul.mubr.bf16.gmra.mxu0 %v4496
      %v4647 = vpop.f32.mrf.mxu0
      %v4648 = vadd.f32 %v4427, %v4647
      %v4649 = vpop.f32.mrf.mxu0
      %v4650 = vpop.f32.mrf.mxu0
      %v4651 = vadd.f32 %v4430, %v4650
      %v4652 = vpop.f32.mrf.mxu0
      %4653 = vmatprep.mubr.bf16.mxu0 0
      %4654 = vmatmul.mubr.bf16.gmra.mxu0 %v4498
      %v4655 = vpop.f32.mrf.mxu0
      %v4656 = vadd.f32 %v4435, %v4655
      %v4657 = vpop.f32.mrf.mxu0
      %v4658 = vpop.f32.mrf.mxu0
      %v4659 = vadd.f32 %v4438, %v4658
      %v4660 = vpop.f32.mrf.mxu0
      %4661 = vmatprep.mubr.bf16.mxu0 0
      %4662 = vmatmul.mubr.bf16.gmra.mxu0 %v4500
      %v4663 = vpop.f32.mrf.mxu0
      %v4664 = vadd.f32 %v4443, %v4663
      %v4665 = vpop.f32.mrf.mxu0
      %v4666 = vpop.f32.mrf.mxu0
      %v4667 = vadd.f32 %v4446, %v4666
      %v4668 = vpop.f32.mrf.mxu0
      %4669 = vmatprep.mubr.bf16.mxu0 0
      %4670 = vmatmul.mubr.bf16.gmra.mxu0 %v4502
      %v4671 = vpop.f32.mrf.mxu0
      %v4672 = vadd.f32 %v4451, %v4671
      %v4673 = vpop.f32.mrf.mxu0
      %v4674 = vpop.f32.mrf.mxu0
      %v4675 = vadd.f32 %v4454, %v4674
      %v4676 = vpop.f32.mrf.mxu0
      %4677 = vmatprep.mubr.bf16.mxu0 0
      %4678 = vmatmul.mubr.bf16.gmra.mxu0 %v4504
      %v4679 = vpop.f32.mrf.mxu0
      %v4680 = vadd.f32 %v4459, %v4679
      %v4681 = vpop.f32.mrf.mxu0
      %v4682 = vpop.f32.mrf.mxu0
      %v4683 = vadd.f32 %v4462, %v4682
      %v4684 = vpop.f32.mrf.mxu0
      %4685 = vdwg.mxu0
      %v4686 = vld [vmem:[#allocation2 + $0x10] sm:$0xc]
      %v4687 = vld [vmem:[#allocation2 + $0x14] sm:$0xf]
      %v4688 = vld [vmem:[#allocation2 + $0x18] sm:$0xf]
      %v4689 = vld [vmem:[#allocation2 + $0x1c] sm:$0xf]
      %v4690 = vld [vmem:[#allocation2 + $0x20] sm:$0xf]
      %v4691 = vld [vmem:[#allocation2 + $0x24] sm:$0xf]
      %v4692 = vld [vmem:[#allocation2 + $0x28] sm:$0xf]
      %v4693 = vld [vmem:[#allocation2 + $0x2c] sm:$0xf]
      %v4694 = vld [vmem:[#allocation2 + $0x30] sm:$0xf]
      %v4695 = vld [vmem:[#allocation2 + $0x34] sm:$0xf]
      %v4696 = vld [vmem:[#allocation2 + $0x38] sm:$0xf]
      %v4697 = vld [vmem:[#allocation2 + $0x3c] sm:$0xf]
      %v4698 = vld [vmem:[#allocation2 + $0x40] sm:$0xf]
      %v4699 = vld [vmem:[#allocation2 + $0x44] sm:$0xf]
      %v4700 = vld [vmem:[#allocation2 + $0x48] sm:$0xf]
      %v4701 = vld [vmem:[#allocation2 + $0x4c] sm:$0xf]
      %v4702 = vld [vmem:[#allocation2 + $0x50] sm:$0xf]
      %v4703 = vld [vmem:[#allocation2 + $0x54] sm:$0xf]
      %v4704 = vld [vmem:[#allocation2 + $0x58] sm:$0xf]
      %v4705 = vld [vmem:[#allocation2 + $0x5c] sm:$0xf]
      %v4706 = vld [vmem:[#allocation2 + $0x60] sm:$0xf]
      %v4707 = vld [vmem:[#allocation2 + $0x64] sm:$0xf]
      %v4708 = vld [vmem:[#allocation2 + $0x68] sm:$0xf]
      %v4709 = vld [vmem:[#allocation2 + $0x6c] sm:$0xf]
      %v4710 = vld [vmem:[#allocation2 + $0x70] sm:$0xf]
      %v4711 = vld [vmem:[#allocation2 + $0x74] sm:$0xf]
      %v4712 = vld [vmem:[#allocation2 + $0x78] sm:$0xf]
      %v4713 = vld [vmem:[#allocation2 + $0x7c] sm:$0xf]
      %v4714 = vld [vmem:[#allocation2 + $0x80] sm:$0xf]
      %v4715 = vld [vmem:[#allocation2 + $0x84] sm:$0xf]
      %v4716 = vld [vmem:[#allocation2 + $0x88] sm:$0xf]
      %v4717 = vld [vmem:[#allocation2 + $0x8c] sm:$0xf]
      %v4718 = vld [vmem:[#allocation2 + $0x90] sm:$0xf]
      %v4719 = vld [vmem:[#allocation2 + $0x94] sm:$0xf]
      %v4720 = vld [vmem:[#allocation2 + $0x98] sm:$0xf]
      %v4721 = vld [vmem:[#allocation2 + $0x9c] sm:$0xf]
      %v4722 = vld [vmem:[#allocation2 + $0xa0] sm:$0x3]
      %v4723 = vld [vmem:[#allocation2 + $0xa0] sm:$0x7]
      %v4724 = vld [vmem:[#allocation2 + $0x10] sm:$0x8]
      %v4762 = vunpack.c.l.b16 %v4686
      %v4763 = vunpack.c.l.b16 %v4687
      %v4764 = vunpack.c.l.b16 %v4688
      %v4765 = vunpack.c.l.b16 %v4689
      %v4766 = vunpack.c.l.b16 %v4690
      %v4767 = vunpack.c.l.b16 %v4691
      %v4768 = vunpack.c.l.b16 %v4692
      %v4769 = vunpack.c.l.b16 %v4693
      %v4770 = vunpack.c.l.b16 %v4694
      %v4771 = vunpack.c.l.b16 %v4695
      %v4772 = vunpack.c.l.b16 %v4696
      %v4773 = vunpack.c.l.b16 %v4697
      %v4774 = vunpack.c.l.b16 %v4698
      %v4775 = vunpack.c.l.b16 %v4699
      %v4776 = vunpack.c.l.b16 %v4700
      %v4777 = vunpack.c.l.b16 %v4701
      %v4778 = vunpack.c.l.b16 %v4702
      %v4779 = vunpack.c.l.b16 %v4703
      %v4780 = vunpack.c.l.b16 %v4704
      %v4781 = vunpack.c.l.b16 %v4705
      %v4782 = vunpack.c.l.b16 %v4706
      %v4783 = vunpack.c.l.b16 %v4707
      %v4784 = vunpack.c.l.b16 %v4708
      %v4785 = vunpack.c.l.b16 %v4709
      %v4786 = vunpack.c.l.b16 %v4710
      %v4787 = vunpack.c.l.b16 %v4711
      %v4788 = vunpack.c.l.b16 %v4712
      %v4789 = vunpack.c.l.b16 %v4713
      %v4790 = vunpack.c.l.b16 %v4714
      %v4791 = vunpack.c.l.b16 %v4715
      %v4792 = vunpack.c.l.b16 %v4716
      %v4793 = vunpack.c.l.b16 %v4717
      %v4794 = vunpack.c.l.b16 %v4718
      %v4795 = vunpack.c.l.b16 %v4719
      %v4796 = vunpack.c.l.b16 %v4720
      %v4797 = vunpack.c.l.b16 %v4721
      %v4798 = vunpack.c.l.b16 %v4722
      %v4799 = vpack.c.b16 %v4763, %v4762
      %v4800 = vpack.c.b16 %v4765, %v4764
      %v4801 = vpack.c.b16 %v4767, %v4766
      %v4802 = vpack.c.b16 %v4769, %v4768
      %v4803 = vpack.c.b16 %v4771, %v4770
      %v4804 = vpack.c.b16 %v4773, %v4772
      %v4805 = vpack.c.b16 %v4775, %v4774
      %v4806 = vpack.c.b16 %v4777, %v4776
      %v4807 = vpack.c.b16 %v4779, %v4778
      %v4808 = vpack.c.b16 %v4781, %v4780
      %v4809 = vpack.c.b16 %v4783, %v4782
      %v4810 = vpack.c.b16 %v4785, %v4784
      %v4811 = vpack.c.b16 %v4787, %v4786
      %v4812 = vpack.c.b16 %v4789, %v4788
      %v4813 = vpack.c.b16 %v4791, %v4790
      %v4814 = vpack.c.b16 %v4793, %v4792
      %v4815 = vpack.c.b16 %v4795, %v4794
      %v4816 = vpack.c.b16 %v4797, %v4796
      %v4817 = vpack.c.b16 %v4798, %v4798
      %v4819 = vunpack.c.l.b16 %v4723
      %v4820 = vpack.c.b16 %v4819, %v4819
      %v4822 = vshrl.u32 %v4799, 16
      %v4824 = vshll.u32 %v4799, 16
      %v4826 = vrot.slane %v4824, 1
      %v4827 = vor.u32 %v4822, %v4826
      %v4829 = vshll.u32 %v4800, 16
      %v4831 = vrot.slane %v4829, 1
      %v4832 = vsel %vm411, %v4827, %v4831
      %v4833 = vshrl.u32 %v4800, 16
      %v4835 = vor.u32 %v4833, %v4831
      %v4837 = vshll.u32 %v4801, 16
      %v4839 = vrot.slane %v4837, 1
      %v4840 = vsel %vm411, %v4835, %v4839
      %v4841 = vshrl.u32 %v4801, 16
      %v4843 = vor.u32 %v4841, %v4839
      %v4845 = vshll.u32 %v4802, 16
      %v4847 = vrot.slane %v4845, 1
      %v4848 = vsel %vm411, %v4843, %v4847
      %v4849 = vshrl.u32 %v4802, 16
      %v4851 = vor.u32 %v4849, %v4847
      %v4853 = vshll.u32 %v4803, 16
      %v4855 = vrot.slane %v4853, 1
      %v4856 = vsel %vm411, %v4851, %v4855
      %v4857 = vshrl.u32 %v4803, 16
      %v4859 = vor.u32 %v4857, %v4855
      %v4861 = vshll.u32 %v4804, 16
      %v4863 = vrot.slane %v4861, 1
      %v4864 = vsel %vm411, %v4859, %v4863
      %v4865 = vshrl.u32 %v4804, 16
      %v4867 = vor.u32 %v4865, %v4863
      %v4869 = vshll.u32 %v4805, 16
      %v4871 = vrot.slane %v4869, 1
      %v4872 = vsel %vm411, %v4867, %v4871
      %v4873 = vshrl.u32 %v4805, 16
      %v4875 = vor.u32 %v4873, %v4871
      %v4877 = vshll.u32 %v4806, 16
      %v4879 = vrot.slane %v4877, 1
      %v4880 = vsel %vm411, %v4875, %v4879
      %v4881 = vshrl.u32 %v4806, 16
      %v4883 = vor.u32 %v4881, %v4879
      %v4885 = vshll.u32 %v4807, 16
      %v4887 = vrot.slane %v4885, 1
      %v4888 = vsel %vm411, %v4883, %v4887
      %v4889 = vshrl.u32 %v4807, 16
      %v4891 = vor.u32 %v4889, %v4887
      %v4893 = vshll.u32 %v4808, 16
      %v4895 = vrot.slane %v4893, 1
      %v4896 = vsel %vm411, %v4891, %v4895
      %v4897 = vshrl.u32 %v4808, 16
      %v4899 = vor.u32 %v4897, %v4895
      %v4901 = vshll.u32 %v4809, 16
      %v4903 = vrot.slane %v4901, 1
      %v4904 = vsel %vm411, %v4899, %v4903
      %v4905 = vshrl.u32 %v4809, 16
      %v4907 = vor.u32 %v4905, %v4903
      %v4909 = vshll.u32 %v4810, 16
      %v4911 = vrot.slane %v4909, 1
      %v4912 = vsel %vm411, %v4907, %v4911
      %v4913 = vshrl.u32 %v4810, 16
      %v4915 = vor.u32 %v4913, %v4911
      %v4917 = vshll.u32 %v4811, 16
      %v4919 = vrot.slane %v4917, 1
      %v4920 = vsel %vm411, %v4915, %v4919
      %v4921 = vshrl.u32 %v4811, 16
      %v4923 = vor.u32 %v4921, %v4919
      %v4925 = vshll.u32 %v4812, 16
      %v4927 = vrot.slane %v4925, 1
      %v4928 = vsel %vm411, %v4923, %v4927
      %v4929 = vshrl.u32 %v4812, 16
      %v4931 = vor.u32 %v4929, %v4927
      %v4933 = vshll.u32 %v4813, 16
      %v4935 = vrot.slane %v4933, 1
      %v4936 = vsel %vm411, %v4931, %v4935
      %v4937 = vshrl.u32 %v4813, 16
      %v4939 = vor.u32 %v4937, %v4935
      %v4941 = vshll.u32 %v4814, 16
      %v4943 = vrot.slane %v4941, 1
      %v4944 = vsel %vm411, %v4939, %v4943
      %v4945 = vshrl.u32 %v4814, 16
      %v4947 = vor.u32 %v4945, %v4943
      %v4949 = vshll.u32 %v4815, 16
      %v4951 = vrot.slane %v4949, 1
      %v4952 = vsel %vm411, %v4947, %v4951
      %v4953 = vshrl.u32 %v4815, 16
      %v4955 = vor.u32 %v4953, %v4951
      %v4957 = vshll.u32 %v4816, 16
      %v4959 = vrot.slane %v4957, 1
      %v4960 = vsel %vm411, %v4955, %v4959
      %v4961 = vshrl.u32 %v4816, 16
      %v4963 = vor.u32 %v4961, %v4959
      %v4965 = vshll.u32 %v4820, 16
      %v4967 = vrot.slane %v4965, 1
      %v4968 = vsel %vm411, %v4963, %v4967
      %v4969 = vshrl.u32 %v4820, 16
      %v4971 = vor.u32 %v4969, %v4967
      %4972 = vrot.lane.b32.xlu0 %v4832, 4
      %v4973 = vpop.permute.xlu0 %4972
      %4974 = vrot.lane.b32.xlu0 %v4840, 4
      %v4975 = vpop.permute.xlu0 %4974
      %4976 = vrot.lane.b32.xlu0 %v4848, 4
      %v4977 = vpop.permute.xlu0 %4976
      %4978 = vrot.lane.b32.xlu0 %v4856, 4
      %v4979 = vpop.permute.xlu0 %4978
      %4980 = vrot.lane.b32.xlu0 %v4864, 4
      %v4981 = vpop.permute.xlu0 %4980
      %4982 = vrot.lane.b32.xlu0 %v4872, 4
      %v4983 = vpop.permute.xlu0 %4982
      %4984 = vrot.lane.b32.xlu0 %v4880, 4
      %v4985 = vpop.permute.xlu0 %4984
      %4986 = vrot.lane.b32.xlu0 %v4888, 4
      %v4987 = vpop.permute.xlu0 %4986
      %4988 = vrot.lane.b32.xlu0 %v4896, 4
      %v4989 = vpop.permute.xlu0 %4988
      %4990 = vrot.lane.b32.xlu0 %v4904, 4
      %v4991 = vpop.permute.xlu0 %4990
      %4992 = vrot.lane.b32.xlu0 %v4912, 4
      %v4993 = vpop.permute.xlu0 %4992
      %4994 = vrot.lane.b32.xlu0 %v4920, 4
      %v4995 = vpop.permute.xlu0 %4994
      %4996 = vrot.lane.b32.xlu0 %v4928, 4
      %v4997 = vpop.permute.xlu0 %4996
      %4998 = vrot.lane.b32.xlu0 %v4936, 4
      %v4999 = vpop.permute.xlu0 %4998
      %5000 = vrot.lane.b32.xlu0 %v4944, 4
      %v5001 = vpop.permute.xlu0 %5000
      %5002 = vrot.lane.b32.xlu0 %v4952, 4
      %v5003 = vpop.permute.xlu0 %5002
      %5004 = vrot.lane.b32.xlu0 %v4960, 4
      %v5005 = vpop.permute.xlu0 %5004
      %5006 = vrot.lane.b32.xlu0 %v4968, 4
      %v5007 = vpop.permute.xlu0 %5006
      %5008 = vrot.lane.b32.xlu0 %v4971, 4
      %v5009 = vpop.permute.xlu0 %5008
      %v5011 = vunpack.c.l.b16 %v4724
      %v5012 = vpack.c.b16 %v4763, %v5011
      %v5013 = vrot.slane %v5012, 1
      %v5014 = vrot.slane %v4800, 1
      %v5015 = vsel %vm599, %v5013, %v5014
      %v5016 = vrot.slane %v4801, 1
      %v5017 = vsel %vm599, %v5014, %v5016
      %v5018 = vrot.slane %v4802, 1
      %v5019 = vsel %vm599, %v5016, %v5018
      %v5020 = vrot.slane %v4803, 1
      %v5021 = vsel %vm599, %v5018, %v5020
      %v5022 = vrot.slane %v4804, 1
      %v5023 = vsel %vm599, %v5020, %v5022
      %v5024 = vrot.slane %v4805, 1
      %v5025 = vsel %vm599, %v5022, %v5024
      %v5026 = vrot.slane %v4806, 1
      %v5027 = vsel %vm599, %v5024, %v5026
      %v5028 = vrot.slane %v4807, 1
      %v5029 = vsel %vm599, %v5026, %v5028
      %v5030 = vrot.slane %v4808, 1
      %v5031 = vsel %vm599, %v5028, %v5030
      %v5032 = vrot.slane %v4809, 1
      %v5033 = vsel %vm599, %v5030, %v5032
      %v5034 = vrot.slane %v4810, 1
      %v5035 = vsel %vm599, %v5032, %v5034
      %v5036 = vrot.slane %v4811, 1
      %v5037 = vsel %vm599, %v5034, %v5036
      %v5038 = vrot.slane %v4812, 1
      %v5039 = vsel %vm599, %v5036, %v5038
      %v5040 = vrot.slane %v4813, 1
      %v5041 = vsel %vm599, %v5038, %v5040
      %v5042 = vrot.slane %v4814, 1
      %v5043 = vsel %vm599, %v5040, %v5042
      %v5044 = vrot.slane %v4815, 1
      %v5045 = vsel %vm599, %v5042, %v5044
      %v5046 = vrot.slane %v4816, 1
      %v5047 = vsel %vm599, %v5044, %v5046
      %v5048 = vrot.slane %v4820, 1
      %v5049 = vsel %vm599, %v5046, %v5048
      %5050 = vrot.lane.b32.xlu0 %v5015, 8
      %v5051 = vpop.permute.xlu0 %5050
      %5052 = vrot.lane.b32.xlu0 %v5017, 8
      %v5053 = vpop.permute.xlu0 %5052
      %5054 = vrot.lane.b32.xlu0 %v5019, 8
      %v5055 = vpop.permute.xlu0 %5054
      %5056 = vrot.lane.b32.xlu0 %v5021, 8
      %v5057 = vpop.permute.xlu0 %5056
      %5058 = vrot.lane.b32.xlu0 %v5023, 8
      %v5059 = vpop.permute.xlu0 %5058
      %5060 = vrot.lane.b32.xlu0 %v5025, 8
      %v5061 = vpop.permute.xlu0 %5060
      %5062 = vrot.lane.b32.xlu0 %v5027, 8
      %v5063 = vpop.permute.xlu0 %5062
      %5064 = vrot.lane.b32.xlu0 %v5029, 8
      %v5065 = vpop.permute.xlu0 %5064
      %5066 = vrot.lane.b32.xlu0 %v5031, 8
      %v5067 = vpop.permute.xlu0 %5066
      %5068 = vrot.lane.b32.xlu0 %v5033, 8
      %v5069 = vpop.permute.xlu0 %5068
      %5070 = vrot.lane.b32.xlu0 %v5035, 8
      %v5071 = vpop.permute.xlu0 %5070
      %5072 = vrot.lane.b32.xlu0 %v5037, 8
      %v5073 = vpop.permute.xlu0 %5072
      %5074 = vrot.lane.b32.xlu0 %v5039, 8
      %v5075 = vpop.permute.xlu0 %5074
      %5076 = vrot.lane.b32.xlu0 %v5041, 8
      %v5077 = vpop.permute.xlu0 %5076
      %5078 = vrot.lane.b32.xlu0 %v5043, 8
      %v5079 = vpop.permute.xlu0 %5078
      %5080 = vrot.lane.b32.xlu0 %v5045, 8
      %v5081 = vpop.permute.xlu0 %5080
      %5082 = vrot.lane.b32.xlu0 %v5047, 8
      %v5083 = vpop.permute.xlu0 %5082
      %5084 = vrot.lane.b32.xlu0 %v5049, 8
      %v5085 = vpop.permute.xlu0 %5084
      %5086 = vrot.lane.b32.xlu0 %v5048, 8
      %v5087 = vpop.permute.xlu0 %5086
      %v5089 = vsel %vm673, %v4799, %v4973
      %v5091 = vsel %vm673, %v4800, %v4975
      %v5093 = vsel %vm673, %v4801, %v4977
      %v5095 = vsel %vm673, %v4802, %v4979
      %v5097 = vsel %vm673, %v4803, %v4981
      %v5099 = vsel %vm673, %v4804, %v4983
      %v5101 = vsel %vm673, %v4805, %v4985
      %v5103 = vsel %vm673, %v4806, %v4987
      %v5105 = vsel %vm673, %v4807, %v4989
      %v5107 = vsel %vm673, %v4808, %v4991
      %v5109 = vsel %vm673, %v4809, %v4993
      %v5111 = vsel %vm673, %v4810, %v4995
      %v5113 = vsel %vm673, %v4811, %v4997
      %v5115 = vsel %vm673, %v4812, %v4999
      %v5117 = vsel %vm673, %v4813, %v5001
      %v5119 = vsel %vm673, %v4814, %v5003
      %v5121 = vsel %vm673, %v4815, %v5005
      %v5123 = vsel %vm673, %v4816, %v5007
      %v5126 = vsel %vm673, %v4817, %v5009
      %v5128 = vsel %vm710, %v5089, %v5051
      %v5130 = vsel %vm710, %v5091, %v5053
      %v5132 = vsel %vm710, %v5093, %v5055
      %v5134 = vsel %vm710, %v5095, %v5057
      %v5136 = vsel %vm710, %v5097, %v5059
      %v5138 = vsel %vm710, %v5099, %v5061
      %v5140 = vsel %vm710, %v5101, %v5063
      %v5142 = vsel %vm710, %v5103, %v5065
      %v5144 = vsel %vm710, %v5105, %v5067
      %v5146 = vsel %vm710, %v5107, %v5069
      %v5148 = vsel %vm710, %v5109, %v5071
      %v5150 = vsel %vm710, %v5111, %v5073
      %v5152 = vsel %vm710, %v5113, %v5075
      %v5154 = vsel %vm710, %v5115, %v5077
      %v5156 = vsel %vm710, %v5117, %v5079
      %v5158 = vsel %vm710, %v5119, %v5081
      %v5160 = vsel %vm710, %v5121, %v5083
      %v5162 = vsel %vm710, %v5123, %v5085
      %v5164 = vsel %vm710, %v5126, %v5087
      %s5165 = scalar_lea.vmem %s4, 16
      %v5166 = vld [vmem:[%s5165] sm:$0xf]
      %v5167 = vld [vmem:[%s5165 + $0x4] sm:$0x3]
      %v5187 = vrot.slane %v5128, 2
      %v5188 = vrot.slane %v5130, 2
      %v5189 = vsel %vm1857, %v5187, %v5188
      %v5190 = vrot.slane %v5132, 2
      %v5191 = vsel %vm1857, %v5188, %v5190
      %v5192 = vrot.slane %v5134, 2
      %v5193 = vsel %vm1857, %v5190, %v5192
      %v5194 = vrot.slane %v5136, 2
      %v5195 = vsel %vm1857, %v5192, %v5194
      %v5196 = vrot.slane %v5138, 2
      %v5197 = vsel %vm1857, %v5194, %v5196
      %v5198 = vrot.slane %v5140, 2
      %v5199 = vsel %vm1857, %v5196, %v5198
      %v5200 = vrot.slane %v5142, 2
      %v5201 = vsel %vm1857, %v5198, %v5200
      %v5202 = vrot.slane %v5144, 2
      %v5203 = vsel %vm1857, %v5200, %v5202
      %v5204 = vrot.slane %v5146, 2
      %v5205 = vsel %vm1857, %v5202, %v5204
      %v5206 = vrot.slane %v5148, 2
      %v5207 = vsel %vm1857, %v5204, %v5206
      %v5208 = vrot.slane %v5150, 2
      %v5209 = vsel %vm1857, %v5206, %v5208
      %v5210 = vrot.slane %v5152, 2
      %v5211 = vsel %vm1857, %v5208, %v5210
      %v5212 = vrot.slane %v5154, 2
      %v5213 = vsel %vm1857, %v5210, %v5212
      %v5214 = vrot.slane %v5156, 2
      %v5215 = vsel %vm1857, %v5212, %v5214
      %v5216 = vrot.slane %v5158, 2
      %v5217 = vsel %vm1857, %v5214, %v5216
      %v5218 = vrot.slane %v5160, 2
      %v5219 = vsel %vm1857, %v5216, %v5218
      %v5220 = vrot.slane %v5162, 2
      %v5221 = vsel %vm1857, %v5218, %v5220
      %v5222 = vrot.slane %v5164, 2
      %v5223 = vsel %vm1857, %v5220, %v5222
      %v5226 = vunpack.c.l.b16 %v5166
      %v5227 = vunpack.c.l.b16 %v5167
      %v5228 = vpack.c.b16 %v5227, %v5226
      %v5230 = vsel %vm899, %v5189, 0
      %v5233 = vsel %vm899, %v5191, 0
      %v5236 = vsel %vm899, %v5193, 0
      %v5239 = vsel %vm899, %v5195, 0
      %v5242 = vsel %vm899, %v5197, 0
      %v5245 = vsel %vm899, %v5199, 0
      %v5248 = vsel %vm899, %v5201, 0
      %v5251 = vsel %vm899, %v5203, 0
      %v5254 = vsel %vm899, %v5205, 0
      %v5257 = vsel %vm899, %v5207, 0
      %v5260 = vsel %vm899, %v5209, 0
      %v5263 = vsel %vm899, %v5211, 0
      %v5266 = vsel %vm899, %v5213, 0
      %v5269 = vsel %vm899, %v5215, 0
      %v5272 = vsel %vm899, %v5217, 0
      %v5275 = vsel %vm899, %v5219, 0
      %v5278 = vsel %vm899, %v5221, 0
      %v5281 = vsel %vm899, %v5223, 0
      %v5284 = vsel %vm954, %v5228, 0
      %5286 = vmatprep.subr.bf16.mxu0 0
      %5287 = vmatpush1.bf16.msra.mxu0 0
      %5288 = vmatprep.subr.bf16.mxu0 0
      %5289 = vmatpush1.bf16.msra.mxu0 0
      %5290 = vmatprep.subr.bf16.mxu0 0
      %5291 = vmatpush1.bf16.msra.mxu0 0
      %5292 = vmatprep.subr.bf16.mxu0 0
      %5293 = vmatpush1.bf16.msra.mxu0 0
      %5294 = vmatprep.subr.bf16.mxu0 0
      %5295 = vmatpush1.bf16.msra.mxu0 0
      %5296 = vmatprep.subr.bf16.mxu0 0
      %5297 = vmatpush1.bf16.msra.mxu0 0
      %5298 = vmatprep.subr.bf16.mxu0 0
      %5299 = vmatpush1.bf16.msra.mxu0 0
      %5300 = vmatprep.subr.bf16.mxu0 0
      %5301 = vmatpush1.bf16.msra.mxu0 %v5284
      %5302 = vmatprep.subr.bf16.mxu0 0
      %5303 = vmatpush2.bf16.msra.mxu0 0
      %5304 = vmatprep.subr.bf16.mxu0 0
      %5305 = vmatpush2.bf16.msra.mxu0 0
      %5306 = vmatprep.subr.bf16.mxu0 0
      %5307 = vmatpush2.bf16.msra.mxu0 0
      %5308 = vmatprep.subr.bf16.mxu0 0
      %5309 = vmatpush2.bf16.msra.mxu0 0
      %5310 = vmatprep.subr.bf16.mxu0 0
      %5311 = vmatpush2.bf16.msra.mxu0 0
      %5312 = vmatprep.subr.bf16.mxu0 0
      %5313 = vmatpush2.bf16.msra.mxu0 0
      %5314 = vmatprep.subr.bf16.mxu0 0
      %5315 = vmatpush2.bf16.msra.mxu0 0
      %5316 = vmatprep.subr.bf16.mxu0 0
      %5317 = vmatpush2.bf16.msra.mxu0 0
      %5318 = vmatprep.mubr.bf16.mxu0 0
      %5319 = vmatmul.mubr.bf16.gmra.mxu0 %v5230
      %v5320 = vpop.f32.mrf.mxu0
      %v5321 = vadd.f32 0.0, %v5320
      %v5322 = vpop.f32.mrf.mxu0
      %v5323 = vpop.f32.mrf.mxu0
      %v5324 = vadd.f32 0.0, %v5323
      %v5325 = vpop.f32.mrf.mxu0
      %5326 = vmatprep.mubr.bf16.mxu0 0
      %5327 = vmatmul.mubr.bf16.gmra.mxu0 %v5233
      %v5328 = vpop.f32.mrf.mxu0
      %v5329 = vadd.f32 0.0, %v5328
      %v5330 = vpop.f32.mrf.mxu0
      %v5331 = vpop.f32.mrf.mxu0
      %v5332 = vadd.f32 0.0, %v5331
      %v5333 = vpop.f32.mrf.mxu0
      %5334 = vmatprep.mubr.bf16.mxu0 0
      %5335 = vmatmul.mubr.bf16.gmra.mxu0 %v5236
      %v5336 = vpop.f32.mrf.mxu0
      %v5337 = vadd.f32 0.0, %v5336
      %v5338 = vpop.f32.mrf.mxu0
      %v5339 = vpop.f32.mrf.mxu0
      %v5340 = vadd.f32 0.0, %v5339
      %v5341 = vpop.f32.mrf.mxu0
      %5342 = vmatprep.mubr.bf16.mxu0 0
      %5343 = vmatmul.mubr.bf16.gmra.mxu0 %v5239
      %v5344 = vpop.f32.mrf.mxu0
      %v5345 = vadd.f32 0.0, %v5344
      %v5346 = vpop.f32.mrf.mxu0
      %v5347 = vpop.f32.mrf.mxu0
      %v5348 = vadd.f32 0.0, %v5347
      %v5349 = vpop.f32.mrf.mxu0
      %5350 = vmatprep.mubr.bf16.mxu0 0
      %5351 = vmatmul.mubr.bf16.gmra.mxu0 %v5242
      %v5352 = vpop.f32.mrf.mxu0
      %v5353 = vadd.f32 0.0, %v5352
      %v5354 = vpop.f32.mrf.mxu0
      %v5355 = vpop.f32.mrf.mxu0
      %v5356 = vadd.f32 0.0, %v5355
      %v5357 = vpop.f32.mrf.mxu0
      %5358 = vmatprep.mubr.bf16.mxu0 0
      %5359 = vmatmul.mubr.bf16.gmra.mxu0 %v5245
      %v5360 = vpop.f32.mrf.mxu0
      %v5361 = vadd.f32 0.0, %v5360
      %v5362 = vpop.f32.mrf.mxu0
      %v5363 = vpop.f32.mrf.mxu0
      %v5364 = vadd.f32 0.0, %v5363
      %v5365 = vpop.f32.mrf.mxu0
      %5366 = vmatprep.mubr.bf16.mxu0 0
      %5367 = vmatmul.mubr.bf16.gmra.mxu0 %v5248
      %v5368 = vpop.f32.mrf.mxu0
      %v5369 = vadd.f32 0.0, %v5368
      %v5370 = vpop.f32.mrf.mxu0
      %v5371 = vpop.f32.mrf.mxu0
      %v5372 = vadd.f32 0.0, %v5371
      %v5373 = vpop.f32.mrf.mxu0
      %5374 = vmatprep.mubr.bf16.mxu0 0
      %5375 = vmatmul.mubr.bf16.gmra.mxu0 %v5251
      %v5376 = vpop.f32.mrf.mxu0
      %v5377 = vadd.f32 0.0, %v5376
      %v5378 = vpop.f32.mrf.mxu0
      %v5379 = vpop.f32.mrf.mxu0
      %v5380 = vadd.f32 0.0, %v5379
      %v5381 = vpop.f32.mrf.mxu0
      %5382 = vmatprep.mubr.bf16.mxu0 0
      %5383 = vmatmul.mubr.bf16.gmra.mxu0 %v5254
      %v5384 = vpop.f32.mrf.mxu0
      %v5385 = vadd.f32 0.0, %v5384
      %v5386 = vpop.f32.mrf.mxu0
      %v5387 = vpop.f32.mrf.mxu0
      %v5388 = vadd.f32 0.0, %v5387
      %v5389 = vpop.f32.mrf.mxu0
      %5390 = vmatprep.mubr.bf16.mxu0 0
      %5391 = vmatmul.mubr.bf16.gmra.mxu0 %v5257
      %v5392 = vpop.f32.mrf.mxu0
      %v5393 = vadd.f32 0.0, %v5392
      %v5394 = vpop.f32.mrf.mxu0
      %v5395 = vpop.f32.mrf.mxu0
      %v5396 = vadd.f32 0.0, %v5395
      %v5397 = vpop.f32.mrf.mxu0
      %5398 = vmatprep.mubr.bf16.mxu0 0
      %5399 = vmatmul.mubr.bf16.gmra.mxu0 %v5260
      %v5400 = vpop.f32.mrf.mxu0
      %v5401 = vadd.f32 0.0, %v5400
      %v5402 = vpop.f32.mrf.mxu0
      %v5403 = vpop.f32.mrf.mxu0
      %v5404 = vadd.f32 0.0, %v5403
      %v5405 = vpop.f32.mrf.mxu0
      %5406 = vmatprep.mubr.bf16.mxu0 0
      %5407 = vmatmul.mubr.bf16.gmra.mxu0 %v5263
      %v5408 = vpop.f32.mrf.mxu0
      %v5409 = vadd.f32 0.0, %v5408
      %v5410 = vpop.f32.mrf.mxu0
      %v5411 = vpop.f32.mrf.mxu0
      %v5412 = vadd.f32 0.0, %v5411
      %v5413 = vpop.f32.mrf.mxu0
      %5414 = vmatprep.mubr.bf16.mxu0 0
      %5415 = vmatmul.mubr.bf16.gmra.mxu0 %v5266
      %v5416 = vpop.f32.mrf.mxu0
      %v5417 = vadd.f32 0.0, %v5416
      %v5418 = vpop.f32.mrf.mxu0
      %v5419 = vpop.f32.mrf.mxu0
      %v5420 = vadd.f32 0.0, %v5419
      %v5421 = vpop.f32.mrf.mxu0
      %5422 = vmatprep.mubr.bf16.mxu0 0
      %5423 = vmatmul.mubr.bf16.gmra.mxu0 %v5269
      %v5424 = vpop.f32.mrf.mxu0
      %v5425 = vadd.f32 0.0, %v5424
      %v5426 = vpop.f32.mrf.mxu0
      %v5427 = vpop.f32.mrf.mxu0
      %v5428 = vadd.f32 0.0, %v5427
      %v5429 = vpop.f32.mrf.mxu0
      %5430 = vmatprep.mubr.bf16.mxu0 0
      %5431 = vmatmul.mubr.bf16.gmra.mxu0 %v5272
      %v5432 = vpop.f32.mrf.mxu0
      %v5433 = vadd.f32 0.0, %v5432
      %v5434 = vpop.f32.mrf.mxu0
      %v5435 = vpop.f32.mrf.mxu0
      %v5436 = vadd.f32 0.0, %v5435
      %v5437 = vpop.f32.mrf.mxu0
      %5438 = vmatprep.mubr.bf16.mxu0 0
      %5439 = vmatmul.mubr.bf16.gmra.mxu0 %v5275
      %v5440 = vpop.f32.mrf.mxu0
      %v5441 = vadd.f32 0.0, %v5440
      %v5442 = vpop.f32.mrf.mxu0
      %v5443 = vpop.f32.mrf.mxu0
      %v5444 = vadd.f32 0.0, %v5443
      %v5445 = vpop.f32.mrf.mxu0
      %5446 = vmatprep.mubr.bf16.mxu0 0
      %5447 = vmatmul.mubr.bf16.gmra.mxu0 %v5278
      %v5448 = vpop.f32.mrf.mxu0
      %v5449 = vadd.f32 0.0, %v5448
      %v5450 = vpop.f32.mrf.mxu0
      %v5451 = vpop.f32.mrf.mxu0
      %v5452 = vadd.f32 0.0, %v5451
      %v5453 = vpop.f32.mrf.mxu0
      %5454 = vmatprep.mubr.bf16.mxu0 0
      %5455 = vmatmul.mubr.bf16.gmra.mxu0 %v5281
      %v5456 = vpop.f32.mrf.mxu0
      %v5457 = vadd.f32 0.0, %v5456
      %v5458 = vpop.f32.mrf.mxu0
      %v5459 = vpop.f32.mrf.mxu0
      %v5460 = vadd.f32 0.0, %v5459
      %v5461 = vpop.f32.mrf.mxu0
      %5462 = vdwg.mxu0
      %v5463 = vadd.f32 %v4544, %v5321
      %v5464 = vadd.f32 %v4547, %v5324
      %v5465 = vadd.f32 %v4552, %v5329
      %v5466 = vadd.f32 %v4555, %v5332
      %v5467 = vadd.f32 %v4560, %v5337
      %v5468 = vadd.f32 %v4563, %v5340
      %v5469 = vadd.f32 %v4568, %v5345
      %v5470 = vadd.f32 %v4571, %v5348
      %v5471 = vadd.f32 %v4576, %v5353
      %v5472 = vadd.f32 %v4579, %v5356
      %v5473 = vadd.f32 %v4584, %v5361
      %v5474 = vadd.f32 %v4587, %v5364
      %v5475 = vadd.f32 %v4592, %v5369
      %v5476 = vadd.f32 %v4595, %v5372
      %v5477 = vadd.f32 %v4600, %v5377
      %v5478 = vadd.f32 %v4603, %v5380
      %v5479 = vadd.f32 %v4608, %v5385
      %v5480 = vadd.f32 %v4611, %v5388
      %v5481 = vadd.f32 %v4616, %v5393
      %v5482 = vadd.f32 %v4619, %v5396
      %v5483 = vadd.f32 %v4624, %v5401
      %v5484 = vadd.f32 %v4627, %v5404
      %v5485 = vadd.f32 %v4632, %v5409
      %v5486 = vadd.f32 %v4635, %v5412
      %v5487 = vadd.f32 %v4640, %v5417
      %v5488 = vadd.f32 %v4643, %v5420
      %v5489 = vadd.f32 %v4648, %v5425
      %v5490 = vadd.f32 %v4651, %v5428
      %v5491 = vadd.f32 %v4656, %v5433
      %v5492 = vadd.f32 %v4659, %v5436
      %v5493 = vadd.f32 %v4664, %v5441
      %v5494 = vadd.f32 %v4667, %v5444
      %v5495 = vadd.f32 %v4672, %v5449
      %v5496 = vadd.f32 %v4675, %v5452
      %v5497 = vadd.f32 %v4680, %v5457
      %v5498 = vadd.f32 %v4683, %v5460
      %v5499 = vld [vmem:[%s5] sm:$0x1]
      %v5501 = vlaneseq
      %v5502 = vshrl.u32 %v5501, 7
      %v5503 = vsub.s32 0, %v5502
      %v5504 = vrot.slane %v5499, %v5503
      %v5506 = vmul.f32 %v5463, %v5504
      %v5507 = vmul.f32 %v5464, %v5504
      %v5508 = vmul.f32 %v5465, %v5504
      %v5509 = vmul.f32 %v5466, %v5504
      %v5510 = vmul.f32 %v5467, %v5504
      %v5511 = vmul.f32 %v5468, %v5504
      %v5512 = vmul.f32 %v5469, %v5504
      %v5513 = vmul.f32 %v5470, %v5504
      %v5514 = vmul.f32 %v5471, %v5504
      %v5515 = vmul.f32 %v5472, %v5504
      %v5516 = vmul.f32 %v5473, %v5504
      %v5517 = vmul.f32 %v5474, %v5504
      %v5518 = vmul.f32 %v5475, %v5504
      %v5519 = vmul.f32 %v5476, %v5504
      %v5520 = vmul.f32 %v5477, %v5504
      %v5521 = vmul.f32 %v5478, %v5504
      %v5522 = vmul.f32 %v5479, %v5504
      %v5523 = vmul.f32 %v5480, %v5504
      %v5524 = vmul.f32 %v5481, %v5504
      %v5525 = vmul.f32 %v5482, %v5504
      %v5526 = vmul.f32 %v5483, %v5504
      %v5527 = vmul.f32 %v5484, %v5504
      %v5528 = vmul.f32 %v5485, %v5504
      %v5529 = vmul.f32 %v5486, %v5504
      %v5530 = vmul.f32 %v5487, %v5504
      %v5531 = vmul.f32 %v5488, %v5504
      %v5532 = vmul.f32 %v5489, %v5504
      %v5533 = vmul.f32 %v5490, %v5504
      %v5534 = vmul.f32 %v5491, %v5504
      %v5535 = vmul.f32 %v5492, %v5504
      %v5536 = vmul.f32 %v5493, %v5504
      %v5537 = vmul.f32 %v5494, %v5504
      %v5538 = vmul.f32 %v5495, %v5504
      %v5539 = vmul.f32 %v5496, %v5504
      %v5540 = vmul.f32 %v5497, %v5504
      %v5541 = vmul.f32 %v5498, %v5504
      %v5542 = vld [vmem:[%s6] sm:$0x1]
      %v5544 = vlaneseq
      %v5545 = vshrl.u32 %v5544, 7
      %v5546 = vsub.s32 0, %v5545
      %v5547 = vrot.slane %v5542, %v5546
      %v5549 = vadd.f32 %v5506, %v5547
      %v5550 = vadd.f32 %v5507, %v5547
      %v5551 = vadd.f32 %v5508, %v5547
      %v5552 = vadd.f32 %v5509, %v5547
      %v5553 = vadd.f32 %v5510, %v5547
      %v5554 = vadd.f32 %v5511, %v5547
      %v5555 = vadd.f32 %v5512, %v5547
      %v5556 = vadd.f32 %v5513, %v5547
      %v5557 = vadd.f32 %v5514, %v5547
      %v5558 = vadd.f32 %v5515, %v5547
      %v5559 = vadd.f32 %v5516, %v5547
      %v5560 = vadd.f32 %v5517, %v5547
      %v5561 = vadd.f32 %v5518, %v5547
      %v5562 = vadd.f32 %v5519, %v5547
      %v5563 = vadd.f32 %v5520, %v5547
      %v5564 = vadd.f32 %v5521, %v5547
      %v5565 = vadd.f32 %v5522, %v5547
      %v5566 = vadd.f32 %v5523, %v5547
      %v5567 = vadd.f32 %v5524, %v5547
      %v5568 = vadd.f32 %v5525, %v5547
      %v5569 = vadd.f32 %v5526, %v5547
      %v5570 = vadd.f32 %v5527, %v5547
      %v5571 = vadd.f32 %v5528, %v5547
      %v5572 = vadd.f32 %v5529, %v5547
      %v5573 = vadd.f32 %v5530, %v5547
      %v5574 = vadd.f32 %v5531, %v5547
      %v5575 = vadd.f32 %v5532, %v5547
      %v5576 = vadd.f32 %v5533, %v5547
      %v5577 = vadd.f32 %v5534, %v5547
      %v5578 = vadd.f32 %v5535, %v5547
      %v5579 = vadd.f32 %v5536, %v5547
      %v5580 = vadd.f32 %v5537, %v5547
      %v5581 = vadd.f32 %v5538, %v5547
      %v5582 = vadd.f32 %v5539, %v5547
      %v5583 = vadd.f32 %v5540, %v5547
      %v5584 = vadd.f32 %v5541, %v5547
      %v5585 = vld [vmem:[%s273 + $0x8] sm:$0xe]
      %v5586 = vld [vmem:[%s273 + $0xc] sm:$0xf]
      %v5587 = vld [vmem:[%s273 + $0x10] sm:$0xf]
      %v5588 = vld [vmem:[%s273 + $0x14] sm:$0xf]
      %v5589 = vld [vmem:[%s273 + $0x18] sm:$0xf]
      %v5590 = vld [vmem:[%s273 + $0x1c] sm:$0xf]
      %v5591 = vld [vmem:[%s273 + $0x20] sm:$0xf]
      %v5592 = vld [vmem:[%s273 + $0x24] sm:$0xf]
      %v5593 = vld [vmem:[%s273 + $0x28] sm:$0xf]
      %v5594 = vld [vmem:[%s273 + $0x2c] sm:$0xf]
      %v5595 = vld [vmem:[%s273 + $0x30] sm:$0xf]
      %v5596 = vld [vmem:[%s273 + $0x34] sm:$0xf]
      %v5597 = vld [vmem:[%s273 + $0x38] sm:$0xf]
      %v5598 = vld [vmem:[%s273 + $0x3c] sm:$0xf]
      %v5599 = vld [vmem:[%s273 + $0x40] sm:$0xf]
      %v5600 = vld [vmem:[%s273 + $0x44] sm:$0xf]
      %v5601 = vld [vmem:[%s273 + $0x48] sm:$0xf]
      %v5602 = vld [vmem:[%s273 + $0x4c] sm:$0xf]
      %v5603 = vld [vmem:[%s273 + $0x50] sm:$0xf]
      %v5604 = vld [vmem:[%s273 + $0x54] sm:$0xf]
      %v5605 = vld [vmem:[%s273 + $0x58] sm:$0xf]
      %v5606 = vld [vmem:[%s273 + $0x5c] sm:$0xf]
      %v5607 = vld [vmem:[%s273 + $0x60] sm:$0xf]
      %v5608 = vld [vmem:[%s273 + $0x64] sm:$0xf]
      %v5609 = vld [vmem:[%s273 + $0x68] sm:$0xf]
      %v5610 = vld [vmem:[%s273 + $0x6c] sm:$0xf]
      %v5611 = vld [vmem:[%s273 + $0x70] sm:$0xf]
      %v5612 = vld [vmem:[%s273 + $0x74] sm:$0xf]
      %v5613 = vld [vmem:[%s273 + $0x78] sm:$0xf]
      %v5614 = vld [vmem:[%s273 + $0x7c] sm:$0xf]
      %v5615 = vld [vmem:[%s273 + $0x80] sm:$0xf]
      %v5616 = vld [vmem:[%s273 + $0x84] sm:$0xf]
      %v5617 = vld [vmem:[%s273 + $0x88] sm:$0xf]
      %v5618 = vld [vmem:[%s273 + $0x8c] sm:$0xf]
      %v5619 = vld [vmem:[%s273 + $0x90] sm:$0xf]
      %v5620 = vld [vmem:[%s273 + $0x94] sm:$0xf]
      %v5621 = vld [vmem:[%s273 + $0x98] sm:$0x3]
      %v5622 = vunpack.c.l.bf16 %v5585
      %v5623 = vunpack.c.l.bf16 %v5586
      %v5624 = vunpack.c.l.bf16 %v5587
      %v5625 = vunpack.c.l.bf16 %v5588
      %v5626 = vunpack.c.l.bf16 %v5589
      %v5627 = vunpack.c.l.bf16 %v5590
      %v5628 = vunpack.c.l.bf16 %v5591
      %v5629 = vunpack.c.l.bf16 %v5592
      %v5630 = vunpack.c.l.bf16 %v5593
      %v5631 = vunpack.c.l.bf16 %v5594
      %v5632 = vunpack.c.l.bf16 %v5595
      %v5633 = vunpack.c.l.bf16 %v5596
      %v5634 = vunpack.c.l.bf16 %v5597
      %v5635 = vunpack.c.l.bf16 %v5598
      %v5636 = vunpack.c.l.bf16 %v5599
      %v5637 = vunpack.c.l.bf16 %v5600
      %v5638 = vunpack.c.l.bf16 %v5601
      %v5639 = vunpack.c.l.bf16 %v5602
      %v5640 = vunpack.c.l.bf16 %v5603
      %v5641 = vunpack.c.l.bf16 %v5604
      %v5642 = vunpack.c.l.bf16 %v5605
      %v5643 = vunpack.c.l.bf16 %v5606
      %v5644 = vunpack.c.l.bf16 %v5607
      %v5645 = vunpack.c.l.bf16 %v5608
      %v5646 = vunpack.c.l.bf16 %v5609
      %v5647 = vunpack.c.l.bf16 %v5610
      %v5648 = vunpack.c.l.bf16 %v5611
      %v5649 = vunpack.c.l.bf16 %v5612
      %v5650 = vunpack.c.l.bf16 %v5613
      %v5651 = vunpack.c.l.bf16 %v5614
      %v5652 = vunpack.c.l.bf16 %v5615
      %v5653 = vunpack.c.l.bf16 %v5616
      %v5654 = vunpack.c.l.bf16 %v5617
      %v5655 = vunpack.c.l.bf16 %v5618
      %v5656 = vunpack.c.l.bf16 %v5619
      %v5657 = vunpack.c.l.bf16 %v5620
      %v5658 = vunpack.c.l.bf16 %v5621
      %vm5696 = vcmask 1044480
      %v5697 = vrot.slane %v5622, 3
      %v5698 = vrot.slane %v5623, 3
      %v5699 = vsel %vm5696, %v5697, %v5698
      %v5700 = vrot.slane %v5624, 3
      %v5701 = vsel %vm5696, %v5698, %v5700
      %v5702 = vrot.slane %v5625, 3
      %v5703 = vsel %vm5696, %v5700, %v5702
      %v5704 = vrot.slane %v5626, 3
      %v5705 = vsel %vm5696, %v5702, %v5704
      %v5706 = vrot.slane %v5627, 3
      %v5707 = vsel %vm5696, %v5704, %v5706
      %v5708 = vrot.slane %v5628, 3
      %v5709 = vsel %vm5696, %v5706, %v5708
      %v5710 = vrot.slane %v5629, 3
      %v5711 = vsel %vm5696, %v5708, %v5710
      %v5712 = vrot.slane %v5630, 3
      %v5713 = vsel %vm5696, %v5710, %v5712
      %v5714 = vrot.slane %v5631, 3
      %v5715 = vsel %vm5696, %v5712, %v5714
      %v5716 = vrot.slane %v5632, 3
      %v5717 = vsel %vm5696, %v5714, %v5716
      %v5718 = vrot.slane %v5633, 3
      %v5719 = vsel %vm5696, %v5716, %v5718
      %v5720 = vrot.slane %v5634, 3
      %v5721 = vsel %vm5696, %v5718, %v5720
      %v5722 = vrot.slane %v5635, 3
      %v5723 = vsel %vm5696, %v5720, %v5722
      %v5724 = vrot.slane %v5636, 3
      %v5725 = vsel %vm5696, %v5722, %v5724
      %v5726 = vrot.slane %v5637, 3
      %v5727 = vsel %vm5696, %v5724, %v5726
      %v5728 = vrot.slane %v5638, 3
      %v5729 = vsel %vm5696, %v5726, %v5728
      %v5730 = vrot.slane %v5639, 3
      %v5731 = vsel %vm5696, %v5728, %v5730
      %v5732 = vrot.slane %v5640, 3
      %v5733 = vsel %vm5696, %v5730, %v5732
      %v5734 = vrot.slane %v5641, 3
      %v5735 = vsel %vm5696, %v5732, %v5734
      %v5736 = vrot.slane %v5642, 3
      %v5737 = vsel %vm5696, %v5734, %v5736
      %v5738 = vrot.slane %v5643, 3
      %v5739 = vsel %vm5696, %v5736, %v5738
      %v5740 = vrot.slane %v5644, 3
      %v5741 = vsel %vm5696, %v5738, %v5740
      %v5742 = vrot.slane %v5645, 3
      %v5743 = vsel %vm5696, %v5740, %v5742
      %v5744 = vrot.slane %v5646, 3
      %v5745 = vsel %vm5696, %v5742, %v5744
      %v5746 = vrot.slane %v5647, 3
      %v5747 = vsel %vm5696, %v5744, %v5746
      %v5748 = vrot.slane %v5648, 3
      %v5749 = vsel %vm5696, %v5746, %v5748
      %v5750 = vrot.slane %v5649, 3
      %v5751 = vsel %vm5696, %v5748, %v5750
      %v5752 = vrot.slane %v5650, 3
      %v5753 = vsel %vm5696, %v5750, %v5752
      %v5754 = vrot.slane %v5651, 3
      %v5755 = vsel %vm5696, %v5752, %v5754
      %v5756 = vrot.slane %v5652, 3
      %v5757 = vsel %vm5696, %v5754, %v5756
      %v5758 = vrot.slane %v5653, 3
      %v5759 = vsel %vm5696, %v5756, %v5758
      %v5760 = vrot.slane %v5654, 3
      %v5761 = vsel %vm5696, %v5758, %v5760
      %v5762 = vrot.slane %v5655, 3
      %v5763 = vsel %vm5696, %v5760, %v5762
      %v5764 = vrot.slane %v5656, 3
      %v5765 = vsel %vm5696, %v5762, %v5764
      %v5766 = vrot.slane %v5657, 3
      %v5767 = vsel %vm5696, %v5764, %v5766
      %v5768 = vrot.slane %v5658, 3
      %v5769 = vsel %vm5696, %v5766, %v5768
      %v5806 = vadd.f32 %v5549, %v5699
      %v5807 = vadd.f32 %v5550, %v5701
      %v5808 = vadd.f32 %v5551, %v5703
      %v5809 = vadd.f32 %v5552, %v5705
      %v5810 = vadd.f32 %v5553, %v5707
      %v5811 = vadd.f32 %v5554, %v5709
      %v5812 = vadd.f32 %v5555, %v5711
      %v5813 = vadd.f32 %v5556, %v5713
      %v5814 = vadd.f32 %v5557, %v5715
      %v5815 = vadd.f32 %v5558, %v5717
      %v5816 = vadd.f32 %v5559, %v5719
      %v5817 = vadd.f32 %v5560, %v5721
      %v5818 = vadd.f32 %v5561, %v5723
      %v5819 = vadd.f32 %v5562, %v5725
      %v5820 = vadd.f32 %v5563, %v5727
      %v5821 = vadd.f32 %v5564, %v5729
      %v5822 = vadd.f32 %v5565, %v5731
      %v5823 = vadd.f32 %v5566, %v5733
      %v5824 = vadd.f32 %v5567, %v5735
      %v5825 = vadd.f32 %v5568, %v5737
      %v5826 = vadd.f32 %v5569, %v5739
      %v5827 = vadd.f32 %v5570, %v5741
      %v5828 = vadd.f32 %v5571, %v5743
      %v5829 = vadd.f32 %v5572, %v5745
      %v5830 = vadd.f32 %v5573, %v5747
      %v5831 = vadd.f32 %v5574, %v5749
      %v5832 = vadd.f32 %v5575, %v5751
      %v5833 = vadd.f32 %v5576, %v5753
      %v5834 = vadd.f32 %v5577, %v5755
      %v5835 = vadd.f32 %v5578, %v5757
      %v5836 = vadd.f32 %v5579, %v5759
      %v5837 = vadd.f32 %v5580, %v5761
      %v5838 = vadd.f32 %v5581, %v5763
      %v5839 = vadd.f32 %v5582, %v5765
      %v5840 = vadd.f32 %v5583, %v5767
      %v5841 = vadd.f32 %v5584, %v5769
      %v5842 = vmax.f32 %v5806, 0.0
      %v5843 = vmax.f32 %v5807, 0.0
      %v5844 = vmax.f32 %v5808, 0.0
      %v5845 = vmax.f32 %v5809, 0.0
      %v5846 = vmax.f32 %v5810, 0.0
      %v5847 = vmax.f32 %v5811, 0.0
      %v5848 = vmax.f32 %v5812, 0.0
      %v5849 = vmax.f32 %v5813, 0.0
      %v5850 = vmax.f32 %v5814, 0.0
      %v5851 = vmax.f32 %v5815, 0.0
      %v5852 = vmax.f32 %v5816, 0.0
      %v5853 = vmax.f32 %v5817, 0.0
      %v5854 = vmax.f32 %v5818, 0.0
      %v5855 = vmax.f32 %v5819, 0.0
      %v5856 = vmax.f32 %v5820, 0.0
      %v5857 = vmax.f32 %v5821, 0.0
      %v5858 = vmax.f32 %v5822, 0.0
      %v5859 = vmax.f32 %v5823, 0.0
      %v5860 = vmax.f32 %v5824, 0.0
      %v5861 = vmax.f32 %v5825, 0.0
      %v5862 = vmax.f32 %v5826, 0.0
      %v5863 = vmax.f32 %v5827, 0.0
      %v5864 = vmax.f32 %v5828, 0.0
      %v5865 = vmax.f32 %v5829, 0.0
      %v5866 = vmax.f32 %v5830, 0.0
      %v5867 = vmax.f32 %v5831, 0.0
      %v5868 = vmax.f32 %v5832, 0.0
      %v5869 = vmax.f32 %v5833, 0.0
      %v5870 = vmax.f32 %v5834, 0.0
      %v5871 = vmax.f32 %v5835, 0.0
      %v5872 = vmax.f32 %v5836, 0.0
      %v5873 = vmax.f32 %v5837, 0.0
      %v5874 = vmax.f32 %v5838, 0.0
      %v5875 = vmax.f32 %v5839, 0.0
      %v5876 = vmax.f32 %v5840, 0.0
      %v5877 = vmax.f32 %v5841, 0.0
      %5878 = vst.msk [vmem:[%s278] sm:$0xff] %vm673, %v5842
      %5879 = vst.msk [vmem:[%s278 + $0x8] sm:$0xff] %vm673, %v5843
      %5880 = vst.msk [vmem:[%s278 + $0x10] sm:$0xff] %vm673, %v5844
      %5881 = vst.msk [vmem:[%s278 + $0x18] sm:$0xff] %vm673, %v5845
      %5882 = vst.msk [vmem:[%s278 + $0x20] sm:$0xff] %vm673, %v5846
      %5883 = vst.msk [vmem:[%s278 + $0x28] sm:$0xff] %vm673, %v5847
      %5884 = vst.msk [vmem:[%s278 + $0x30] sm:$0xff] %vm673, %v5848
      %5885 = vst.msk [vmem:[%s278 + $0x38] sm:$0xff] %vm673, %v5849
      %5886 = vst.msk [vmem:[%s278 + $0x40] sm:$0xff] %vm673, %v5850
      %5887 = vst.msk [vmem:[%s278 + $0x48] sm:$0xff] %vm673, %v5851
      %5888 = vst.msk [vmem:[%s278 + $0x50] sm:$0xff] %vm673, %v5852
      %5889 = vst.msk [vmem:[%s278 + $0x58] sm:$0xff] %vm673, %v5853
      %5890 = vst.msk [vmem:[%s278 + $0x60] sm:$0xff] %vm673, %v5854
      %5891 = vst.msk [vmem:[%s278 + $0x68] sm:$0xff] %vm673, %v5855
      %5892 = vst.msk [vmem:[%s278 + $0x70] sm:$0xff] %vm673, %v5856
      %5893 = vst.msk [vmem:[%s278 + $0x78] sm:$0xff] %vm673, %v5857
      %5894 = vst.msk [vmem:[%s278 + $0x80] sm:$0xff] %vm673, %v5858
      %5895 = vst.msk [vmem:[%s278 + $0x88] sm:$0xff] %vm673, %v5859
      %5896 = vst.msk [vmem:[%s278 + $0x90] sm:$0xff] %vm673, %v5860
      %5897 = vst.msk [vmem:[%s278 + $0x98] sm:$0xff] %vm673, %v5861
      %5898 = vst.msk [vmem:[%s278 + $0xa0] sm:$0xff] %vm673, %v5862
      %5899 = vst.msk [vmem:[%s278 + $0xa8] sm:$0xff] %vm673, %v5863
      %5900 = vst.msk [vmem:[%s278 + $0xb0] sm:$0xff] %vm673, %v5864
      %5901 = vst.msk [vmem:[%s278 + $0xb8] sm:$0xff] %vm673, %v5865
      %5902 = vst.msk [vmem:[%s278 + $0xc0] sm:$0xff] %vm673, %v5866
      %5903 = vst.msk [vmem:[%s278 + $0xc8] sm:$0xff] %vm673, %v5867
      %5904 = vst.msk [vmem:[%s278 + $0xd0] sm:$0xff] %vm673, %v5868
      %5905 = vst.msk [vmem:[%s278 + $0xd8] sm:$0xff] %vm673, %v5869
      %5906 = vst.msk [vmem:[%s278 + $0xe0] sm:$0xff] %vm673, %v5870
      %5907 = vst.msk [vmem:[%s278 + $0xe8] sm:$0xff] %vm673, %v5871
      %5908 = vst.msk [vmem:[%s278 + $0xf0] sm:$0xff] %vm673, %v5872
      %5909 = vst.msk [vmem:[%s278 + $0xf8] sm:$0xff] %vm673, %v5873
      %5910 = vst.msk [vmem:[%s278 + $0x100] sm:$0xff] %vm673, %v5874
      %5911 = vst.msk [vmem:[%s278 + $0x108] sm:$0xff] %vm673, %v5875
      %5912 = vst.msk [vmem:[%s278 + $0x110] sm:$0xff] %vm673, %v5876
      %5913 = vst.msk [vmem:[%s278 + $0x118] sm:$0xff] %vm673, %v5877
      %p5914 = scmp.lt.s32.totalorder %s18, 1
      %s5915 = scalar_select %p5914, %s18, 1
      %s5916 = smul.addr %s5915, 36
      %s5917 = smul.addr %s5916, 8
      %s5918 = scalar_lea.vmem %s7, %s5917
      // Predicated region
      $region49: #{tpu_custom_call.1} parent=47 // pred_check
        %p5919 = pneg %p188
      $region50: #{tpu_custom_call.1} parent=47 // pred_check_branch
        %5921 = sbr.rel (%p5919) target = $region52
      $region51: #{tpu_custom_call.1} parent=47 // pred_region
        _
      $region52: #{tpu_custom_call.1} parent=47 // pred_fallthru
        _
    $region48: #{tpu_custom_call.1} parent=5 // pred_fallthru
      _
    %p5922 = scmp.le.s32.totalorder 2, %s13
    // Predicated region
    $region53: #{tpu_custom_call.1} parent=5 // pred_check
      %p5923 = pneg %p5922
    $region54: #{tpu_custom_call.1} parent=5 // pred_check_branch
      %5925 = sbr.rel (%p5923) target = $region56
    $region55: #{tpu_custom_call.1} parent=5 // pred_region
      %s5926 = ssub.s32 %s13, 2
      // Predicated region
      $region57: #{tpu_custom_call.1} parent=55 // pred_check
        %p5927 = pneg %p194
      $region58: #{tpu_custom_call.1} parent=55 // pred_check_branch
        %5929 = sbr.rel (%p5927) target = $region60
      $region59: #{tpu_custom_call.1} parent=55 // pred_region
        %p5930 = scmp.lt.s32.totalorder %s19, 1
        %s5931 = scalar_select %p5930, %s19, 1
        %s5932 = smul.addr %s5931, 36
        %s5933 = smul.addr %s5932, 8
        %s5934 = scalar_lea.vmem %s7, %s5933
      $region60: #{tpu_custom_call.1} parent=55 // pred_fallthru
        _
    $region56: #{tpu_custom_call.1} parent=5 // pred_fallthru
      _
  $region6: #{tpu_custom_call.1} parent=0 // loop_footer
    %s17 = sadd.s32 1, %s13
  $region7: #{tpu_custom_call.1} parent=0 // loop_footer_branch
    %12 = sbr.rel target = $region3
  $region8: #{tpu_custom_call.1} parent=0 // loop_exit
    _

</llo_original>
